<compile_context>
chip_gen: v5e
topology: v5e:2x2
jax: 0.10.0
libtpu: 0.0.40
codegen_flags: <defaults>
</compile_context>

<pallas_src>
import functools
import math

import jax
import jax.numpy as jnp
from jax.experimental import pallas as pl
from jax.experimental.pallas import tpu as pltpu


def _mha_kernel(q_ref, k_ref, v_ref,
                wq_ref, bq_ref, wk_ref, bk_ref, wv_ref, bv_ref,
                wo_ref, bo_ref, gamma_ref, beta_ref,
                out_ref,
                acc_ref, kc_ref, vc_ref,
                *, d_k, heads_per_block, ln_eps):
    """Grid: (batch, q_tile, head_group). Head-group axis reduces into acc_ref."""
    qi = pl.program_id(1)
    g = pl.program_id(2)
    last_g = pl.num_programs(2) - 1

    @pl.when(g == 0)
    def _init():
        acc_ref[...] = jnp.zeros_like(acc_ref)

    # K/V projections depend only on (batch, head group): compute them for the
    # first query tile of each batch and cache them in VMEM for the rest.
    @pl.when(qi == 0)
    def _project_kv():
        k_mx = k_ref[0]                                              # (nk, D) bf16
        v_mx = v_ref[0]
        kh = jnp.dot(k_mx, wk_ref[g],
                     preferred_element_type=jnp.float32) + bk_ref[g]
        vh = jnp.dot(v_mx, wv_ref[g],
                     preferred_element_type=jnp.float32) + bv_ref[g]
        kc_ref[g] = kh.astype(jnp.bfloat16)                          # (nk, dg)
        vc_ref[g] = vh.astype(jnp.bfloat16)

    kh = kc_ref[g]                                                   # (nk, dg) bf16
    vh = vc_ref[g]

    q_in = q_ref[0]                          # (tq, D) f32, kept for residual/LN
    q_mx = q_in.astype(jnp.bfloat16)

    # Q projection for the whole head group at once (N = hb*d_k fills the MXU).
    # 1/sqrt(d_k) is already folded into wq/bq.
    qh = (jnp.dot(q_mx, wq_ref[g], preferred_element_type=jnp.float32)
          + bq_ref[g]).astype(jnp.bfloat16)                          # (tq, dg)

    # Attention is per head inside the group (softmax must not mix heads).
    o_parts = []
    for j in range(heads_per_block):
        sl = slice(j * d_k, (j + 1) * d_k)
        # scores = qh_j @ kh_j^T via an NT contraction (no explicit transpose).
        scores = jax.lax.dot_general(
            qh[:, sl], kh[:, sl],
            dimension_numbers=(((1,), (1,)), ((), ())),
            preferred_element_type=jnp.float32)                      # (tq, nk)
        m = jnp.max(scores, axis=-1, keepdims=True)
        e = jnp.exp(scores - m)
        denom = jnp.sum(e, axis=-1, keepdims=True)
        # Softmax normalization deferred past the PV matmul: scale (tq, d_k)
        # instead of (tq, nk); reciprocal goes to the EUP slot.
        o_j = jnp.dot(e.astype(jnp.bfloat16), vh[:, sl],
                      preferred_element_type=jnp.float32)            # (tq, d_k)
        o_parts.append((o_j * pl.reciprocal(denom, approx=True))
                       .astype(jnp.bfloat16))
    o_grp = o_parts[0] if heads_per_block == 1 else jnp.concatenate(o_parts, -1)

    # Accumulate this group's slice of the output projection (K = hb*d_k).
    acc_ref[...] += jnp.dot(o_grp, wo_ref[g],
                            preferred_element_type=jnp.float32)      # (tq, D)

    @pl.when(g == last_g)
    def _finalize():
        x = q_in + acc_ref[...] + bo_ref[...]                        # residual, f32
        mean = jnp.mean(x, axis=-1, keepdims=True)
        xc = x - mean
        var = jnp.mean(xc * xc, axis=-1, keepdims=True)
        inv = jax.lax.rsqrt(var + ln_eps)
        out_ref[0] = (xc * inv * gamma_ref[...] + beta_ref[...]).astype(out_ref.dtype)


def _pick_q_tile(nq, max_tile=512):
    t = max_tile
    while t >= 8:
        if nq % t == 0:
            return t
        t //= 2
    return nq


def _pick_heads_per_block(n_heads, d_k):
    # Pack 2 heads per step when per-head slices stay lane-tile aligned and the
    # packed width (2*d_k) helps fill a 256-wide MXU (v6e/v7x).
    if n_heads % 2 == 0 and d_k % 128 == 0 and d_k < 256:
        return 2
    return 1


def multi_head_attention(queries, keys, values, params, *, n_heads,
                         ln_eps=1e-5, q_tile=None, heads_per_block=None):
    """queries: (B, nq, D), keys/values: (B, nk, D). Returns (B, nq, D)."""
    B, nq, D = queries.shape
    _, nk, _ = keys.shape
    assert D % n_heads == 0, "d_model must be divisible by n_heads"
    d_k = D // n_heads

    tq = q_tile if q_tile is not None else _pick_q_tile(nq)
    assert nq % tq == 0, "query length must be divisible by the query tile"

    hb = (heads_per_block if heads_per_block is not None
          else _pick_heads_per_block(n_heads, d_k))
    assert n_heads % hb == 0
    n_groups = n_heads // hb
    dg = hb * d_k

    mx = jnp.bfloat16
    scale = 1.0 / math.sqrt(d_k)

    def group_in(w_t):        # (in=D, out=D) -> (n_groups, D, dg) bf16
        return w_t.reshape(D, n_groups, dg).transpose(1, 0, 2).astype(mx)

    wq_h = group_in(params["wq"].T * scale)           # fold 1/sqrt(d_k) into Wq
    wk_h = group_in(params["wk"].T)
    wv_h = group_in(params["wv"].T)
    wo_h = params["wo"].T.reshape(n_groups, dg, D).astype(mx)

    bq_h = (params["bq"] * scale).reshape(n_groups, 1, dg).astype(jnp.float32)
    bk_h = params["bk"].reshape(n_groups, 1, dg).astype(jnp.float32)
    bv_h = params["bv"].reshape(n_groups, 1, dg).astype(jnp.float32)
    bo = params["bo"].reshape(1, D).astype(jnp.float32)
    gamma = params["ln_gamma"].reshape(1, D).astype(jnp.float32)
    beta = params["ln_beta"].reshape(1, D).astype(jnp.float32)

    keys_mx = keys.astype(mx)
    values_mx = values.astype(mx)

    kernel = functools.partial(_mha_kernel, d_k=d_k, heads_per_block=hb,
                               ln_eps=ln_eps)

    # Activations: tiled per grid step.
    q_spec = pl.BlockSpec((1, tq, D), lambda b, qi, g: (b, qi, 0))
    kv_spec = pl.BlockSpec((1, nk, D), lambda b, qi, g: (b, 0, 0))
    # Weights / biases / LN params: full-extent, constant index_map -> resident
    # in VMEM for the whole call instead of re-DMA'd every grid step.
    w_in_spec = pl.BlockSpec((n_groups, D, dg), lambda b, qi, g: (0, 0, 0))
    w_out_spec = pl.BlockSpec((n_groups, dg, D), lambda b, qi, g: (0, 0, 0))
    b_grp_spec = pl.BlockSpec((n_groups, 1, dg), lambda b, qi, g: (0, 0, 0))
    row_spec = pl.BlockSpec((1, D), lambda b, qi, g: (0, 0))

    grid = (B, nq // tq, n_groups)

    # VMEM limit derived from the actual part (64 MiB v7x, 128 MiB v5e/v6e).
    try:
        vmem_cap = int(pltpu.get_tpu_info().vmem_capacity_bytes)
    except Exception:
        vmem_cap = 64 * 1024 * 1024
    vmem_limit = max(32 * 1024 * 1024,
                     min(int(vmem_cap * 0.85), 100 * 1024 * 1024))

    # Cost of the de-duplicated kernel (K/V projected once per batch).
    flops = (2 * B * nq * D * D          # Q projection
             + 4 * B * nk * D * D        # K and V projections
             + 2 * B * nq * D * D        # output projection
             + 4 * B * nq * nk * D)      # QK^T + PV across all heads
    transcendentals = B * n_heads * nq * nk
    bytes_accessed = (queries.size * 4 + keys_mx.size * 2 + values_mx.size * 2
                      + B * nq * D * 4       # output
                      + 4 * D * D * 2        # bf16 weights (read once)
                      + 6 * D * 4)           # biases / LN params

    # TODO(synk): for very long nk, add a flash-style online-softmax key-tile
    # loop (and pl.Buffered(1) on kv_spec) so the (nk, D) block plus the
    # (n_groups, nk, dg) caches stay inside v7x's 64 MiB VMEM.
    return pl.pallas_call(
        kernel,
        out_shape=jax.ShapeDtypeStruct((B, nq, D), queries.dtype),
        grid_spec=pltpu.PrefetchScalarGridSpec(
            num_scalar_prefetch=0,
            grid=grid,
            in_specs=[
                q_spec, kv_spec, kv_spec,
                w_in_spec, b_grp_spec,    # Wq, bq (pre-scaled by 1/sqrt(d_k))
                w_in_spec, b_grp_spec,    # Wk, bk
                w_in_spec, b_grp_spec,    # Wv, bv
                w_out_spec, row_spec,     # Wo, bo
                row_spec, row_spec,       # gamma, beta
            ],
            out_specs=q_spec,
            scratch_shapes=[
                pltpu.VMEM((tq, D), jnp.float32),              # out-proj accumulator
                pltpu.VMEM((n_groups, nk, dg), jnp.bfloat16),  # cached K projection
                pltpu.VMEM((n_groups, nk, dg), jnp.bfloat16),  # cached V projection
            ]),
        compiler_params=pltpu.CompilerParams(
            # q-tile axis must be "arbitrary": the K/V cache is filled at
            # qi == 0 and reused by later q tiles of the same batch.
            dimension_semantics=("parallel", "arbitrary", "arbitrary"),
            vmem_limit_bytes=vmem_limit),
        cost_estimate=pl.CostEstimate(
            flops=flops, transcendentals=transcendentals,
            bytes_accessed=bytes_accessed),
    )(queries, keys_mx, values_mx,
      wq_h, bq_h, wk_h, bk_h, wv_h, bv_h, wo_h, bo, gamma, beta)


def _xavier_uniform(key, shape):
    fan_in, fan_out = shape[1], shape[0]
    limit = jnp.sqrt(6.0 / (fan_in + fan_out))
    return jax.random.uniform(key, shape, jnp.float32, -limit, limit)


def init_params(key, d_model):
    ks = jax.random.split(key, 4)
    return {
        "wq": _xavier_uniform(ks[0], (d_model, d_model)),
        "wk": _xavier_uniform(ks[1], (d_model, d_model)),
        "wv": _xavier_uniform(ks[2], (d_model, d_model)),
        "wo": _xavier_uniform(ks[3], (d_model, d_model)),
        "bq": jnp.zeros((d_model,), jnp.float32),
        "bk": jnp.zeros((d_model,), jnp.float32),
        "bv": jnp.zeros((d_model,), jnp.float32),
        "bo": jnp.zeros((d_model,), jnp.float32),
        "ln_gamma": jnp.ones((d_model,), jnp.float32),
        "ln_beta": jnp.zeros((d_model,), jnp.float32),
    }


def _reference(queries, keys, values, params, *, n_heads, ln_eps=1e-5):
    """Pure-JAX f32 reference matching the PyTorch module's forward."""
    B, nq, D = queries.shape
    nk = keys.shape[1]
    d_k = D // n_heads

    def lin(x, w, b):                     # PyTorch Linear: y = x @ W^T + b
        return x @ w.T + b

    q = lin(queries, params["wq"], params["bq"]).reshape(B, nq, n_heads, d_k)
    k = lin(keys, params["wk"], params["bk"]).reshape(B, nk, n_heads, d_k)
    v = lin(values, params["wv"], params["bv"]).reshape(B, nk, n_heads, d_k)
    q = q.transpose(0, 2, 1, 3)
    k = k.transpose(0, 2, 1, 3)
    v = v.transpose(0, 2, 1, 3)
    scores = jnp.einsum("bhqd,bhkd->bhqk", q, k) / jnp.sqrt(float(d_k))
    p = jax.nn.softmax(scores, axis=-1)
    out = jnp.einsum("bhqk,bhkd->bhqd", p, v).transpose(0, 2, 1, 3).reshape(B, nq, D)
    out = lin(out, params["wo"], params["bo"])
    x = queries + out
    mean = x.mean(-1, keepdims=True)
    var = ((x - mean) ** 2).mean(-1, keepdims=True)
    return (x - mean) / jnp.sqrt(var + ln_eps) * params["ln_gamma"] + params["ln_beta"]


if __name__ == "__main__":
    # Small but TPU-aligned shapes: d_k = 256 / 2 = 128 (lane / MXU aligned);
    # with 2 heads packed per step the grid is (B=2, nq//tq=1, n_groups=1).
    B, NQ, NK, D, H = 2, 256, 128, 256, 2

    key = jax.random.PRNGKey(0)
    kq, kk, kv, kp = jax.random.split(key, 4)
    queries = jax.random.normal(kq, (B, NQ, D), jnp.float32)
    keys = jax.random.normal(kk, (B, NK, D), jnp.float32)
    values = jax.random.normal(kv, (B, NK, D), jnp.float32)
    params = init_params(kp, D)

    out = multi_head_attention(queries, keys, values, params, n_heads=H)
    jax.block_until_ready(out)

    assert out.shape == (B, NQ, D)
    assert bool(jnp.isfinite(out).all())
    ref = _reference(queries, keys, values, params, n_heads=H)
    max_err = float(jnp.max(jnp.abs(out - ref)))
    assert max_err < 0.1, f"max abs error vs f32 reference: {max_err}"
    # TODO(synk): attention_mask / attention_weights and the stateful KV cache
    # are not wired (reference call uses None / non-stateful path); dropout is
    # identity (eval mode).
    print("KERNEL_OK")
</pallas_src>

<mosaic_0001>
module attributes {stable_mosaic.version = 11 : i64} {
  func.func @_mha_kernel(%arg0: i32, %arg1: i32, %arg2: i32, %arg3: memref<1x256x256xf32, #tpu.memory_space<vmem>>, %arg4: memref<1x128x256xbf16, #tpu.memory_space<vmem>>, %arg5: memref<1x128x256xbf16, #tpu.memory_space<vmem>>, %arg6: memref<1x256x256xbf16, #tpu.memory_space<vmem>>, %arg7: memref<1x1x256xf32, #tpu.memory_space<vmem>>, %arg8: memref<1x256x256xbf16, #tpu.memory_space<vmem>>, %arg9: memref<1x1x256xf32, #tpu.memory_space<vmem>>, %arg10: memref<1x256x256xbf16, #tpu.memory_space<vmem>>, %arg11: memref<1x1x256xf32, #tpu.memory_space<vmem>>, %arg12: memref<1x256x256xbf16, #tpu.memory_space<vmem>>, %arg13: memref<1x256xf32, #tpu.memory_space<vmem>>, %arg14: memref<1x256xf32, #tpu.memory_space<vmem>>, %arg15: memref<1x256xf32, #tpu.memory_space<vmem>>, %arg16: memref<1x256x256xf32, #tpu.memory_space<vmem>>, %arg17: memref<256x256xf32, #tpu.memory_space<vmem>>, %arg18: memref<1x128x256xbf16, #tpu.memory_space<vmem>>, %arg19: memref<1x128x256xbf16, #tpu.memory_space<vmem>>) attributes {dimension_semantics = [#tpu.dimension_semantics<parallel>, #tpu.dimension_semantics<arbitrary>, #tpu.dimension_semantics<arbitrary>], iteration_bounds = array<i64: 2, 1, 1>, scalar_prefetch = 0 : i64, scratch_operands = 3 : i64, tpu.core_type = #tpu.core_type<tc>, window_params = [{transform_indices = @transform_0, window_bounds = array<i64: 1, 256, 256>}, {transform_indices = @transform_1, window_bounds = array<i64: 1, 128, 256>}, {transform_indices = @transform_2, window_bounds = array<i64: 1, 128, 256>}, {pipeline_mode = #tpu.pipeline_mode<synchronous>, transform_indices = @transform_3, window_bounds = array<i64: 1, 256, 256>}, {pipeline_mode = #tpu.pipeline_mode<synchronous>, transform_indices = @transform_4, window_bounds = array<i64: 1, 1, 256>}, {pipeline_mode = #tpu.pipeline_mode<synchronous>, transform_indices = @transform_5, window_bounds = array<i64: 1, 256, 256>}, {pipeline_mode = #tpu.pipeline_mode<synchronous>, transform_indices = @transform_6, window_bounds = array<i64: 1, 1, 256>}, {pipeline_mode = #tpu.pipeline_mode<synchronous>, transform_indices = @transform_7, window_bounds = array<i64: 1, 256, 256>}, {pipeline_mode = #tpu.pipeline_mode<synchronous>, transform_indices = @transform_8, window_bounds = array<i64: 1, 1, 256>}, {pipeline_mode = #tpu.pipeline_mode<synchronous>, transform_indices = @transform_9, window_bounds = array<i64: 1, 256, 256>}, {pipeline_mode = #tpu.pipeline_mode<synchronous>, transform_indices = @transform_10, window_bounds = array<i64: 1, 256>}, {pipeline_mode = #tpu.pipeline_mode<synchronous>, transform_indices = @transform_11, window_bounds = array<i64: 1, 256>}, {pipeline_mode = #tpu.pipeline_mode<synchronous>, transform_indices = @transform_12, window_bounds = array<i64: 1, 256>}, {transform_indices = @transform_13, window_bounds = array<i64: 1, 256, 256>}]} {
    %c0_i32 = arith.constant 0 : i32
    %0 = arith.cmpi eq, %arg2, %c0_i32 : i32
    %1 = arith.extui %0 : i1 to i32
    %c0_i32_0 = arith.constant 0 : i32
    %2 = arith.cmpi ne, %1, %c0_i32_0 : i32
    scf.if %2 {
      %cst_30 = arith.constant 0.000000e+00 : f32
      %70 = vector.broadcast %cst_30 : f32 to vector<256x256xf32>
      %c0_31 = arith.constant 0 : index
      %c0_32 = arith.constant 0 : index
      %71 = vector.load %arg17[%c0_31, %c0_32] : memref<256x256xf32, #tpu.memory_space<vmem>>, vector<256x256xf32>
      tpu.vector_store %arg17[%c0_31, %c0_32], %70 {strides = array<i32>} : memref<256x256xf32, #tpu.memory_space<vmem>>, vector<256x256xf32>,
    } else {
    }
    %c0_i32_1 = arith.constant 0 : i32
    %3 = arith.cmpi eq, %arg1, %c0_i32_1 : i32
    %4 = arith.extui %3 : i1 to i32
    %c0_i32_2 = arith.constant 0 : i32
    %5 = arith.cmpi ne, %4, %c0_i32_2 : i32
    scf.if %5 {
      %c0_30 = arith.constant 0 : index
      %c0_31 = arith.constant 0 : index
      %c0_32 = arith.constant 0 : index
      %70 = vector.load %arg4[%c0_30, %c0_31, %c0_32] : memref<1x128x256xbf16, #tpu.memory_space<vmem>>, vector<1x128x256xbf16>
      %71 = vector.shape_cast %70 : vector<1x128x256xbf16> to vector<128x256xbf16>
      %c0_33 = arith.constant 0 : index
      %c0_34 = arith.constant 0 : index
      %c0_35 = arith.constant 0 : index
      %72 = vector.load %arg5[%c0_33, %c0_34, %c0_35] : memref<1x128x256xbf16, #tpu.memory_space<vmem>>, vector<1x128x256xbf16>
      %73 = vector.shape_cast %72 : vector<1x128x256xbf16> to vector<128x256xbf16>
      %74 = arith.index_cast %arg2 : i32 to index
      %c0_36 = arith.constant 0 : index
      %c0_37 = arith.constant 0 : index
      %75 = vector.load %arg8[%74, %c0_36, %c0_37] : memref<1x256x256xbf16, #tpu.memory_space<vmem>>, vector<1x256x256xbf16>
      %76 = vector.shape_cast %75 : vector<1x256x256xbf16> to vector<256x256xbf16>
      %cst_38 = arith.constant dense<0.000000e+00> : vector<128x256xf32>
      %77 = tpu.matmul %71, %76, %cst_38 {dimension_numbers = #tpu.dot_dimension_numbers<[1], [0], [0], [1], [0, 0, 1, 1], [], []>} : vector<128x256xbf16>, vector<256x256xbf16>, vector<128x256xf32> -> vector<128x256xf32>
      %78 = arith.index_cast %arg2 : i32 to index
      %c0_39 = arith.constant 0 : index
      %c0_40 = arith.constant 0 : index
      %79 = vector.load %arg9[%78, %c0_39, %c0_40] : memref<1x1x256xf32, #tpu.memory_space<vmem>>, vector<1x1x256xf32>
      %80 = vector.shape_cast %79 : vector<1x1x256xf32> to vector<1x256xf32>
      %81 = vector.broadcast %80 : vector<1x256xf32> to vector<128x256xf32>
      %82 = arith.addf %77, %81 : vector<128x256xf32>
      %83 = arith.index_cast %arg2 : i32 to index
      %c0_41 = arith.constant 0 : index
      %c0_42 = arith.constant 0 : index
      %84 = vector.load %arg10[%83, %c0_41, %c0_42] : memref<1x256x256xbf16, #tpu.memory_space<vmem>>, vector<1x256x256xbf16>
      %85 = vector.shape_cast %84 : vector<1x256x256xbf16> to vector<256x256xbf16>
      %cst_43 = arith.constant dense<0.000000e+00> : vector<128x256xf32>
      %86 = tpu.matmul %73, %85, %cst_43 {dimension_numbers = #tpu.dot_dimension_numbers<[1], [0], [0], [1], [0, 0, 1, 1], [], []>} : vector<128x256xbf16>, vector<256x256xbf16>, vector<128x256xf32> -> vector<128x256xf32>
      %87 = arith.index_cast %arg2 : i32 to index
      %c0_44 = arith.constant 0 : index
      %c0_45 = arith.constant 0 : index
      %88 = vector.load %arg11[%87, %c0_44, %c0_45] : memref<1x1x256xf32, #tpu.memory_space<vmem>>, vector<1x1x256xf32>
      %89 = vector.shape_cast %88 : vector<1x1x256xf32> to vector<1x256xf32>
      %90 = vector.broadcast %89 : vector<1x256xf32> to vector<128x256xf32>
      %91 = arith.addf %86, %90 : vector<128x256xf32>
      %92 = arith.truncf %82 : vector<128x256xf32> to vector<128x256xbf16>
      %93 = arith.index_cast %arg2 : i32 to index
      %c0_46 = arith.constant 0 : index
      %c0_47 = arith.constant 0 : index
      %94 = vector.load %arg18[%93, %c0_46, %c0_47] : memref<1x128x256xbf16, #tpu.memory_space<vmem>>, vector<1x128x256xbf16>
      %95 = vector.shape_cast %94 : vector<1x128x256xbf16> to vector<128x256xbf16>
      %96 = vector.shape_cast %92 : vector<128x256xbf16> to vector<1x128x256xbf16>
      tpu.vector_store %arg18[%93, %c0_46, %c0_47], %96 {strides = array<i32>} : memref<1x128x256xbf16, #tpu.memory_space<vmem>>, vector<1x128x256xbf16>,
      %97 = arith.truncf %91 : vector<128x256xf32> to vector<128x256xbf16>
      %98 = arith.index_cast %arg2 : i32 to index
      %c0_48 = arith.constant 0 : index
      %c0_49 = arith.constant 0 : index
      %99 = vector.load %arg19[%98, %c0_48, %c0_49] : memref<1x128x256xbf16, #tpu.memory_space<vmem>>, vector<1x128x256xbf16>
      %100 = vector.shape_cast %99 : vector<1x128x256xbf16> to vector<128x256xbf16>
      %101 = vector.shape_cast %97 : vector<128x256xbf16> to vector<1x128x256xbf16>
      tpu.vector_store %arg19[%98, %c0_48, %c0_49], %101 {strides = array<i32>} : memref<1x128x256xbf16, #tpu.memory_space<vmem>>, vector<1x128x256xbf16>,
    } else {
    }
    %6 = arith.index_cast %arg2 : i32 to index
    %c0 = arith.constant 0 : index
    %c0_3 = arith.constant 0 : index
    %7 = vector.load %arg18[%6, %c0, %c0_3] : memref<1x128x256xbf16, #tpu.memory_space<vmem>>, vector<1x128x256xbf16>
    %8 = vector.shape_cast %7 : vector<1x128x256xbf16> to vector<128x256xbf16>
    %9 = arith.index_cast %arg2 : i32 to index
    %c0_4 = arith.constant 0 : index
    %c0_5 = arith.constant 0 : index
    %10 = vector.load %arg19[%9, %c0_4, %c0_5] : memref<1x128x256xbf16, #tpu.memory_space<vmem>>, vector<1x128x256xbf16>
    %11 = vector.shape_cast %10 : vector<1x128x256xbf16> to vector<128x256xbf16>
    %c0_6 = arith.constant 0 : index
    %c0_7 = arith.constant 0 : index
    %c0_8 = arith.constant 0 : index
    %12 = vector.load %arg3[%c0_6, %c0_7, %c0_8] : memref<1x256x256xf32, #tpu.memory_space<vmem>>, vector<1x256x256xf32>
    %13 = vector.shape_cast %12 : vector<1x256x256xf32> to vector<256x256xf32>
    %14 = arith.truncf %13 : vector<256x256xf32> to vector<256x256xbf16>
    %15 = arith.index_cast %arg2 : i32 to index
    %c0_9 = arith.constant 0 : index
    %c0_10 = arith.constant 0 : index
    %16 = vector.load %arg6[%15, %c0_9, %c0_10] : memref<1x256x256xbf16, #tpu.memory_space<vmem>>, vector<1x256x256xbf16>
    %17 = vector.shape_cast %16 : vector<1x256x256xbf16> to vector<256x256xbf16>
    %cst = arith.constant dense<0.000000e+00> : vector<256x256xf32>
    %18 = tpu.matmul %14, %17, %cst {dimension_numbers = #tpu.dot_dimension_numbers<[1], [0], [0], [1], [0, 0, 1, 1], [], []>} : vector<256x256xbf16>, vector<256x256xbf16>, vector<256x256xf32> -> vector<256x256xf32>
    %19 = arith.index_cast %arg2 : i32 to index
    %c0_11 = arith.constant 0 : index
    %c0_12 = arith.constant 0 : index
    %20 = vector.load %arg7[%19, %c0_11, %c0_12] : memref<1x1x256xf32, #tpu.memory_space<vmem>>, vector<1x1x256xf32>
    %21 = vector.shape_cast %20 : vector<1x1x256xf32> to vector<1x256xf32>
    %22 = vector.broadcast %21 : vector<1x256xf32> to vector<256x256xf32>
    %23 = arith.addf %18, %22 : vector<256x256xf32>
    %24 = arith.truncf %23 : vector<256x256xf32> to vector<256x256xbf16>
    %25 = vector.extract_strided_slice %24 {offsets = [0, 0], sizes = [256, 128], strides = [1, 1]} : vector<256x256xbf16> to vector<256x128xbf16>
    %26 = vector.extract_strided_slice %8 {offsets = [0, 0], sizes = [128, 128], strides = [1, 1]} : vector<128x256xbf16> to vector<128x128xbf16>
    %cst_13 = arith.constant dense<0.000000e+00> : vector<256x128xf32>
    %27 = tpu.matmul %25, %26, %cst_13 {dimension_numbers = #tpu.dot_dimension_numbers<[1], [1], [0], [0], [0, 0, 1, 0], [], []>} : vector<256x128xbf16>, vector<128x128xbf16>, vector<256x128xf32> -> vector<256x128xf32>
    %cst_14 = arith.constant dense<0xFF800000> : vector<256xf32>
    %28 = vector.multi_reduction <maximumf>, %27, %cst_14 [1] : vector<256x128xf32> to vector<256xf32>
    %29 = vector.shape_cast %28 : vector<256xf32> to vector<256x1xf32>
    %30 = vector.broadcast %29 : vector<256x1xf32> to vector<256x128xf32>
    %31 = arith.subf %27, %30 : vector<256x128xf32>
    %32 = math.exp %31 : vector<256x128xf32>
    %cst_15 = arith.constant dense<0.000000e+00> : vector<256xf32>
    %33 = vector.multi_reduction <add>, %32, %cst_15 [1] : vector<256x128xf32> to vector<256xf32>
    %34 = vector.shape_cast %33 : vector<256xf32> to vector<256x1xf32>
    %35 = arith.truncf %32 : vector<256x128xf32> to vector<256x128xbf16>
    %36 = vector.extract_strided_slice %11 {offsets = [0, 0], sizes = [128, 128], strides = [1, 1]} : vector<128x256xbf16> to vector<128x128xbf16>
    %cst_16 = arith.constant dense<0.000000e+00> : vector<256x128xf32>
    %37 = tpu.matmul %35, %36, %cst_16 {dimension_numbers = #tpu.dot_dimension_numbers<[1], [0], [0], [1], [0, 0, 1, 1], [], []>} : vector<256x128xbf16>, vector<128x128xbf16>, vector<256x128xf32> -> vector<256x128xf32>
    %38 = tpu.reciprocal %34 {approx = true} : vector<256x1xf32> -> vector<256x1xf32>
    %39 = vector.broadcast %38 : vector<256x1xf32> to vector<256x128xf32>
    %40 = arith.mulf %37, %39 : vector<256x128xf32>
    %41 = arith.truncf %40 : vector<256x128xf32> to vector<256x128xbf16>
    %42 = vector.extract_strided_slice %24 {offsets = [0, 128], sizes = [256, 128], strides = [1, 1]} : vector<256x256xbf16> to vector<256x128xbf16>
    %43 = vector.extract_strided_slice %8 {offsets = [0, 128], sizes = [128, 128], strides = [1, 1]} : vector<128x256xbf16> to vector<128x128xbf16>
    %cst_17 = arith.constant dense<0.000000e+00> : vector<256x128xf32>
    %44 = tpu.matmul %42, %43, %cst_17 {dimension_numbers = #tpu.dot_dimension_numbers<[1], [1], [0], [0], [0, 0, 1, 0], [], []>} : vector<256x128xbf16>, vector<128x128xbf16>, vector<256x128xf32> -> vector<256x128xf32>
    %cst_18 = arith.constant dense<0xFF800000> : vector<256xf32>
    %45 = vector.multi_reduction <maximumf>, %44, %cst_18 [1] : vector<256x128xf32> to vector<256xf32>
    %46 = vector.shape_cast %45 : vector<256xf32> to vector<256x1xf32>
    %47 = vector.broadcast %46 : vector<256x1xf32> to vector<256x128xf32>
    %48 = arith.subf %44, %47 : vector<256x128xf32>
    %49 = math.exp %48 : vector<256x128xf32>
    %cst_19 = arith.constant dense<0.000000e+00> : vector<256xf32>
    %50 = vector.multi_reduction <add>, %49, %cst_19 [1] : vector<256x128xf32> to vector<256xf32>
    %51 = vector.shape_cast %50 : vector<256xf32> to vector<256x1xf32>
    %52 = arith.truncf %49 : vector<256x128xf32> to vector<256x128xbf16>
    %53 = vector.extract_strided_slice %11 {offsets = [0, 128], sizes = [128, 128], strides = [1, 1]} : vector<128x256xbf16> to vector<128x128xbf16>
    %cst_20 = arith.constant dense<0.000000e+00> : vector<256x128xf32>
    %54 = tpu.matmul %52, %53, %cst_20 {dimension_numbers = #tpu.dot_dimension_numbers<[1], [0], [0], [1], [0, 0, 1, 1], [], []>} : vector<256x128xbf16>, vector<128x128xbf16>, vector<256x128xf32> -> vector<256x128xf32>
    %55 = tpu.reciprocal %51 {approx = true} : vector<256x1xf32> -> vector<256x1xf32>
    %56 = vector.broadcast %55 : vector<256x1xf32> to vector<256x128xf32>
    %57 = arith.mulf %54, %56 : vector<256x128xf32>
    %58 = arith.truncf %57 : vector<256x128xf32> to vector<256x128xbf16>
    %59 = tpu.concatenate %41, %58 in 1 : vector<256x128xbf16>, vector<256x128xbf16> -> vector<256x256xbf16>
    %c0_21 = arith.constant 0 : index
    %c0_22 = arith.constant 0 : index
    %60 = vector.load %arg17[%c0_21, %c0_22] : memref<256x256xf32, #tpu.memory_space<vmem>>, vector<256x256xf32>
    %61 = arith.index_cast %arg2 : i32 to index
    %c0_23 = arith.constant 0 : index
    %c0_24 = arith.constant 0 : index
    %62 = vector.load %arg12[%61, %c0_23, %c0_24] : memref<1x256x256xbf16, #tpu.memory_space<vmem>>, vector<1x256x256xbf16>
    %63 = vector.shape_cast %62 : vector<1x256x256xbf16> to vector<256x256xbf16>
    %cst_25 = arith.constant dense<0.000000e+00> : vector<256x256xf32>
    %64 = tpu.matmul %59, %63, %cst_25 {dimension_numbers = #tpu.dot_dimension_numbers<[1], [0], [0], [1], [0, 0, 1, 1], [], []>} : vector<256x256xbf16>, vector<256x256xbf16>, vector<256x256xf32> -> vector<256x256xf32>
    %65 = arith.addf %60, %64 : vector<256x256xf32>
    %c0_26 = arith.constant 0 : index
    %c0_27 = arith.constant 0 : index
    %66 = vector.load %arg17[%c0_26, %c0_27] : memref<256x256xf32, #tpu.memory_space<vmem>>, vector<256x256xf32>
    tpu.vector_store %arg17[%c0_26, %c0_27], %65 {strides = array<i32>} : memref<256x256xf32, #tpu.memory_space<vmem>>, vector<256x256xf32>,
    %c0_i32_28 = arith.constant 0 : i32
    %67 = arith.cmpi eq, %arg2, %c0_i32_28 : i32
    %68 = arith.extui %67 : i1 to i32
    %c0_i32_29 = arith.constant 0 : i32
    %69 = arith.cmpi ne, %68, %c0_i32_29 : i32
    scf.if %69 {
      %c0_30 = arith.constant 0 : index
      %c0_31 = arith.constant 0 : index
      %70 = vector.load %arg17[%c0_30, %c0_31] : memref<256x256xf32, #tpu.memory_space<vmem>>, vector<256x256xf32>
      %71 = arith.addf %13, %70 : vector<256x256xf32>
      %c0_32 = arith.constant 0 : index
      %c0_33 = arith.constant 0 : index
      %72 = vector.load %arg13[%c0_32, %c0_33] : memref<1x256xf32, #tpu.memory_space<vmem>>, vector<1x256xf32>
      %73 = vector.broadcast %72 : vector<1x256xf32> to vector<256x256xf32>
      %74 = arith.addf %71, %73 : vector<256x256xf32>
      %cst_34 = arith.constant dense<0.000000e+00> : vector<256xf32>
      %75 = vector.multi_reduction <add>, %74, %cst_34 [1] : vector<256x256xf32> to vector<256xf32>
      %76 = vector.shape_cast %75 : vector<256xf32> to vector<256x1xf32>
      %cst_35 = arith.constant 2.560000e+02 : f32
      %77 = vector.broadcast %cst_35 : f32 to vector<256x1xf32>
      %78 = arith.divf %76, %77 : vector<256x1xf32>
      %79 = vector.broadcast %78 : vector<256x1xf32> to vector<256x256xf32>
      %80 = arith.subf %74, %79 : vector<256x256xf32>
      %81 = arith.mulf %80, %80 : vector<256x256xf32>
      %cst_36 = arith.constant dense<0.000000e+00> : vector<256xf32>
      %82 = vector.multi_reduction <add>, %81, %cst_36 [1] : vector<256x256xf32> to vector<256xf32>
      %83 = vector.shape_cast %82 : vector<256xf32> to vector<256x1xf32>
      %cst_37 = arith.constant 2.560000e+02 : f32
      %84 = vector.broadcast %cst_37 : f32 to vector<256x1xf32>
      %85 = arith.divf %83, %84 : vector<256x1xf32>
      %cst_38 = arith.constant 9.99999974E-6 : f32
      %86 = vector.broadcast %cst_38 : f32 to vector<256x1xf32>
      %87 = arith.addf %85, %86 : vector<256x1xf32>
      %88 = math.rsqrt %87 : vector<256x1xf32>
      %89 = vector.broadcast %88 : vector<256x1xf32> to vector<256x256xf32>
      %90 = arith.mulf %80, %89 : vector<256x256xf32>
      %c0_39 = arith.constant 0 : index
      %c0_40 = arith.constant 0 : index
      %91 = vector.load %arg14[%c0_39, %c0_40] : memref<1x256xf32, #tpu.memory_space<vmem>>, vector<1x256xf32>
      %92 = vector.broadcast %91 : vector<1x256xf32> to vector<256x256xf32>
      %93 = arith.mulf %90, %92 : vector<256x256xf32>
      %c0_41 = arith.constant 0 : index
      %c0_42 = arith.constant 0 : index
      %94 = vector.load %arg15[%c0_41, %c0_42] : memref<1x256xf32, #tpu.memory_space<vmem>>, vector<1x256xf32>
      %95 = vector.broadcast %94 : vector<1x256xf32> to vector<256x256xf32>
      %96 = arith.addf %93, %95 : vector<256x256xf32>
      %c0_43 = arith.constant 0 : index
      %c0_44 = arith.constant 0 : index
      %c0_45 = arith.constant 0 : index
      %97 = vector.load %arg16[%c0_43, %c0_44, %c0_45] : memref<1x256x256xf32, #tpu.memory_space<vmem>>, vector<1x256x256xf32>
      %98 = vector.shape_cast %97 : vector<1x256x256xf32> to vector<256x256xf32>
      %99 = vector.shape_cast %96 : vector<256x256xf32> to vector<1x256x256xf32>
      tpu.vector_store %arg16[%c0_43, %c0_44, %c0_45], %99 {strides = array<i32>} : memref<1x256x256xf32, #tpu.memory_space<vmem>>, vector<1x256x256xf32>,
    } else {
    }
    return
  }
  func.func @transform_0(%arg0: i32, %arg1: i32, %arg2: i32) -> (i32, i32, i32) {
    %c0_i32 = arith.constant 0 : i32
    %c0_i32_0 = arith.constant 0 : i32
    return %arg0, %arg1, %c0_i32 : i32, i32, i32
  }
  func.func @transform_1(%arg0: i32, %arg1: i32, %arg2: i32) -> (i32, i32, i32) {
    %c0_i32 = arith.constant 0 : i32
    %c0_i32_0 = arith.constant 0 : i32
    %c0_i32_1 = arith.constant 0 : i32
    return %arg0, %c0_i32, %c0_i32_0 : i32, i32, i32
  }
  func.func @transform_2(%arg0: i32, %arg1: i32, %arg2: i32) -> (i32, i32, i32) {
    %c0_i32 = arith.constant 0 : i32
    %c0_i32_0 = arith.constant 0 : i32
    %c0_i32_1 = arith.constant 0 : i32
    return %arg0, %c0_i32, %c0_i32_0 : i32, i32, i32
  }
  func.func @transform_3(%arg0: i32, %arg1: i32, %arg2: i32) -> (i32, i32, i32) {
    %c0_i32 = arith.constant 0 : i32
    %c0_i32_0 = arith.constant 0 : i32
    %c0_i32_1 = arith.constant 0 : i32
    %c0_i32_2 = arith.constant 0 : i32
    return %c0_i32, %c0_i32_0, %c0_i32_1 : i32, i32, i32
  }
  func.func @transform_4(%arg0: i32, %arg1: i32, %arg2: i32) -> (i32, i32, i32) {
    %c0_i32 = arith.constant 0 : i32
    %c0_i32_0 = arith.constant 0 : i32
    %c0_i32_1 = arith.constant 0 : i32
    %c0_i32_2 = arith.constant 0 : i32
    return %c0_i32, %c0_i32_0, %c0_i32_1 : i32, i32, i32
  }
  func.func @transform_5(%arg0: i32, %arg1: i32, %arg2: i32) -> (i32, i32, i32) {
    %c0_i32 = arith.constant 0 : i32
    %c0_i32_0 = arith.constant 0 : i32
    %c0_i32_1 = arith.constant 0 : i32
    %c0_i32_2 = arith.constant 0 : i32
    return %c0_i32, %c0_i32_0, %c0_i32_1 : i32, i32, i32
  }
  func.func @transform_6(%arg0: i32, %arg1: i32, %arg2: i32) -> (i32, i32, i32) {
    %c0_i32 = arith.constant 0 : i32
    %c0_i32_0 = arith.constant 0 : i32
    %c0_i32_1 = arith.constant 0 : i32
    %c0_i32_2 = arith.constant 0 : i32
    return %c0_i32, %c0_i32_0, %c0_i32_1 : i32, i32, i32
  }
  func.func @transform_7(%arg0: i32, %arg1: i32, %arg2: i32) -> (i32, i32, i32) {
    %c0_i32 = arith.constant 0 : i32
    %c0_i32_0 = arith.constant 0 : i32
    %c0_i32_1 = arith.constant 0 : i32
    %c0_i32_2 = arith.constant 0 : i32
    return %c0_i32, %c0_i32_0, %c0_i32_1 : i32, i32, i32
  }
  func.func @transform_8(%arg0: i32, %arg1: i32, %arg2: i32) -> (i32, i32, i32) {
    %c0_i32 = arith.constant 0 : i32
    %c0_i32_0 = arith.constant 0 : i32
    %c0_i32_1 = arith.constant 0 : i32
    %c0_i32_2 = arith.constant 0 : i32
    return %c0_i32, %c0_i32_0, %c0_i32_1 : i32, i32, i32
  }
  func.func @transform_9(%arg0: i32, %arg1: i32, %arg2: i32) -> (i32, i32, i32) {
    %c0_i32 = arith.constant 0 : i32
    %c0_i32_0 = arith.constant 0 : i32
    %c0_i32_1 = arith.constant 0 : i32
    %c0_i32_2 = arith.constant 0 : i32
    return %c0_i32, %c0_i32_0, %c0_i32_1 : i32, i32, i32
  }
  func.func @transform_10(%arg0: i32, %arg1: i32, %arg2: i32) -> (i32, i32) {
    %c0_i32 = arith.constant 0 : i32
    %c0_i32_0 = arith.constant 0 : i32
    %c0_i32_1 = arith.constant 0 : i32
    return %c0_i32, %c0_i32_0 : i32, i32
  }
  func.func @transform_11(%arg0: i32, %arg1: i32, %arg2: i32) -> (i32, i32) {
    %c0_i32 = arith.constant 0 : i32
    %c0_i32_0 = arith.constant 0 : i32
    %c0_i32_1 = arith.constant 0 : i32
    return %c0_i32, %c0_i32_0 : i32, i32
  }
  func.func @transform_12(%arg0: i32, %arg1: i32, %arg2: i32) -> (i32, i32) {
    %c0_i32 = arith.constant 0 : i32
    %c0_i32_0 = arith.constant 0 : i32
    %c0_i32_1 = arith.constant 0 : i32
    return %c0_i32, %c0_i32_0 : i32, i32
  }
  func.func @transform_13(%arg0: i32, %arg1: i32, %arg2: i32) -> (i32, i32, i32) {
    %c0_i32 = arith.constant 0 : i32
    %c0_i32_0 = arith.constant 0 : i32
    return %arg0, %arg1, %c0_i32 : i32, i32, i32
  }
}

</mosaic_0001>

<llo_original>
// kernel: tpu_custom_call.1
$region0: #{tpu_custom_call.1}
  #allocation0 [shape = 'u32[]', space=smem, size = 0x4, offset = 0x4, fixed_abs, tag = 'smem constant byte address 0x4 - core index']
  #allocation1 [shape = 'u32[72,128]{1,0:T(1,128)}', space=vmem, size = 0x9000, scoped, tag = 'internal scratch']
  #allocation2 [shape = 'f32[256,256]{1,0:T(8,128)}', space=vmem, size = 0x40000, scoped, tag = 'scratch operand']
  #allocation3 [shape = 'bf16[1,128,256]{2,1,0:T(8,128)(2,1)}', space=vmem, size = 0x10000, scoped, tag = 'scratch operand']
  #allocation4 [shape = 'bf16[1,128,256]{2,1,0:T(8,128)(2,1)}', space=vmem, size = 0x10000, scoped, tag = 'scratch operand']
  %s0 = inlined_call_operand.hbm [shape: f32[2,256,256], index: 0, kind: input, shape index: {}]
  %s1 = inlined_call_operand.hbm [shape: bf16[2,128,256], index: 1, kind: input, shape index: {}]
  %s2 = inlined_call_operand.hbm [shape: bf16[2,128,256], index: 2, kind: input, shape index: {}]
  %s3 = inlined_call_operand.hbm [shape: bf16[1,256,256], index: 3, kind: input, shape index: {}]
  %s4 = inlined_call_operand.vmem [shape: f32[1,1,256], index: 4, kind: input, shape index: {}]
  %s5 = inlined_call_operand.hbm [shape: bf16[1,256,256], index: 5, kind: input, shape index: {}]
  %s6 = inlined_call_operand.vmem [shape: f32[1,1,256], index: 6, kind: input, shape index: {}]
  %s7 = inlined_call_operand.hbm [shape: bf16[1,256,256], index: 7, kind: input, shape index: {}]
  %s8 = inlined_call_operand.vmem [shape: f32[1,1,256], index: 8, kind: input, shape index: {}]
  %s9 = inlined_call_operand.hbm [shape: bf16[1,256,256], index: 9, kind: input, shape index: {}]
  %s10 = inlined_call_operand.vmem [shape: f32[1,256], index: 10, kind: input, shape index: {}]
  %s11 = inlined_call_operand.vmem [shape: f32[1,256], index: 11, kind: input, shape index: {}]
  %s12 = inlined_call_operand.hbm [shape: f32[1,256], index: 12, kind: input, shape index: {}]
  %s13 = inlined_call_operand.hbm [shape: f32[2,256,256], index: 13, kind: output, shape index: {}]
  %s14 = sld [smem:[#allocation0]]
  $region129: #{tpu_custom_call.1} parent=0
    _
  %s16 = ssub.s32 1, %s14
  %s17 = scalar_select 0, %s16, %s14
  $region1: #{tpu_custom_call.1} parent=0
    #allocation5 [shape = 'u8[524288]{0}', space=vmem, size = 0x80000, scoped, tag = 'input window, operand 0']
    #allocation6 [shape = 's32[2]{0}', space=sflag, size = 0x8, scoped, tag = 'scoped memory for tpu_custom_call.1']
    #allocation7 [shape = 's32[2]{0}', space=sflag, size = 0x8, scoped, tag = 'scoped memory for tpu_custom_call.1']
    #allocation8 [shape = 'u8[131072]{0}', space=vmem, size = 0x20000, scoped, tag = 'input window, operand 1']
    #allocation9 [shape = 's32[2]{0}', space=sflag, size = 0x8, scoped, tag = 'scoped memory for tpu_custom_call.1']
    #allocation10 [shape = 'u8[131072]{0}', space=vmem, size = 0x20000, scoped, tag = 'input window, operand 2']
    #allocation11 [shape = 'u8[131072]{0}', space=vmem, size = 0x20000, scoped, tag = 'input window, operand 3, single buffered']
    #allocation12 [shape = 's32[1]{0}', space=sflag, size = 0x4, scoped, tag = 'scoped memory for tpu_custom_call.1']
    #allocation13 [shape = 'u8[131072]{0}', space=vmem, size = 0x20000, scoped, tag = 'input window, operand 5, single buffered']
    #allocation14 [shape = 'u8[131072]{0}', space=vmem, size = 0x20000, scoped, tag = 'input window, operand 7, single buffered']
    #allocation15 [shape = 's32[1]{0}', space=sflag, size = 0x4, scoped, tag = 'scoped memory for tpu_custom_call.1']
    #allocation16 [shape = 'u8[131072]{0}', space=vmem, size = 0x20000, scoped, tag = 'input window, operand 9, single buffered']
    #allocation17 [shape = 'u8[1024]{0}', space=vmem, size = 0x400, scoped, tag = 'input window, operand 12, single buffered']
    #allocation18 [shape = 's32[1]{0}', space=sflag, size = 0x4, scoped, tag = 'scoped memory for tpu_custom_call.1']
    #allocation19 [shape = 'u8[524288]{0}', space=vmem, size = 0x80000, scoped, tag = 'output window, operand 0']
    %18 = vsyncpa [#allocation6], 0
    %s19 = scalar_lea.sflag [#allocation6], 1
    %20 = vsyncpa %s19, 0
    %21 = vsyncpa [#allocation9], 0
    %s22 = scalar_lea.sflag [#allocation9], 1
    %23 = vsyncpa %s22, 0
    %24 = vsyncpa [#allocation12], 0
    %25 = vsyncpa [#allocation15], 0
    %26 = vsyncpa [#allocation18], 0
    %27 = vsyncpa [#allocation7], 0
    %s28 = scalar_lea.sflag [#allocation7], 1
    %29 = vsyncpa %s28, 0
    loop: start=0, step=1, limit=4
    $region2: #{tpu_custom_call.1} parent=1 // loop_pre_header
      _
    $region3: #{tpu_custom_call.1} parent=1 // loop_header
      %s31 = sphi 0, %s35
      %p32 = scmp.ge.s32.totalorder %s31, 4
      %s38 = sphi 0, %s57
      %s39 = sphi 0, %s53
      %s40 = sphi 0, %s49
      %s41 = sphi 0, %s38
      %s42 = sphi 0, %s39
      %s43 = sphi 0, %s40
      %s44 = sphi 0, %s41
      %s45 = sphi 0, %s42
      %s46 = sphi 0, %s43
      %s62 = sphi 0, %s64
      %s65 = sphi 0, %s62
      %s66 = sphi 0, %s65
      %s82 = sphi 0, %s66
      %s88 = sphi 0, %s90
      %s91 = sphi 0, %s88
      %s92 = sphi 0, %s91
      %s108 = sphi 0, %s92
      %s114 = sphi 0, %s116
      %s117 = sphi 0, %s114
      %s118 = sphi 0, %s117
      %s134 = sphi 0, %s118
      %s138 = sphi 0, %s138
      %s140 = sphi 0, %s138
      %s141 = sphi 0, %s140
      %s155 = sphi 0, %s141
      %s159 = sphi 0, %s159
      %s161 = sphi 0, %s159
      %s162 = sphi 0, %s161
      %s176 = sphi 0, %s162
      %s180 = sphi 0, %s180
      %s182 = sphi 0, %s180
      %s183 = sphi 0, %s182
      %s197 = sphi 0, %s183
      %s201 = sphi 0, %s201
      %s203 = sphi 0, %s201
      %s204 = sphi 0, %s203
      %s218 = sphi 0, %s204
      %s222 = sphi 0, %s222
      %s224 = sphi 0, %s222
      %s225 = sphi 0, %s224
      %s239 = sphi 0, %s225
      %s243 = sphi 0, %s243
      %s245 = sphi 0, %s243
      %s246 = sphi 0, %s245
      %s260 = sphi 0, %s246
      %s264 = sphi 0, %s264
      %s266 = sphi 0, %s264
      %s267 = sphi 0, %s266
      %s281 = sphi 0, %s267
      %s285 = sphi 0, %s285
      %s287 = sphi 0, %s285
      %s288 = sphi 0, %s287
      %s302 = sphi 0, %s288
      %s306 = sphi 0, %s306
      %s308 = sphi 0, %s306
      %s309 = sphi 0, %s308
      %s323 = sphi 0, %s309
      %s327 = sphi 0, %s327
      %s329 = sphi 0, %s327
      %s330 = sphi 0, %s329
      %s344 = sphi 0, %s330
      %s352 = sphi 0, %s354
      %s355 = sphi 0, %s352
      %s356 = sphi 0, %s355
      %s372 = sphi 0, %s356
    $region4: #{tpu_custom_call.1} parent=1 // loop_header_branch
      %34 = sbr.rel (%p32) target = $region8
    $region5: #{tpu_custom_call.1} parent=1 // loop_body
      %s36 = ssub.s32 %s31, 1
      %s37 = ssub.s32 %s31, 2
      %s47 = sadd.s32 1, %s40
      %p48 = scmp.ge.s32.totalorder %s47, 1
      %s49 = scalar_select %p48, 0, %s47
      %s50 = sadd.s32 1, %s39
      %s51 = scalar_select %p48, %s50, %s39
      %p52 = scmp.ge.s32.totalorder %s51, 1
      %s53 = scalar_select %p52, 0, %s51
      %s54 = sadd.s32 1, %s38
      %s55 = scalar_select %p52, %s54, %s38
      %p56 = scmp.ge.s32.totalorder %s55, 2
      %s57 = scalar_select %p56, 0, %s55
      %s58 = ssub.s32 %s38, %s57
      %s59 = ssub.s32 %s39, %s53
      %s60 = sor.u32 %s58, %s59
      %p61 = scmp.eq.s32.totalorder %s60, 0
      %s63 = sadd.s32 %s62, 1
      %s64 = scalar_select %p61, %s62, %s63
      %p67 = pneg %p61
      %p68 = scmp.eq.s32.totalorder %s31, 1
      %p69 = por %p67, %p68
      %p70 = scmp.ne.s32.totalorder %s62, %s65
      %p71 = scmp.eq.s32.totalorder %s31, 0
      %p72 = por %p70, %p71
      %p73 = scmp.ne.s32.totalorder %s62, %s65
      %p74 = scmp.eq.s32.totalorder %s36, 1
      %p75 = por %p73, %p74
      %p76 = scmp.ne.s32.totalorder %s65, %s66
      %p77 = scmp.eq.s32.totalorder %s36, 0
      %p78 = por %p76, %p77
      %p79 = scmp.ne.s32.totalorder %s65, %s66
      %p80 = scmp.eq.s32.totalorder %s37, 1
      %p81 = por %p79, %p80
      %p83 = scmp.ne.s32.totalorder %s66, %s82
      %p84 = scmp.eq.s32.totalorder %s37, 0
      %p85 = por %p83, %p84
      %s86 = ssub.s32 %s38, %s57
      %p87 = scmp.eq.s32.totalorder %s86, 0
      %s89 = sadd.s32 %s88, 1
      %s90 = scalar_select %p87, %s88, %s89
      %p93 = pneg %p87
      %p94 = scmp.eq.s32.totalorder %s31, 1
      %p95 = por %p93, %p94
      %p96 = scmp.ne.s32.totalorder %s88, %s91
      %p97 = scmp.eq.s32.totalorder %s31, 0
      %p98 = por %p96, %p97
      %p99 = scmp.ne.s32.totalorder %s88, %s91
      %p100 = scmp.eq.s32.totalorder %s36, 1
      %p101 = por %p99, %p100
      %p102 = scmp.ne.s32.totalorder %s91, %s92
      %p103 = scmp.eq.s32.totalorder %s36, 0
      %p104 = por %p102, %p103
      %p105 = scmp.ne.s32.totalorder %s91, %s92
      %p106 = scmp.eq.s32.totalorder %s37, 1
      %p107 = por %p105, %p106
      %p109 = scmp.ne.s32.totalorder %s92, %s108
      %p110 = scmp.eq.s32.totalorder %s37, 0
      %p111 = por %p109, %p110
      %s112 = ssub.s32 %s38, %s57
      %p113 = scmp.eq.s32.totalorder %s112, 0
      %s115 = sadd.s32 %s114, 1
      %s116 = scalar_select %p113, %s114, %s115
      %p119 = pneg %p113
      %p120 = scmp.eq.s32.totalorder %s31, 1
      %p121 = por %p119, %p120
      %p122 = scmp.ne.s32.totalorder %s114, %s117
      %p123 = scmp.eq.s32.totalorder %s31, 0
      %p124 = por %p122, %p123
      %p125 = scmp.ne.s32.totalorder %s114, %s117
      %p126 = scmp.eq.s32.totalorder %s36, 1
      %p127 = por %p125, %p126
      %p128 = scmp.ne.s32.totalorder %s117, %s118
      %p129 = scmp.eq.s32.totalorder %s36, 0
      %p130 = por %p128, %p129
      %p131 = scmp.ne.s32.totalorder %s117, %s118
      %p132 = scmp.eq.s32.totalorder %s37, 1
      %p133 = por %p131, %p132
      %p135 = scmp.ne.s32.totalorder %s118, %s134
      %p136 = scmp.eq.s32.totalorder %s37, 0
      %p137 = por %p135, %p136
      %s139 = sadd.s32 %s138, 1
      %p142 = scmp.eq.s32.totalorder %s31, 1
      %p143 = scmp.ne.s32.totalorder %s138, %s140
      %p144 = scmp.eq.s32.totalorder %s31, 0
      %p145 = por %p143, %p144
      %p146 = scmp.ne.s32.totalorder %s138, %s140
      %p147 = scmp.eq.s32.totalorder %s36, 1
      %p148 = por %p146, %p147
      %p149 = scmp.ne.s32.totalorder %s140, %s141
      %p150 = scmp.eq.s32.totalorder %s36, 0
      %p151 = por %p149, %p150
      %p152 = scmp.ne.s32.totalorder %s140, %s141
      %p153 = scmp.eq.s32.totalorder %s37, 1
      %p154 = por %p152, %p153
      %p156 = scmp.ne.s32.totalorder %s141, %s155
      %p157 = scmp.eq.s32.totalorder %s37, 0
      %p158 = por %p156, %p157
      %s160 = sadd.s32 %s159, 1
      %p163 = scmp.eq.s32.totalorder %s31, 1
      %p164 = scmp.ne.s32.totalorder %s159, %s161
      %p165 = scmp.eq.s32.totalorder %s31, 0
      %p166 = por %p164, %p165
      %p167 = scmp.ne.s32.totalorder %s159, %s161
      %p168 = scmp.eq.s32.totalorder %s36, 1
      %p169 = por %p167, %p168
      %p170 = scmp.ne.s32.totalorder %s161, %s162
      %p171 = scmp.eq.s32.totalorder %s36, 0
      %p172 = por %p170, %p171
      %p173 = scmp.ne.s32.totalorder %s161, %s162
      %p174 = scmp.eq.s32.totalorder %s37, 1
      %p175 = por %p173, %p174
      %p177 = scmp.ne.s32.totalorder %s162, %s176
      %p178 = scmp.eq.s32.totalorder %s37, 0
      %p179 = por %p177, %p178
      %s181 = sadd.s32 %s180, 1
      %p184 = scmp.eq.s32.totalorder %s31, 1
      %p185 = scmp.ne.s32.totalorder %s180, %s182
      %p186 = scmp.eq.s32.totalorder %s31, 0
      %p187 = por %p185, %p186
      %p188 = scmp.ne.s32.totalorder %s180, %s182
      %p189 = scmp.eq.s32.totalorder %s36, 1
      %p190 = por %p188, %p189
      %p191 = scmp.ne.s32.totalorder %s182, %s183
      %p192 = scmp.eq.s32.totalorder %s36, 0
      %p193 = por %p191, %p192
      %p194 = scmp.ne.s32.totalorder %s182, %s183
      %p195 = scmp.eq.s32.totalorder %s37, 1
      %p196 = por %p194, %p195
      %p198 = scmp.ne.s32.totalorder %s183, %s197
      %p199 = scmp.eq.s32.totalorder %s37, 0
      %p200 = por %p198, %p199
      %s202 = sadd.s32 %s201, 1
      %p205 = scmp.eq.s32.totalorder %s31, 1
      %p206 = scmp.ne.s32.totalorder %s201, %s203
      %p207 = scmp.eq.s32.totalorder %s31, 0
      %p208 = por %p206, %p207
      %p209 = scmp.ne.s32.totalorder %s201, %s203
      %p210 = scmp.eq.s32.totalorder %s36, 1
      %p211 = por %p209, %p210
      %p212 = scmp.ne.s32.totalorder %s203, %s204
      %p213 = scmp.eq.s32.totalorder %s36, 0
      %p214 = por %p212, %p213
      %p215 = scmp.ne.s32.totalorder %s203, %s204
      %p216 = scmp.eq.s32.totalorder %s37, 1
      %p217 = por %p215, %p216
      %p219 = scmp.ne.s32.totalorder %s204, %s218
      %p220 = scmp.eq.s32.totalorder %s37, 0
      %p221 = por %p219, %p220
      %s223 = sadd.s32 %s222, 1
      %p226 = scmp.eq.s32.totalorder %s31, 1
      %p227 = scmp.ne.s32.totalorder %s222, %s224
      %p228 = scmp.eq.s32.totalorder %s31, 0
      %p229 = por %p227, %p228
      %p230 = scmp.ne.s32.totalorder %s222, %s224
      %p231 = scmp.eq.s32.totalorder %s36, 1
      %p232 = por %p230, %p231
      %p233 = scmp.ne.s32.totalorder %s224, %s225
      %p234 = scmp.eq.s32.totalorder %s36, 0
      %p235 = por %p233, %p234
      %p236 = scmp.ne.s32.totalorder %s224, %s225
      %p237 = scmp.eq.s32.totalorder %s37, 1
      %p238 = por %p236, %p237
      %p240 = scmp.ne.s32.totalorder %s225, %s239
      %p241 = scmp.eq.s32.totalorder %s37, 0
      %p242 = por %p240, %p241
      %s244 = sadd.s32 %s243, 1
      %p247 = scmp.eq.s32.totalorder %s31, 1
      %p248 = scmp.ne.s32.totalorder %s243, %s245
      %p249 = scmp.eq.s32.totalorder %s31, 0
      %p250 = por %p248, %p249
      %p251 = scmp.ne.s32.totalorder %s243, %s245
      %p252 = scmp.eq.s32.totalorder %s36, 1
      %p253 = por %p251, %p252
      %p254 = scmp.ne.s32.totalorder %s245, %s246
      %p255 = scmp.eq.s32.totalorder %s36, 0
      %p256 = por %p254, %p255
      %p257 = scmp.ne.s32.totalorder %s245, %s246
      %p258 = scmp.eq.s32.totalorder %s37, 1
      %p259 = por %p257, %p258
      %p261 = scmp.ne.s32.totalorder %s246, %s260
      %p262 = scmp.eq.s32.totalorder %s37, 0
      %p263 = por %p261, %p262
      %s265 = sadd.s32 %s264, 1
      %p268 = scmp.eq.s32.totalorder %s31, 1
      %p269 = scmp.ne.s32.totalorder %s264, %s266
      %p270 = scmp.eq.s32.totalorder %s31, 0
      %p271 = por %p269, %p270
      %p272 = scmp.ne.s32.totalorder %s264, %s266
      %p273 = scmp.eq.s32.totalorder %s36, 1
      %p274 = por %p272, %p273
      %p275 = scmp.ne.s32.totalorder %s266, %s267
      %p276 = scmp.eq.s32.totalorder %s36, 0
      %p277 = por %p275, %p276
      %p278 = scmp.ne.s32.totalorder %s266, %s267
      %p279 = scmp.eq.s32.totalorder %s37, 1
      %p280 = por %p278, %p279
      %p282 = scmp.ne.s32.totalorder %s267, %s281
      %p283 = scmp.eq.s32.totalorder %s37, 0
      %p284 = por %p282, %p283
      %s286 = sadd.s32 %s285, 1
      %p289 = scmp.eq.s32.totalorder %s31, 1
      %p290 = scmp.ne.s32.totalorder %s285, %s287
      %p291 = scmp.eq.s32.totalorder %s31, 0
      %p292 = por %p290, %p291
      %p293 = scmp.ne.s32.totalorder %s285, %s287
      %p294 = scmp.eq.s32.totalorder %s36, 1
      %p295 = por %p293, %p294
      %p296 = scmp.ne.s32.totalorder %s287, %s288
      %p297 = scmp.eq.s32.totalorder %s36, 0
      %p298 = por %p296, %p297
      %p299 = scmp.ne.s32.totalorder %s287, %s288
      %p300 = scmp.eq.s32.totalorder %s37, 1
      %p301 = por %p299, %p300
      %p303 = scmp.ne.s32.totalorder %s288, %s302
      %p304 = scmp.eq.s32.totalorder %s37, 0
      %p305 = por %p303, %p304
      %s307 = sadd.s32 %s306, 1
      %p310 = scmp.eq.s32.totalorder %s31, 1
      %p311 = scmp.ne.s32.totalorder %s306, %s308
      %p312 = scmp.eq.s32.totalorder %s31, 0
      %p313 = por %p311, %p312
      %p314 = scmp.ne.s32.totalorder %s306, %s308
      %p315 = scmp.eq.s32.totalorder %s36, 1
      %p316 = por %p314, %p315
      %p317 = scmp.ne.s32.totalorder %s308, %s309
      %p318 = scmp.eq.s32.totalorder %s36, 0
      %p319 = por %p317, %p318
      %p320 = scmp.ne.s32.totalorder %s308, %s309
      %p321 = scmp.eq.s32.totalorder %s37, 1
      %p322 = por %p320, %p321
      %p324 = scmp.ne.s32.totalorder %s309, %s323
      %p325 = scmp.eq.s32.totalorder %s37, 0
      %p326 = por %p324, %p325
      %s328 = sadd.s32 %s327, 1
      %p331 = scmp.eq.s32.totalorder %s31, 1
      %p332 = scmp.ne.s32.totalorder %s327, %s329
      %p333 = scmp.eq.s32.totalorder %s31, 0
      %p334 = por %p332, %p333
      %p335 = scmp.ne.s32.totalorder %s327, %s329
      %p336 = scmp.eq.s32.totalorder %s36, 1
      %p337 = por %p335, %p336
      %p338 = scmp.ne.s32.totalorder %s329, %s330
      %p339 = scmp.eq.s32.totalorder %s36, 0
      %p340 = por %p338, %p339
      %p341 = scmp.ne.s32.totalorder %s329, %s330
      %p342 = scmp.eq.s32.totalorder %s37, 1
      %p343 = por %p341, %p342
      %p345 = scmp.ne.s32.totalorder %s330, %s344
      %p346 = scmp.eq.s32.totalorder %s37, 0
      %p347 = por %p345, %p346
      %s348 = ssub.s32 %s38, %s57
      %s349 = ssub.s32 %s39, %s53
      %s350 = sor.u32 %s348, %s349
      %p351 = scmp.eq.s32.totalorder %s350, 0
      %s353 = sadd.s32 %s352, 1
      %s354 = scalar_select %p351, %s352, %s353
      %p357 = pneg %p351
      %p358 = scmp.eq.s32.totalorder %s31, 1
      %p359 = por %p357, %p358
      %p360 = scmp.ne.s32.totalorder %s352, %s355
      %p361 = scmp.eq.s32.totalorder %s31, 0
      %p362 = por %p360, %p361
      %p363 = scmp.ne.s32.totalorder %s352, %s355
      %p364 = scmp.eq.s32.totalorder %s36, 1
      %p365 = por %p363, %p364
      %p366 = scmp.ne.s32.totalorder %s355, %s356
      %p367 = scmp.eq.s32.totalorder %s36, 0
      %p368 = por %p366, %p367
      %p369 = scmp.ne.s32.totalorder %s355, %s356
      %p370 = scmp.eq.s32.totalorder %s37, 1
      %p371 = por %p369, %p370
      %p373 = scmp.ne.s32.totalorder %s356, %s372
      %p374 = scmp.eq.s32.totalorder %s37, 0
      %p375 = por %p373, %p374
      %p376 = scmp.le.s32.totalorder 1, %s31
      %p377 = scmp.lt.s32.totalorder %s31, 3
      %p378 = pnand %p376, %p377
      %p379 = pneg %p378
      // Predicated region
      $region9: #{tpu_custom_call.1} parent=5 // pred_check
        _
      $region10: #{tpu_custom_call.1} parent=5 // pred_check_branch
        %381 = sbr.rel (%p378) target = $region12
      $region11: #{tpu_custom_call.1} parent=5 // pred_region
        %s382 = ssub.s32 %s31, 1
        // Predicated region
        $region13: #{tpu_custom_call.1} parent=11 // pred_check
          %p383 = pneg %p151
        $region14: #{tpu_custom_call.1} parent=11 // pred_check_branch
          %385 = sbr.rel (%p383) target = $region16
        $region15: #{tpu_custom_call.1} parent=11 // pred_region
          %387 = vsyncadd [#allocation12], 0
          %s388 = sshll.u32 %s3, 4
          %s389 = int_to_ptr.hbm [resolvable:$true] %s388
          %s390 = sshll.u32 [#allocation11], 4
          %s391 = int_to_ptr.vmem [resolvable:$true] %s390
          %396 = dma.hbm_to_vmem [thread:$0]  %s389, 4096, %s391, [#allocation12], 128, 128, 8
        $region16: #{tpu_custom_call.1} parent=11 // pred_fallthru
          _
        // Predicated region
        $region17: #{tpu_custom_call.1} parent=11 // pred_check
          %p397 = pneg %p172
        $region18: #{tpu_custom_call.1} parent=11 // pred_check_branch
          %399 = sbr.rel (%p397) target = $region20
        $region19: #{tpu_custom_call.1} parent=11 // pred_region
          _
        $region20: #{tpu_custom_call.1} parent=11 // pred_fallthru
          _
        // Predicated region
        $region21: #{tpu_custom_call.1} parent=11 // pred_check
          %p400 = pneg %p193
        $region22: #{tpu_custom_call.1} parent=11 // pred_check_branch
          %402 = sbr.rel (%p400) target = $region24
        $region23: #{tpu_custom_call.1} parent=11 // pred_region
          %404 = vsyncadd [#allocation12], 0
          %s405 = sshll.u32 %s5, 4
          %s406 = int_to_ptr.hbm [resolvable:$true] %s405
          %s407 = sshll.u32 [#allocation13], 4
          %s408 = int_to_ptr.vmem [resolvable:$true] %s407
          %413 = dma.hbm_to_vmem [thread:$0]  %s406, 4096, %s408, [#allocation12], 128, 128, 8
        $region24: #{tpu_custom_call.1} parent=11 // pred_fallthru
          _
        // Predicated region
        $region25: #{tpu_custom_call.1} parent=11 // pred_check
          %p414 = pneg %p214
        $region26: #{tpu_custom_call.1} parent=11 // pred_check_branch
          %416 = sbr.rel (%p414) target = $region28
        $region27: #{tpu_custom_call.1} parent=11 // pred_region
          _
        $region28: #{tpu_custom_call.1} parent=11 // pred_fallthru
          _
        // Predicated region
        $region29: #{tpu_custom_call.1} parent=11 // pred_check
          %p417 = pneg %p235
        $region30: #{tpu_custom_call.1} parent=11 // pred_check_branch
          %419 = sbr.rel (%p417) target = $region32
        $region31: #{tpu_custom_call.1} parent=11 // pred_region
          %421 = vsyncadd [#allocation15], 0
          %s422 = sshll.u32 %s7, 4
          %s423 = int_to_ptr.hbm [resolvable:$true] %s422
          %s424 = sshll.u32 [#allocation14], 4
          %s425 = int_to_ptr.vmem [resolvable:$true] %s424
          %430 = dma.hbm_to_vmem [thread:$0]  %s423, 4096, %s425, [#allocation15], 128, 128, 8
        $region32: #{tpu_custom_call.1} parent=11 // pred_fallthru
          _
        // Predicated region
        $region33: #{tpu_custom_call.1} parent=11 // pred_check
          %p431 = pneg %p256
        $region34: #{tpu_custom_call.1} parent=11 // pred_check_branch
          %433 = sbr.rel (%p431) target = $region36
        $region35: #{tpu_custom_call.1} parent=11 // pred_region
          _
        $region36: #{tpu_custom_call.1} parent=11 // pred_fallthru
          _
        // Predicated region
        $region37: #{tpu_custom_call.1} parent=11 // pred_check
          %p434 = pneg %p277
        $region38: #{tpu_custom_call.1} parent=11 // pred_check_branch
          %436 = sbr.rel (%p434) target = $region40
        $region39: #{tpu_custom_call.1} parent=11 // pred_region
          %438 = vsyncadd [#allocation15], 0
          %s439 = sshll.u32 %s9, 4
          %s440 = int_to_ptr.hbm [resolvable:$true] %s439
          %s441 = sshll.u32 [#allocation16], 4
          %s442 = int_to_ptr.vmem [resolvable:$true] %s441
          %447 = dma.hbm_to_vmem [thread:$0]  %s440, 4096, %s442, [#allocation15], 128, 128, 8
        $region40: #{tpu_custom_call.1} parent=11 // pred_fallthru
          _
        // Predicated region
        $region41: #{tpu_custom_call.1} parent=11 // pred_check
          %p448 = pneg %p298
        $region42: #{tpu_custom_call.1} parent=11 // pred_check_branch
          %450 = sbr.rel (%p448) target = $region44
        $region43: #{tpu_custom_call.1} parent=11 // pred_region
          _
        $region44: #{tpu_custom_call.1} parent=11 // pred_fallthru
          _
        // Predicated region
        $region45: #{tpu_custom_call.1} parent=11 // pred_check
          %p451 = pneg %p319
        $region46: #{tpu_custom_call.1} parent=11 // pred_check_branch
          %453 = sbr.rel (%p451) target = $region48
        $region47: #{tpu_custom_call.1} parent=11 // pred_region
          _
        $region48: #{tpu_custom_call.1} parent=11 // pred_fallthru
          _
        // Predicated region
        $region49: #{tpu_custom_call.1} parent=11 // pred_check
          %p454 = pneg %p340
        $region50: #{tpu_custom_call.1} parent=11 // pred_check_branch
          %456 = sbr.rel (%p454) target = $region52
        $region51: #{tpu_custom_call.1} parent=11 // pred_region
          %458 = vsyncadd [#allocation18], 0
          %s460 = sshll.u32 %s12, 4
          %s461 = int_to_ptr.hbm [resolvable:$true] %s460
          %s462 = sshll.u32 [#allocation17], 4
          %s463 = int_to_ptr.vmem [resolvable:$true] %s462
          %465 = dma.hbm_to_vmem [thread:$0]  %s461, 32, %s463, [#allocation18]
        $region52: #{tpu_custom_call.1} parent=11 // pred_fallthru
          _
      $region12: #{tpu_custom_call.1} parent=5 // pred_fallthru
        _
      %p466 = scmp.lt.s32.totalorder %s31, 2
      // Predicated region
      $region53: #{tpu_custom_call.1} parent=5 // pred_check
        %p467 = pneg %p466
      $region54: #{tpu_custom_call.1} parent=5 // pred_check_branch
        %469 = sbr.rel (%p467) target = $region56
      $region55: #{tpu_custom_call.1} parent=5 // pred_region
        // Predicated region
        $region57: #{tpu_custom_call.1} parent=55 // pred_check
          %p470 = pneg %p72
        $region58: #{tpu_custom_call.1} parent=55 // pred_check_branch
          %472 = sbr.rel (%p470) target = $region60
        $region59: #{tpu_custom_call.1} parent=55 // pred_region
          %s473 = sand.u32 %s62, 1
          %s474 = scalar_lea.sflag [#allocation6], %s473
          %s475 = sand.u32 %s62, 1
          %s476 = smul.addr %s475, 512
          %s477 = scalar_lea.vmem [#allocation5], %s476
          %s478 = smul.u32 32, %s39
          %480 = vsyncadd %s474, 0
          %s481 = smul.addr %s478, 2
          %s482 = smul.addr %s38, 64
          %s483 = sadd.s32 %s481, %s482
          %s484 = smul.addr %s483, 8
          %s485 = scalar_lea.hbm %s0, %s484
          %s486 = sshll.u32 %s485, 4
          %s487 = int_to_ptr.hbm [resolvable:$true] %s486
          %s488 = sshll.u32 %s477, 4
          %s489 = int_to_ptr.vmem [resolvable:$true] %s488
          %494 = dma.hbm_to_vmem [thread:$0]  %s487, 8192, %s489, %s474, 256, 256, 16
        $region60: #{tpu_custom_call.1} parent=55 // pred_fallthru
          _
        // Predicated region
        $region61: #{tpu_custom_call.1} parent=55 // pred_check
          %p495 = pneg %p98
        $region62: #{tpu_custom_call.1} parent=55 // pred_check_branch
          %497 = sbr.rel (%p495) target = $region64
        $region63: #{tpu_custom_call.1} parent=55 // pred_region
          %s498 = sand.u32 %s31, 1
          %s499 = scalar_lea.sflag [#allocation9], %s498
          %s500 = sand.u32 %s88, 1
          %s501 = smul.addr %s500, 128
          %s502 = scalar_lea.vmem [#allocation8], %s501
          %504 = vsyncadd %s499, 0
          %s505 = smul.addr %s38, 32
          %s506 = smul.addr %s505, 4
          %s507 = scalar_lea.hbm %s1, %s506
          %s508 = sshll.u32 %s507, 4
          %s509 = int_to_ptr.hbm [resolvable:$true] %s508
          %s510 = sshll.u32 %s502, 4
          %s511 = int_to_ptr.vmem [resolvable:$true] %s510
          %516 = dma.hbm_to_vmem [thread:$0]  %s509, 2048, %s511, %s499, 128, 128, 8
        $region64: #{tpu_custom_call.1} parent=55 // pred_fallthru
          _
        // Predicated region
        $region65: #{tpu_custom_call.1} parent=55 // pred_check
          %p517 = pneg %p124
        $region66: #{tpu_custom_call.1} parent=55 // pred_check_branch
          %519 = sbr.rel (%p517) target = $region68
        $region67: #{tpu_custom_call.1} parent=55 // pred_region
          %s520 = sand.u32 %s31, 1
          %s521 = scalar_lea.sflag [#allocation9], %s520
          %s522 = sand.u32 %s114, 1
          %s523 = smul.addr %s522, 128
          %s524 = scalar_lea.vmem [#allocation10], %s523
          %526 = vsyncadd %s521, 0
          %s527 = smul.addr %s38, 32
          %s528 = smul.addr %s527, 4
          %s529 = scalar_lea.hbm %s2, %s528
          %s530 = sshll.u32 %s529, 4
          %s531 = int_to_ptr.hbm [resolvable:$true] %s530
          %s532 = sshll.u32 %s524, 4
          %s533 = int_to_ptr.vmem [resolvable:$true] %s532
          %538 = dma.hbm_to_vmem [thread:$0]  %s531, 2048, %s533, %s521, 128, 128, 8
        $region68: #{tpu_custom_call.1} parent=55 // pred_fallthru
          _
      $region56: #{tpu_custom_call.1} parent=5 // pred_fallthru
        _
      %p539 = scmp.le.s32.totalorder 1, %s31
      %p540 = scmp.lt.s32.totalorder %s31, 3
      %p541 = pnand %p539, %p540
      %p542 = pneg %p541
      // Predicated region
      $region69: #{tpu_custom_call.1} parent=5 // pred_check
        _
      $region70: #{tpu_custom_call.1} parent=5 // pred_check_branch
        %544 = sbr.rel (%p541) target = $region72
      $region71: #{tpu_custom_call.1} parent=5 // pred_region
        %s545 = ssub.s32 %s31, 1
        %s546 = sand.u32 %s65, 1
        %s547 = scalar_lea.sflag [#allocation6], %s546
        %s548 = sand.u32 %s65, 1
        %s549 = smul.addr %s548, 512
        %s550 = scalar_lea.vmem [#allocation5], %s549
        // Predicated region
        $region73: #{tpu_custom_call.1} parent=71 // pred_check
          %p551 = pneg %p78
        $region74: #{tpu_custom_call.1} parent=71 // pred_check_branch
          %553 = sbr.rel (%p551) target = $region76
        $region75: #{tpu_custom_call.1} parent=71 // pred_region
          %555 = dma.done %s547, 8192
        $region76: #{tpu_custom_call.1} parent=71 // pred_fallthru
          _
        %s556 = sand.u32 %s36, 1
        %s557 = scalar_lea.sflag [#allocation9], %s556
        %s558 = sand.u32 %s91, 1
        %s559 = smul.addr %s558, 128
        %s560 = scalar_lea.vmem [#allocation8], %s559
        // Predicated region
        $region77: #{tpu_custom_call.1} parent=71 // pred_check
          %p561 = pneg %p104
        $region78: #{tpu_custom_call.1} parent=71 // pred_check_branch
          %563 = sbr.rel (%p561) target = $region80
        $region79: #{tpu_custom_call.1} parent=71 // pred_region
          %565 = dma.done %s557, 2048
        $region80: #{tpu_custom_call.1} parent=71 // pred_fallthru
          _
        %s566 = sand.u32 %s36, 1
        %s567 = scalar_lea.sflag [#allocation9], %s566
        %s568 = sand.u32 %s117, 1
        %s569 = smul.addr %s568, 128
        %s570 = scalar_lea.vmem [#allocation10], %s569
        // Predicated region
        $region81: #{tpu_custom_call.1} parent=71 // pred_check
          %p571 = pneg %p130
        $region82: #{tpu_custom_call.1} parent=71 // pred_check_branch
          %573 = sbr.rel (%p571) target = $region84
        $region83: #{tpu_custom_call.1} parent=71 // pred_region
          %575 = dma.done %s567, 2048
        $region84: #{tpu_custom_call.1} parent=71 // pred_fallthru
          _
        // Predicated region
        $region85: #{tpu_custom_call.1} parent=71 // pred_check
          %p576 = pneg %p151
        $region86: #{tpu_custom_call.1} parent=71 // pred_check_branch
          %578 = sbr.rel (%p576) target = $region88
        $region87: #{tpu_custom_call.1} parent=71 // pred_region
          %580 = dma.done [#allocation12], 4096
        $region88: #{tpu_custom_call.1} parent=71 // pred_fallthru
          _
        // Predicated region
        $region89: #{tpu_custom_call.1} parent=71 // pred_check
          %p581 = pneg %p193
        $region90: #{tpu_custom_call.1} parent=71 // pred_check_branch
          %583 = sbr.rel (%p581) target = $region92
        $region91: #{tpu_custom_call.1} parent=71 // pred_region
          %585 = dma.done [#allocation12], 4096
        $region92: #{tpu_custom_call.1} parent=71 // pred_fallthru
          _
        // Predicated region
        $region93: #{tpu_custom_call.1} parent=71 // pred_check
          %p586 = pneg %p235
        $region94: #{tpu_custom_call.1} parent=71 // pred_check_branch
          %588 = sbr.rel (%p586) target = $region96
        $region95: #{tpu_custom_call.1} parent=71 // pred_region
          %590 = dma.done [#allocation15], 4096
        $region96: #{tpu_custom_call.1} parent=71 // pred_fallthru
          _
        // Predicated region
        $region97: #{tpu_custom_call.1} parent=71 // pred_check
          %p591 = pneg %p277
        $region98: #{tpu_custom_call.1} parent=71 // pred_check_branch
          %593 = sbr.rel (%p591) target = $region100
        $region99: #{tpu_custom_call.1} parent=71 // pred_region
          %595 = dma.done [#allocation15], 4096
        $region100: #{tpu_custom_call.1} parent=71 // pred_fallthru
          _
        // Predicated region
        $region101: #{tpu_custom_call.1} parent=71 // pred_check
          %p596 = pneg %p340
        $region102: #{tpu_custom_call.1} parent=71 // pred_check_branch
          %598 = sbr.rel (%p596) target = $region104
        $region103: #{tpu_custom_call.1} parent=71 // pred_region
          %600 = dma.done [#allocation18], 32
        $region104: #{tpu_custom_call.1} parent=71 // pred_fallthru
          _
        %s601 = sand.u32 %s65, 1
        %s602 = scalar_lea.sflag [#allocation6], %s601
        %s603 = sand.u32 %s65, 1
        %s604 = smul.addr %s603, 512
        %s605 = scalar_lea.vmem [#allocation5], %s604
        %p606 = pneg %p78
        %p607 = pneg %p75
        %s608 = sand.u32 %s36, 1
        %s609 = scalar_lea.sflag [#allocation9], %s608
        %s610 = sand.u32 %s91, 1
        %s611 = smul.addr %s610, 128
        %s612 = scalar_lea.vmem [#allocation8], %s611
        %p613 = pneg %p104
        %p614 = pneg %p101
        %s615 = sand.u32 %s36, 1
        %s616 = scalar_lea.sflag [#allocation9], %s615
        %s617 = sand.u32 %s117, 1
        %s618 = smul.addr %s617, 128
        %s619 = scalar_lea.vmem [#allocation10], %s618
        %p620 = pneg %p130
        %p621 = pneg %p127
        %p622 = pneg %p151
        %p623 = pneg %p148
        %p624 = pneg %p172
        %p625 = pneg %p169
        %p626 = pneg %p193
        %p627 = pneg %p190
        %p628 = pneg %p214
        %p629 = pneg %p211
        %p630 = pneg %p235
        %p631 = pneg %p232
        %p632 = pneg %p256
        %p633 = pneg %p253
        %p634 = pneg %p277
        %p635 = pneg %p274
        %p636 = pneg %p298
        %p637 = pneg %p295
        %p638 = pneg %p319
        %p639 = pneg %p316
        %p640 = pneg %p340
        %p641 = pneg %p337
        %p642 = pneg %p368
        %p643 = pneg %p365
        %s644 = sand.u32 %s355, 1
        %s645 = scalar_lea.sflag [#allocation7], %s644
        %s646 = sand.u32 %s355, 1
        %s647 = smul.addr %s646, 512
        %s648 = scalar_lea.vmem [#allocation19], %s647
        %s649 = smul.u32 32, %s42
        %s650 = smul.u32 32, %s42
        %p651 = scmp.eq.s32.totalorder %s43, 0
        // Predicated region
        $region105: #{tpu_custom_call.1} parent=71 // pred_check
          %p652 = pneg %p651
        $region106: #{tpu_custom_call.1} parent=71 // pred_check_branch
          %654 = sbr.rel (%p652) target = $region108
        $region107: #{tpu_custom_call.1} parent=71 // pred_region
          %655 = vst [vmem:[#allocation2] sm:$0xff] 0.0
          %656 = vst [vmem:[#allocation2 + $0x8] sm:$0xff] 0.0
          %657 = vst [vmem:[#allocation2 + $0x10] sm:$0xff] 0.0
          %658 = vst [vmem:[#allocation2 + $0x18] sm:$0xff] 0.0
          %659 = vst [vmem:[#allocation2 + $0x20] sm:$0xff] 0.0
          %660 = vst [vmem:[#allocation2 + $0x28] sm:$0xff] 0.0
          %661 = vst [vmem:[#allocation2 + $0x30] sm:$0xff] 0.0
          %662 = vst [vmem:[#allocation2 + $0x38] sm:$0xff] 0.0
          %663 = vst [vmem:[#allocation2 + $0x40] sm:$0xff] 0.0
          %664 = vst [vmem:[#allocation2 + $0x48] sm:$0xff] 0.0
          %665 = vst [vmem:[#allocation2 + $0x50] sm:$0xff] 0.0
          %666 = vst [vmem:[#allocation2 + $0x58] sm:$0xff] 0.0
          %667 = vst [vmem:[#allocation2 + $0x60] sm:$0xff] 0.0
          %668 = vst [vmem:[#allocation2 + $0x68] sm:$0xff] 0.0
          %669 = vst [vmem:[#allocation2 + $0x70] sm:$0xff] 0.0
          %670 = vst [vmem:[#allocation2 + $0x78] sm:$0xff] 0.0
          %671 = vst [vmem:[#allocation2 + $0x80] sm:$0xff] 0.0
          %672 = vst [vmem:[#allocation2 + $0x88] sm:$0xff] 0.0
          %673 = vst [vmem:[#allocation2 + $0x90] sm:$0xff] 0.0
          %674 = vst [vmem:[#allocation2 + $0x98] sm:$0xff] 0.0
          %675 = vst [vmem:[#allocation2 + $0xa0] sm:$0xff] 0.0
          %676 = vst [vmem:[#allocation2 + $0xa8] sm:$0xff] 0.0
          %677 = vst [vmem:[#allocation2 + $0xb0] sm:$0xff] 0.0
          %678 = vst [vmem:[#allocation2 + $0xb8] sm:$0xff] 0.0
          %679 = vst [vmem:[#allocation2 + $0xc0] sm:$0xff] 0.0
          %680 = vst [vmem:[#allocation2 + $0xc8] sm:$0xff] 0.0
          %681 = vst [vmem:[#allocation2 + $0xd0] sm:$0xff] 0.0
          %682 = vst [vmem:[#allocation2 + $0xd8] sm:$0xff] 0.0
          %683 = vst [vmem:[#allocation2 + $0xe0] sm:$0xff] 0.0
          %684 = vst [vmem:[#allocation2 + $0xe8] sm:$0xff] 0.0
          %685 = vst [vmem:[#allocation2 + $0xf0] sm:$0xff] 0.0
          %686 = vst [vmem:[#allocation2 + $0xf8] sm:$0xff] 0.0
          %687 = vst [vmem:[#allocation2 + $0x100] sm:$0xff] 0.0
          %688 = vst [vmem:[#allocation2 + $0x108] sm:$0xff] 0.0
          %689 = vst [vmem:[#allocation2 + $0x110] sm:$0xff] 0.0
          %690 = vst [vmem:[#allocation2 + $0x118] sm:$0xff] 0.0
          %691 = vst [vmem:[#allocation2 + $0x120] sm:$0xff] 0.0
          %692 = vst [vmem:[#allocation2 + $0x128] sm:$0xff] 0.0
          %693 = vst [vmem:[#allocation2 + $0x130] sm:$0xff] 0.0
          %694 = vst [vmem:[#allocation2 + $0x138] sm:$0xff] 0.0
          %695 = vst [vmem:[#allocation2 + $0x140] sm:$0xff] 0.0
          %696 = vst [vmem:[#allocation2 + $0x148] sm:$0xff] 0.0
          %697 = vst [vmem:[#allocation2 + $0x150] sm:$0xff] 0.0
          %698 = vst [vmem:[#allocation2 + $0x158] sm:$0xff] 0.0
          %699 = vst [vmem:[#allocation2 + $0x160] sm:$0xff] 0.0
          %700 = vst [vmem:[#allocation2 + $0x168] sm:$0xff] 0.0
          %701 = vst [vmem:[#allocation2 + $0x170] sm:$0xff] 0.0
          %702 = vst [vmem:[#allocation2 + $0x178] sm:$0xff] 0.0
          %703 = vst [vmem:[#allocation2 + $0x180] sm:$0xff] 0.0
          %704 = vst [vmem:[#allocation2 + $0x188] sm:$0xff] 0.0
          %705 = vst [vmem:[#allocation2 + $0x190] sm:$0xff] 0.0
          %706 = vst [vmem:[#allocation2 + $0x198] sm:$0xff] 0.0
          %707 = vst [vmem:[#allocation2 + $0x1a0] sm:$0xff] 0.0
          %708 = vst [vmem:[#allocation2 + $0x1a8] sm:$0xff] 0.0
          %709 = vst [vmem:[#allocation2 + $0x1b0] sm:$0xff] 0.0
          %710 = vst [vmem:[#allocation2 + $0x1b8] sm:$0xff] 0.0
          %711 = vst [vmem:[#allocation2 + $0x1c0] sm:$0xff] 0.0
          %712 = vst [vmem:[#allocation2 + $0x1c8] sm:$0xff] 0.0
          %713 = vst [vmem:[#allocation2 + $0x1d0] sm:$0xff] 0.0
          %714 = vst [vmem:[#allocation2 + $0x1d8] sm:$0xff] 0.0
          %715 = vst [vmem:[#allocation2 + $0x1e0] sm:$0xff] 0.0
          %716 = vst [vmem:[#allocation2 + $0x1e8] sm:$0xff] 0.0
          %717 = vst [vmem:[#allocation2 + $0x1f0] sm:$0xff] 0.0
          %718 = vst [vmem:[#allocation2 + $0x1f8] sm:$0xff] 0.0
        $region108: #{tpu_custom_call.1} parent=71 // pred_fallthru
          _
        %p719 = scmp.eq.s32.totalorder %s42, 0
        // Predicated region
        $region109: #{tpu_custom_call.1} parent=71 // pred_check
          %p720 = pneg %p719
        $region110: #{tpu_custom_call.1} parent=71 // pred_check_branch
          %722 = sbr.rel (%p720) target = $region112
        $region111: #{tpu_custom_call.1} parent=71 // pred_region
          %v723 = vld [vmem:[%s560] sm:$0xff]
          %v724 = vld [vmem:[%s560 + $0x8] sm:$0xff]
          %v725 = vld [vmem:[%s560 + $0x10] sm:$0xff]
          %v726 = vld [vmem:[%s560 + $0x18] sm:$0xff]
          %v727 = vld [vmem:[%s560 + $0x20] sm:$0xff]
          %v728 = vld [vmem:[%s560 + $0x28] sm:$0xff]
          %v729 = vld [vmem:[%s560 + $0x30] sm:$0xff]
          %v730 = vld [vmem:[%s560 + $0x38] sm:$0xff]
          %v731 = vld [vmem:[%s560 + $0x40] sm:$0xff]
          %v732 = vld [vmem:[%s560 + $0x48] sm:$0xff]
          %v733 = vld [vmem:[%s560 + $0x50] sm:$0xff]
          %v734 = vld [vmem:[%s560 + $0x58] sm:$0xff]
          %v735 = vld [vmem:[%s560 + $0x60] sm:$0xff]
          %v736 = vld [vmem:[%s560 + $0x68] sm:$0xff]
          %v737 = vld [vmem:[%s560 + $0x70] sm:$0xff]
          %v738 = vld [vmem:[%s560 + $0x78] sm:$0xff]
          %v739 = vld [vmem:[%s570] sm:$0xff]
          %v740 = vld [vmem:[%s570 + $0x8] sm:$0xff]
          %v741 = vld [vmem:[%s570 + $0x10] sm:$0xff]
          %v742 = vld [vmem:[%s570 + $0x18] sm:$0xff]
          %v743 = vld [vmem:[%s570 + $0x20] sm:$0xff]
          %v744 = vld [vmem:[%s570 + $0x28] sm:$0xff]
          %v745 = vld [vmem:[%s570 + $0x30] sm:$0xff]
          %v746 = vld [vmem:[%s570 + $0x38] sm:$0xff]
          %v747 = vld [vmem:[%s570 + $0x40] sm:$0xff]
          %v748 = vld [vmem:[%s570 + $0x48] sm:$0xff]
          %v749 = vld [vmem:[%s570 + $0x50] sm:$0xff]
          %v750 = vld [vmem:[%s570 + $0x58] sm:$0xff]
          %v751 = vld [vmem:[%s570 + $0x60] sm:$0xff]
          %v752 = vld [vmem:[%s570 + $0x68] sm:$0xff]
          %v753 = vld [vmem:[%s570 + $0x70] sm:$0xff]
          %v754 = vld [vmem:[%s570 + $0x78] sm:$0xff]
          %s755 = smul.u32 %s43, 64
          %s756 = smul.addr %s755, 4
          %s757 = scalar_lea.vmem [#allocation13], %s756
          %v758 = vld [vmem:[%s757] sm:$0xff]
          %v759 = vld [vmem:[%s757 + $0x8] sm:$0xff]
          %v760 = vld [vmem:[%s757 + $0x10] sm:$0xff]
          %v761 = vld [vmem:[%s757 + $0x18] sm:$0xff]
          %v762 = vld [vmem:[%s757 + $0x20] sm:$0xff]
          %v763 = vld [vmem:[%s757 + $0x28] sm:$0xff]
          %v764 = vld [vmem:[%s757 + $0x30] sm:$0xff]
          %v765 = vld [vmem:[%s757 + $0x38] sm:$0xff]
          %v766 = vld [vmem:[%s757 + $0x40] sm:$0xff]
          %v767 = vld [vmem:[%s757 + $0x48] sm:$0xff]
          %v768 = vld [vmem:[%s757 + $0x50] sm:$0xff]
          %v769 = vld [vmem:[%s757 + $0x58] sm:$0xff]
          %v770 = vld [vmem:[%s757 + $0x60] sm:$0xff]
          %v771 = vld [vmem:[%s757 + $0x68] sm:$0xff]
          %v772 = vld [vmem:[%s757 + $0x70] sm:$0xff]
          %v773 = vld [vmem:[%s757 + $0x78] sm:$0xff]
          %v774 = vld [vmem:[%s757 + $0x80] sm:$0xff]
          %v775 = vld [vmem:[%s757 + $0x88] sm:$0xff]
          %v776 = vld [vmem:[%s757 + $0x90] sm:$0xff]
          %v777 = vld [vmem:[%s757 + $0x98] sm:$0xff]
          %v778 = vld [vmem:[%s757 + $0xa0] sm:$0xff]
          %v779 = vld [vmem:[%s757 + $0xa8] sm:$0xff]
          %v780 = vld [vmem:[%s757 + $0xb0] sm:$0xff]
          %v781 = vld [vmem:[%s757 + $0xb8] sm:$0xff]
          %v782 = vld [vmem:[%s757 + $0xc0] sm:$0xff]
          %v783 = vld [vmem:[%s757 + $0xc8] sm:$0xff]
          %v784 = vld [vmem:[%s757 + $0xd0] sm:$0xff]
          %v785 = vld [vmem:[%s757 + $0xd8] sm:$0xff]
          %v786 = vld [vmem:[%s757 + $0xe0] sm:$0xff]
          %v787 = vld [vmem:[%s757 + $0xe8] sm:$0xff]
          %v788 = vld [vmem:[%s757 + $0xf0] sm:$0xff]
          %v789 = vld [vmem:[%s757 + $0xf8] sm:$0xff]
          %s790 = smul.u32 %s43, 2
          %s791 = scalar_lea.vmem %s6, %s790
          %v792 = vld [vmem:[%s791] sm:$0x3]
          %v794 = vperm.slane %v792, 0
          %v795 = vperm.slane %v792, 1
          %v814 = vunpack.c.l.b16 %v723
          %v815 = vunpack.c.h.b16 %v723
          %v816 = vunpack.c.l.b16 %v724
          %v817 = vunpack.c.h.b16 %v724
          %v818 = vunpack.c.l.b16 %v725
          %v819 = vunpack.c.h.b16 %v725
          %v820 = vunpack.c.l.b16 %v726
          %v821 = vunpack.c.h.b16 %v726
          %v822 = vunpack.c.l.b16 %v727
          %v823 = vunpack.c.h.b16 %v727
          %v824 = vunpack.c.l.b16 %v728
          %v825 = vunpack.c.h.b16 %v728
          %v826 = vunpack.c.l.b16 %v729
          %v827 = vunpack.c.h.b16 %v729
          %v828 = vunpack.c.l.b16 %v730
          %v829 = vunpack.c.h.b16 %v730
          %v830 = vunpack.c.l.b16 %v731
          %v831 = vunpack.c.h.b16 %v731
          %v832 = vunpack.c.l.b16 %v732
          %v833 = vunpack.c.h.b16 %v732
          %v834 = vunpack.c.l.b16 %v733
          %v835 = vunpack.c.h.b16 %v733
          %v836 = vunpack.c.l.b16 %v734
          %v837 = vunpack.c.h.b16 %v734
          %v838 = vunpack.c.l.b16 %v735
          %v839 = vunpack.c.h.b16 %v735
          %v840 = vunpack.c.l.b16 %v736
          %v841 = vunpack.c.h.b16 %v736
          %v842 = vunpack.c.l.b16 %v737
          %v843 = vunpack.c.h.b16 %v737
          %v844 = vunpack.c.l.b16 %v738
          %v845 = vunpack.c.h.b16 %v738
          %v846 = vpack.c.b16 %v816, %v814
          %v847 = vpack.c.b16 %v817, %v815
          %v848 = vpack.c.b16 %v820, %v818
          %v849 = vpack.c.b16 %v821, %v819
          %v850 = vpack.c.b16 %v824, %v822
          %v851 = vpack.c.b16 %v825, %v823
          %v852 = vpack.c.b16 %v828, %v826
          %v853 = vpack.c.b16 %v829, %v827
          %v854 = vpack.c.b16 %v832, %v830
          %v855 = vpack.c.b16 %v833, %v831
          %v856 = vpack.c.b16 %v836, %v834
          %v857 = vpack.c.b16 %v837, %v835
          %v858 = vpack.c.b16 %v840, %v838
          %v859 = vpack.c.b16 %v841, %v839
          %v860 = vpack.c.b16 %v844, %v842
          %v861 = vpack.c.b16 %v845, %v843
          %v910 = vunpack.c.l.b16 %v758
          %v911 = vunpack.c.h.b16 %v758
          %v912 = vunpack.c.l.b16 %v759
          %v913 = vunpack.c.h.b16 %v759
          %v914 = vunpack.c.l.b16 %v760
          %v915 = vunpack.c.h.b16 %v760
          %v916 = vunpack.c.l.b16 %v761
          %v917 = vunpack.c.h.b16 %v761
          %v918 = vunpack.c.l.b16 %v762
          %v919 = vunpack.c.h.b16 %v762
          %v920 = vunpack.c.l.b16 %v763
          %v921 = vunpack.c.h.b16 %v763
          %v922 = vunpack.c.l.b16 %v764
          %v923 = vunpack.c.h.b16 %v764
          %v924 = vunpack.c.l.b16 %v765
          %v925 = vunpack.c.h.b16 %v765
          %v926 = vunpack.c.l.b16 %v766
          %v927 = vunpack.c.h.b16 %v766
          %v928 = vunpack.c.l.b16 %v767
          %v929 = vunpack.c.h.b16 %v767
          %v930 = vunpack.c.l.b16 %v768
          %v931 = vunpack.c.h.b16 %v768
          %v932 = vunpack.c.l.b16 %v769
          %v933 = vunpack.c.h.b16 %v769
          %v934 = vunpack.c.l.b16 %v770
          %v935 = vunpack.c.h.b16 %v770
          %v936 = vunpack.c.l.b16 %v771
          %v937 = vunpack.c.h.b16 %v771
          %v938 = vunpack.c.l.b16 %v772
          %v939 = vunpack.c.h.b16 %v772
          %v940 = vunpack.c.l.b16 %v773
          %v941 = vunpack.c.h.b16 %v773
          %v942 = vunpack.c.l.b16 %v774
          %v943 = vunpack.c.h.b16 %v774
          %v944 = vunpack.c.l.b16 %v775
          %v945 = vunpack.c.h.b16 %v775
          %v946 = vunpack.c.l.b16 %v776
          %v947 = vunpack.c.h.b16 %v776
          %v948 = vunpack.c.l.b16 %v777
          %v949 = vunpack.c.h.b16 %v777
          %v950 = vunpack.c.l.b16 %v778
          %v951 = vunpack.c.h.b16 %v778
          %v952 = vunpack.c.l.b16 %v779
          %v953 = vunpack.c.h.b16 %v779
          %v954 = vunpack.c.l.b16 %v780
          %v955 = vunpack.c.h.b16 %v780
          %v956 = vunpack.c.l.b16 %v781
          %v957 = vunpack.c.h.b16 %v781
          %v958 = vunpack.c.l.b16 %v782
          %v959 = vunpack.c.h.b16 %v782
          %v960 = vunpack.c.l.b16 %v783
          %v961 = vunpack.c.h.b16 %v783
          %v962 = vunpack.c.l.b16 %v784
          %v963 = vunpack.c.h.b16 %v784
          %v964 = vunpack.c.l.b16 %v785
          %v965 = vunpack.c.h.b16 %v785
          %v966 = vunpack.c.l.b16 %v786
          %v967 = vunpack.c.h.b16 %v786
          %v968 = vunpack.c.l.b16 %v787
          %v969 = vunpack.c.h.b16 %v787
          %v970 = vunpack.c.l.b16 %v788
          %v971 = vunpack.c.h.b16 %v788
          %v972 = vunpack.c.l.b16 %v789
          %v973 = vunpack.c.h.b16 %v789
          %v974 = vpack.c.b16 %v912, %v910
          %v975 = vpack.c.b16 %v913, %v911
          %v976 = vpack.c.b16 %v916, %v914
          %v977 = vpack.c.b16 %v917, %v915
          %v978 = vpack.c.b16 %v920, %v918
          %v979 = vpack.c.b16 %v921, %v919
          %v980 = vpack.c.b16 %v924, %v922
          %v981 = vpack.c.b16 %v925, %v923
          %v982 = vpack.c.b16 %v928, %v926
          %v983 = vpack.c.b16 %v929, %v927
          %v984 = vpack.c.b16 %v932, %v930
          %v985 = vpack.c.b16 %v933, %v931
          %v986 = vpack.c.b16 %v936, %v934
          %v987 = vpack.c.b16 %v937, %v935
          %v988 = vpack.c.b16 %v940, %v938
          %v989 = vpack.c.b16 %v941, %v939
          %v990 = vpack.c.b16 %v944, %v942
          %v991 = vpack.c.b16 %v945, %v943
          %v992 = vpack.c.b16 %v948, %v946
          %v993 = vpack.c.b16 %v949, %v947
          %v994 = vpack.c.b16 %v952, %v950
          %v995 = vpack.c.b16 %v953, %v951
          %v996 = vpack.c.b16 %v956, %v954
          %v997 = vpack.c.b16 %v957, %v955
          %v998 = vpack.c.b16 %v960, %v958
          %v999 = vpack.c.b16 %v961, %v959
          %v1000 = vpack.c.b16 %v964, %v962
          %v1001 = vpack.c.b16 %v965, %v963
          %v1002 = vpack.c.b16 %v968, %v966
          %v1003 = vpack.c.b16 %v969, %v967
          %v1004 = vpack.c.b16 %v972, %v970
          %v1005 = vpack.c.b16 %v973, %v971
          %1038 = vmatpush.bf16.msra.mxu0 %v988
          %1039 = vmatpush.bf16.msra.mxu0 %v986
          %1040 = vmatpush.bf16.msra.mxu0 %v984
          %1041 = vmatpush.bf16.msra.mxu0 %v982
          %1042 = vmatpush.bf16.msra.mxu0 %v980
          %1043 = vmatpush.bf16.msra.mxu0 %v978
          %1044 = vmatpush.bf16.msra.mxu0 %v976
          %1045 = vmatpush.bf16.msra.mxu0 %v974
          %1046 = vmatmul.bf16.gmra.mxu0 %v846
          %v1047 = vpop.f32.mrf.mxu0
          %v1048 = vadd.f32 %v794, %v1047
          %v1049 = vpop.f32.mrf.mxu0
          %v1050 = vadd.f32 %v794, %v1049
          %1051 = vmatmul.bf16.gmra.mxu0 %v848
          %v1052 = vpop.f32.mrf.mxu0
          %v1053 = vadd.f32 %v794, %v1052
          %v1054 = vpop.f32.mrf.mxu0
          %v1055 = vadd.f32 %v794, %v1054
          %1056 = vmatmul.bf16.gmra.mxu0 %v850
          %v1057 = vpop.f32.mrf.mxu0
          %v1058 = vadd.f32 %v794, %v1057
          %v1059 = vpop.f32.mrf.mxu0
          %v1060 = vadd.f32 %v794, %v1059
          %1061 = vmatmul.bf16.gmra.mxu0 %v852
          %v1062 = vpop.f32.mrf.mxu0
          %v1063 = vadd.f32 %v794, %v1062
          %v1064 = vpop.f32.mrf.mxu0
          %v1065 = vadd.f32 %v794, %v1064
          %1066 = vmatmul.bf16.gmra.mxu0 %v854
          %v1067 = vpop.f32.mrf.mxu0
          %v1068 = vadd.f32 %v794, %v1067
          %v1069 = vpop.f32.mrf.mxu0
          %v1070 = vadd.f32 %v794, %v1069
          %1071 = vmatmul.bf16.gmra.mxu0 %v856
          %v1072 = vpop.f32.mrf.mxu0
          %v1073 = vadd.f32 %v794, %v1072
          %v1074 = vpop.f32.mrf.mxu0
          %v1075 = vadd.f32 %v794, %v1074
          %1076 = vmatmul.bf16.gmra.mxu0 %v858
          %v1077 = vpop.f32.mrf.mxu0
          %v1078 = vadd.f32 %v794, %v1077
          %v1079 = vpop.f32.mrf.mxu0
          %v1080 = vadd.f32 %v794, %v1079
          %1081 = vmatmul.bf16.gmra.mxu0 %v860
          %v1082 = vpop.f32.mrf.mxu0
          %v1083 = vadd.f32 %v794, %v1082
          %v1084 = vpop.f32.mrf.mxu0
          %v1085 = vadd.f32 %v794, %v1084
          %1086 = vdwg.mxu0
          %1087 = vmatpush.bf16.msra.mxu0 %v1004
          %1088 = vmatpush.bf16.msra.mxu0 %v1002
          %1089 = vmatpush.bf16.msra.mxu0 %v1000
          %1090 = vmatpush.bf16.msra.mxu0 %v998
          %1091 = vmatpush.bf16.msra.mxu0 %v996
          %1092 = vmatpush.bf16.msra.mxu0 %v994
          %1093 = vmatpush.bf16.msra.mxu0 %v992
          %1094 = vmatpush.bf16.msra.mxu0 %v990
          %1095 = vmatmul.bf16.gmra.mxu0 %v847
          %v1096 = vpop.f32.mrf.mxu0
          %v1097 = vadd.f32 %v1048, %v1096
          %v1098 = vpop.f32.mrf.mxu0
          %v1099 = vadd.f32 %v1050, %v1098
          %1100 = vmatmul.bf16.gmra.mxu0 %v849
          %v1101 = vpop.f32.mrf.mxu0
          %v1102 = vadd.f32 %v1053, %v1101
          %v1103 = vpop.f32.mrf.mxu0
          %v1104 = vadd.f32 %v1055, %v1103
          %1105 = vmatmul.bf16.gmra.mxu0 %v851
          %v1106 = vpop.f32.mrf.mxu0
          %v1107 = vadd.f32 %v1058, %v1106
          %v1108 = vpop.f32.mrf.mxu0
          %v1109 = vadd.f32 %v1060, %v1108
          %1110 = vmatmul.bf16.gmra.mxu0 %v853
          %v1111 = vpop.f32.mrf.mxu0
          %v1112 = vadd.f32 %v1063, %v1111
          %v1113 = vpop.f32.mrf.mxu0
          %v1114 = vadd.f32 %v1065, %v1113
          %1115 = vmatmul.bf16.gmra.mxu0 %v855
          %v1116 = vpop.f32.mrf.mxu0
          %v1117 = vadd.f32 %v1068, %v1116
          %v1118 = vpop.f32.mrf.mxu0
          %v1119 = vadd.f32 %v1070, %v1118
          %1120 = vmatmul.bf16.gmra.mxu0 %v857
          %v1121 = vpop.f32.mrf.mxu0
          %v1122 = vadd.f32 %v1073, %v1121
          %v1123 = vpop.f32.mrf.mxu0
          %v1124 = vadd.f32 %v1075, %v1123
          %1125 = vmatmul.bf16.gmra.mxu0 %v859
          %v1126 = vpop.f32.mrf.mxu0
          %v1127 = vadd.f32 %v1078, %v1126
          %v1128 = vpop.f32.mrf.mxu0
          %v1129 = vadd.f32 %v1080, %v1128
          %1130 = vmatmul.bf16.gmra.mxu0 %v861
          %v1131 = vpop.f32.mrf.mxu0
          %v1132 = vadd.f32 %v1083, %v1131
          %v1133 = vpop.f32.mrf.mxu0
          %v1134 = vadd.f32 %v1085, %v1133
          %1135 = vdwg.mxu0
          %1136 = vmatpush.bf16.msra.mxu0 %v989
          %1137 = vmatpush.bf16.msra.mxu0 %v987
          %1138 = vmatpush.bf16.msra.mxu0 %v985
          %1139 = vmatpush.bf16.msra.mxu0 %v983
          %1140 = vmatpush.bf16.msra.mxu0 %v981
          %1141 = vmatpush.bf16.msra.mxu0 %v979
          %1142 = vmatpush.bf16.msra.mxu0 %v977
          %1143 = vmatpush.bf16.msra.mxu0 %v975
          %1144 = vmatmul.bf16.gmra.mxu0 %v846
          %v1145 = vpop.f32.mrf.mxu0
          %v1146 = vadd.f32 %v795, %v1145
          %v1147 = vpop.f32.mrf.mxu0
          %v1148 = vadd.f32 %v795, %v1147
          %1149 = vmatmul.bf16.gmra.mxu0 %v848
          %v1150 = vpop.f32.mrf.mxu0
          %v1151 = vadd.f32 %v795, %v1150
          %v1152 = vpop.f32.mrf.mxu0
          %v1153 = vadd.f32 %v795, %v1152
          %1154 = vmatmul.bf16.gmra.mxu0 %v850
          %v1155 = vpop.f32.mrf.mxu0
          %v1156 = vadd.f32 %v795, %v1155
          %v1157 = vpop.f32.mrf.mxu0
          %v1158 = vadd.f32 %v795, %v1157
          %1159 = vmatmul.bf16.gmra.mxu0 %v852
          %v1160 = vpop.f32.mrf.mxu0
          %v1161 = vadd.f32 %v795, %v1160
          %v1162 = vpop.f32.mrf.mxu0
          %v1163 = vadd.f32 %v795, %v1162
          %1164 = vmatmul.bf16.gmra.mxu0 %v854
          %v1165 = vpop.f32.mrf.mxu0
          %v1166 = vadd.f32 %v795, %v1165
          %v1167 = vpop.f32.mrf.mxu0
          %v1168 = vadd.f32 %v795, %v1167
          %1169 = vmatmul.bf16.gmra.mxu0 %v856
          %v1170 = vpop.f32.mrf.mxu0
          %v1171 = vadd.f32 %v795, %v1170
          %v1172 = vpop.f32.mrf.mxu0
          %v1173 = vadd.f32 %v795, %v1172
          %1174 = vmatmul.bf16.gmra.mxu0 %v858
          %v1175 = vpop.f32.mrf.mxu0
          %v1176 = vadd.f32 %v795, %v1175
          %v1177 = vpop.f32.mrf.mxu0
          %v1178 = vadd.f32 %v795, %v1177
          %1179 = vmatmul.bf16.gmra.mxu0 %v860
          %v1180 = vpop.f32.mrf.mxu0
          %v1181 = vadd.f32 %v795, %v1180
          %v1182 = vpop.f32.mrf.mxu0
          %v1183 = vadd.f32 %v795, %v1182
          %1184 = vdwg.mxu0
          %1185 = vmatpush.bf16.msra.mxu0 %v1005
          %1186 = vmatpush.bf16.msra.mxu0 %v1003
          %1187 = vmatpush.bf16.msra.mxu0 %v1001
          %1188 = vmatpush.bf16.msra.mxu0 %v999
          %1189 = vmatpush.bf16.msra.mxu0 %v997
          %1190 = vmatpush.bf16.msra.mxu0 %v995
          %1191 = vmatpush.bf16.msra.mxu0 %v993
          %1192 = vmatpush.bf16.msra.mxu0 %v991
          %1193 = vmatmul.bf16.gmra.mxu0 %v847
          %v1194 = vpop.f32.mrf.mxu0
          %v1195 = vadd.f32 %v1146, %v1194
          %v1196 = vpop.f32.mrf.mxu0
          %v1197 = vadd.f32 %v1148, %v1196
          %1198 = vmatmul.bf16.gmra.mxu0 %v849
          %v1199 = vpop.f32.mrf.mxu0
          %v1200 = vadd.f32 %v1151, %v1199
          %v1201 = vpop.f32.mrf.mxu0
          %v1202 = vadd.f32 %v1153, %v1201
          %1203 = vmatmul.bf16.gmra.mxu0 %v851
          %v1204 = vpop.f32.mrf.mxu0
          %v1205 = vadd.f32 %v1156, %v1204
          %v1206 = vpop.f32.mrf.mxu0
          %v1207 = vadd.f32 %v1158, %v1206
          %1208 = vmatmul.bf16.gmra.mxu0 %v853
          %v1209 = vpop.f32.mrf.mxu0
          %v1210 = vadd.f32 %v1161, %v1209
          %v1211 = vpop.f32.mrf.mxu0
          %v1212 = vadd.f32 %v1163, %v1211
          %1213 = vmatmul.bf16.gmra.mxu0 %v855
          %v1214 = vpop.f32.mrf.mxu0
          %v1215 = vadd.f32 %v1166, %v1214
          %v1216 = vpop.f32.mrf.mxu0
          %v1217 = vadd.f32 %v1168, %v1216
          %1218 = vmatmul.bf16.gmra.mxu0 %v857
          %v1219 = vpop.f32.mrf.mxu0
          %v1220 = vadd.f32 %v1171, %v1219
          %v1221 = vpop.f32.mrf.mxu0
          %v1222 = vadd.f32 %v1173, %v1221
          %1223 = vmatmul.bf16.gmra.mxu0 %v859
          %v1224 = vpop.f32.mrf.mxu0
          %v1225 = vadd.f32 %v1176, %v1224
          %v1226 = vpop.f32.mrf.mxu0
          %v1227 = vadd.f32 %v1178, %v1226
          %1228 = vmatmul.bf16.gmra.mxu0 %v861
          %v1229 = vpop.f32.mrf.mxu0
          %v1230 = vadd.f32 %v1181, %v1229
          %v1231 = vpop.f32.mrf.mxu0
          %v1232 = vadd.f32 %v1183, %v1231
          %1233 = vdwg.mxu0
          %s1234 = smul.addr %s755, 4
          %s1235 = scalar_lea.vmem [#allocation14], %s1234
          %v1236 = vld [vmem:[%s1235] sm:$0xff]
          %v1237 = vld [vmem:[%s1235 + $0x8] sm:$0xff]
          %v1238 = vld [vmem:[%s1235 + $0x10] sm:$0xff]
          %v1239 = vld [vmem:[%s1235 + $0x18] sm:$0xff]
          %v1240 = vld [vmem:[%s1235 + $0x20] sm:$0xff]
          %v1241 = vld [vmem:[%s1235 + $0x28] sm:$0xff]
          %v1242 = vld [vmem:[%s1235 + $0x30] sm:$0xff]
          %v1243 = vld [vmem:[%s1235 + $0x38] sm:$0xff]
          %v1244 = vld [vmem:[%s1235 + $0x40] sm:$0xff]
          %v1245 = vld [vmem:[%s1235 + $0x48] sm:$0xff]
          %v1246 = vld [vmem:[%s1235 + $0x50] sm:$0xff]
          %v1247 = vld [vmem:[%s1235 + $0x58] sm:$0xff]
          %v1248 = vld [vmem:[%s1235 + $0x60] sm:$0xff]
          %v1249 = vld [vmem:[%s1235 + $0x68] sm:$0xff]
          %v1250 = vld [vmem:[%s1235 + $0x70] sm:$0xff]
          %v1251 = vld [vmem:[%s1235 + $0x78] sm:$0xff]
          %v1252 = vld [vmem:[%s1235 + $0x80] sm:$0xff]
          %v1253 = vld [vmem:[%s1235 + $0x88] sm:$0xff]
          %v1254 = vld [vmem:[%s1235 + $0x90] sm:$0xff]
          %v1255 = vld [vmem:[%s1235 + $0x98] sm:$0xff]
          %v1256 = vld [vmem:[%s1235 + $0xa0] sm:$0xff]
          %v1257 = vld [vmem:[%s1235 + $0xa8] sm:$0xff]
          %v1258 = vld [vmem:[%s1235 + $0xb0] sm:$0xff]
          %v1259 = vld [vmem:[%s1235 + $0xb8] sm:$0xff]
          %v1260 = vld [vmem:[%s1235 + $0xc0] sm:$0xff]
          %v1261 = vld [vmem:[%s1235 + $0xc8] sm:$0xff]
          %v1262 = vld [vmem:[%s1235 + $0xd0] sm:$0xff]
          %v1263 = vld [vmem:[%s1235 + $0xd8] sm:$0xff]
          %v1264 = vld [vmem:[%s1235 + $0xe0] sm:$0xff]
          %v1265 = vld [vmem:[%s1235 + $0xe8] sm:$0xff]
          %v1266 = vld [vmem:[%s1235 + $0xf0] sm:$0xff]
          %v1267 = vld [vmem:[%s1235 + $0xf8] sm:$0xff]
          %s1268 = scalar_lea.vmem %s8, %s790
          %v1269 = vld [vmem:[%s1268] sm:$0x3]
          %v1271 = vperm.slane %v1269, 0
          %v1272 = vperm.slane %v1269, 1
          %v1291 = vunpack.c.l.b16 %v739
          %v1292 = vunpack.c.h.b16 %v739
          %v1293 = vunpack.c.l.b16 %v740
          %v1294 = vunpack.c.h.b16 %v740
          %v1295 = vunpack.c.l.b16 %v741
          %v1296 = vunpack.c.h.b16 %v741
          %v1297 = vunpack.c.l.b16 %v742
          %v1298 = vunpack.c.h.b16 %v742
          %v1299 = vunpack.c.l.b16 %v743
          %v1300 = vunpack.c.h.b16 %v743
          %v1301 = vunpack.c.l.b16 %v744
          %v1302 = vunpack.c.h.b16 %v744
          %v1303 = vunpack.c.l.b16 %v745
          %v1304 = vunpack.c.h.b16 %v745
          %v1305 = vunpack.c.l.b16 %v746
          %v1306 = vunpack.c.h.b16 %v746
          %v1307 = vunpack.c.l.b16 %v747
          %v1308 = vunpack.c.h.b16 %v747
          %v1309 = vunpack.c.l.b16 %v748
          %v1310 = vunpack.c.h.b16 %v748
          %v1311 = vunpack.c.l.b16 %v749
          %v1312 = vunpack.c.h.b16 %v749
          %v1313 = vunpack.c.l.b16 %v750
          %v1314 = vunpack.c.h.b16 %v750
          %v1315 = vunpack.c.l.b16 %v751
          %v1316 = vunpack.c.h.b16 %v751
          %v1317 = vunpack.c.l.b16 %v752
          %v1318 = vunpack.c.h.b16 %v752
          %v1319 = vunpack.c.l.b16 %v753
          %v1320 = vunpack.c.h.b16 %v753
          %v1321 = vunpack.c.l.b16 %v754
          %v1322 = vunpack.c.h.b16 %v754
          %v1323 = vpack.c.b16 %v1293, %v1291
          %v1324 = vpack.c.b16 %v1294, %v1292
          %v1325 = vpack.c.b16 %v1297, %v1295
          %v1326 = vpack.c.b16 %v1298, %v1296
          %v1327 = vpack.c.b16 %v1301, %v1299
          %v1328 = vpack.c.b16 %v1302, %v1300
          %v1329 = vpack.c.b16 %v1305, %v1303
          %v1330 = vpack.c.b16 %v1306, %v1304
          %v1331 = vpack.c.b16 %v1309, %v1307
          %v1332 = vpack.c.b16 %v1310, %v1308
          %v1333 = vpack.c.b16 %v1313, %v1311
          %v1334 = vpack.c.b16 %v1314, %v1312
          %v1335 = vpack.c.b16 %v1317, %v1315
          %v1336 = vpack.c.b16 %v1318, %v1316
          %v1337 = vpack.c.b16 %v1321, %v1319
          %v1338 = vpack.c.b16 %v1322, %v1320
          %v1387 = vunpack.c.l.b16 %v1236
          %v1388 = vunpack.c.h.b16 %v1236
          %v1389 = vunpack.c.l.b16 %v1237
          %v1390 = vunpack.c.h.b16 %v1237
          %v1391 = vunpack.c.l.b16 %v1238
          %v1392 = vunpack.c.h.b16 %v1238
          %v1393 = vunpack.c.l.b16 %v1239
          %v1394 = vunpack.c.h.b16 %v1239
          %v1395 = vunpack.c.l.b16 %v1240
          %v1396 = vunpack.c.h.b16 %v1240
          %v1397 = vunpack.c.l.b16 %v1241
          %v1398 = vunpack.c.h.b16 %v1241
          %v1399 = vunpack.c.l.b16 %v1242
          %v1400 = vunpack.c.h.b16 %v1242
          %v1401 = vunpack.c.l.b16 %v1243
          %v1402 = vunpack.c.h.b16 %v1243
          %v1403 = vunpack.c.l.b16 %v1244
          %v1404 = vunpack.c.h.b16 %v1244
          %v1405 = vunpack.c.l.b16 %v1245
          %v1406 = vunpack.c.h.b16 %v1245
          %v1407 = vunpack.c.l.b16 %v1246
          %v1408 = vunpack.c.h.b16 %v1246
          %v1409 = vunpack.c.l.b16 %v1247
          %v1410 = vunpack.c.h.b16 %v1247
          %v1411 = vunpack.c.l.b16 %v1248
          %v1412 = vunpack.c.h.b16 %v1248
          %v1413 = vunpack.c.l.b16 %v1249
          %v1414 = vunpack.c.h.b16 %v1249
          %v1415 = vunpack.c.l.b16 %v1250
          %v1416 = vunpack.c.h.b16 %v1250
          %v1417 = vunpack.c.l.b16 %v1251
          %v1418 = vunpack.c.h.b16 %v1251
          %v1419 = vunpack.c.l.b16 %v1252
          %v1420 = vunpack.c.h.b16 %v1252
          %v1421 = vunpack.c.l.b16 %v1253
          %v1422 = vunpack.c.h.b16 %v1253
          %v1423 = vunpack.c.l.b16 %v1254
          %v1424 = vunpack.c.h.b16 %v1254
          %v1425 = vunpack.c.l.b16 %v1255
          %v1426 = vunpack.c.h.b16 %v1255
          %v1427 = vunpack.c.l.b16 %v1256
          %v1428 = vunpack.c.h.b16 %v1256
          %v1429 = vunpack.c.l.b16 %v1257
          %v1430 = vunpack.c.h.b16 %v1257
          %v1431 = vunpack.c.l.b16 %v1258
          %v1432 = vunpack.c.h.b16 %v1258
          %v1433 = vunpack.c.l.b16 %v1259
          %v1434 = vunpack.c.h.b16 %v1259
          %v1435 = vunpack.c.l.b16 %v1260
          %v1436 = vunpack.c.h.b16 %v1260
          %v1437 = vunpack.c.l.b16 %v1261
          %v1438 = vunpack.c.h.b16 %v1261
          %v1439 = vunpack.c.l.b16 %v1262
          %v1440 = vunpack.c.h.b16 %v1262
          %v1441 = vunpack.c.l.b16 %v1263
          %v1442 = vunpack.c.h.b16 %v1263
          %v1443 = vunpack.c.l.b16 %v1264
          %v1444 = vunpack.c.h.b16 %v1264
          %v1445 = vunpack.c.l.b16 %v1265
          %v1446 = vunpack.c.h.b16 %v1265
          %v1447 = vunpack.c.l.b16 %v1266
          %v1448 = vunpack.c.h.b16 %v1266
          %v1449 = vunpack.c.l.b16 %v1267
          %v1450 = vunpack.c.h.b16 %v1267
          %v1451 = vpack.c.b16 %v1389, %v1387
          %v1452 = vpack.c.b16 %v1390, %v1388
          %v1453 = vpack.c.b16 %v1393, %v1391
          %v1454 = vpack.c.b16 %v1394, %v1392
          %v1455 = vpack.c.b16 %v1397, %v1395
          %v1456 = vpack.c.b16 %v1398, %v1396
          %v1457 = vpack.c.b16 %v1401, %v1399
          %v1458 = vpack.c.b16 %v1402, %v1400
          %v1459 = vpack.c.b16 %v1405, %v1403
          %v1460 = vpack.c.b16 %v1406, %v1404
          %v1461 = vpack.c.b16 %v1409, %v1407
          %v1462 = vpack.c.b16 %v1410, %v1408
          %v1463 = vpack.c.b16 %v1413, %v1411
          %v1464 = vpack.c.b16 %v1414, %v1412
          %v1465 = vpack.c.b16 %v1417, %v1415
          %v1466 = vpack.c.b16 %v1418, %v1416
          %v1467 = vpack.c.b16 %v1421, %v1419
          %v1468 = vpack.c.b16 %v1422, %v1420
          %v1469 = vpack.c.b16 %v1425, %v1423
          %v1470 = vpack.c.b16 %v1426, %v1424
          %v1471 = vpack.c.b16 %v1429, %v1427
          %v1472 = vpack.c.b16 %v1430, %v1428
          %v1473 = vpack.c.b16 %v1433, %v1431
          %v1474 = vpack.c.b16 %v1434, %v1432
          %v1475 = vpack.c.b16 %v1437, %v1435
          %v1476 = vpack.c.b16 %v1438, %v1436
          %v1477 = vpack.c.b16 %v1441, %v1439
          %v1478 = vpack.c.b16 %v1442, %v1440
          %v1479 = vpack.c.b16 %v1445, %v1443
          %v1480 = vpack.c.b16 %v1446, %v1444
          %v1481 = vpack.c.b16 %v1449, %v1447
          %v1482 = vpack.c.b16 %v1450, %v1448
          %1515 = vmatpush.bf16.msra.mxu0 %v1465
          %1516 = vmatpush.bf16.msra.mxu0 %v1463
          %1517 = vmatpush.bf16.msra.mxu0 %v1461
          %1518 = vmatpush.bf16.msra.mxu0 %v1459
          %1519 = vmatpush.bf16.msra.mxu0 %v1457
          %1520 = vmatpush.bf16.msra.mxu0 %v1455
          %1521 = vmatpush.bf16.msra.mxu0 %v1453
          %1522 = vmatpush.bf16.msra.mxu0 %v1451
          %1523 = vmatmul.bf16.gmra.mxu0 %v1323
          %v1524 = vpop.f32.mrf.mxu0
          %v1525 = vadd.f32 %v1271, %v1524
          %v1526 = vpop.f32.mrf.mxu0
          %v1527 = vadd.f32 %v1271, %v1526
          %1528 = vmatmul.bf16.gmra.mxu0 %v1325
          %v1529 = vpop.f32.mrf.mxu0
          %v1530 = vadd.f32 %v1271, %v1529
          %v1531 = vpop.f32.mrf.mxu0
          %v1532 = vadd.f32 %v1271, %v1531
          %1533 = vmatmul.bf16.gmra.mxu0 %v1327
          %v1534 = vpop.f32.mrf.mxu0
          %v1535 = vadd.f32 %v1271, %v1534
          %v1536 = vpop.f32.mrf.mxu0
          %v1537 = vadd.f32 %v1271, %v1536
          %1538 = vmatmul.bf16.gmra.mxu0 %v1329
          %v1539 = vpop.f32.mrf.mxu0
          %v1540 = vadd.f32 %v1271, %v1539
          %v1541 = vpop.f32.mrf.mxu0
          %v1542 = vadd.f32 %v1271, %v1541
          %1543 = vmatmul.bf16.gmra.mxu0 %v1331
          %v1544 = vpop.f32.mrf.mxu0
          %v1545 = vadd.f32 %v1271, %v1544
          %v1546 = vpop.f32.mrf.mxu0
          %v1547 = vadd.f32 %v1271, %v1546
          %1548 = vmatmul.bf16.gmra.mxu0 %v1333
          %v1549 = vpop.f32.mrf.mxu0
          %v1550 = vadd.f32 %v1271, %v1549
          %v1551 = vpop.f32.mrf.mxu0
          %v1552 = vadd.f32 %v1271, %v1551
          %1553 = vmatmul.bf16.gmra.mxu0 %v1335
          %v1554 = vpop.f32.mrf.mxu0
          %v1555 = vadd.f32 %v1271, %v1554
          %v1556 = vpop.f32.mrf.mxu0
          %v1557 = vadd.f32 %v1271, %v1556
          %1558 = vmatmul.bf16.gmra.mxu0 %v1337
          %v1559 = vpop.f32.mrf.mxu0
          %v1560 = vadd.f32 %v1271, %v1559
          %v1561 = vpop.f32.mrf.mxu0
          %v1562 = vadd.f32 %v1271, %v1561
          %1563 = vdwg.mxu0
          %1564 = vmatpush.bf16.msra.mxu0 %v1481
          %1565 = vmatpush.bf16.msra.mxu0 %v1479
          %1566 = vmatpush.bf16.msra.mxu0 %v1477
          %1567 = vmatpush.bf16.msra.mxu0 %v1475
          %1568 = vmatpush.bf16.msra.mxu0 %v1473
          %1569 = vmatpush.bf16.msra.mxu0 %v1471
          %1570 = vmatpush.bf16.msra.mxu0 %v1469
          %1571 = vmatpush.bf16.msra.mxu0 %v1467
          %1572 = vmatmul.bf16.gmra.mxu0 %v1324
          %v1573 = vpop.f32.mrf.mxu0
          %v1574 = vadd.f32 %v1525, %v1573
          %v1575 = vpop.f32.mrf.mxu0
          %v1576 = vadd.f32 %v1527, %v1575
          %1577 = vmatmul.bf16.gmra.mxu0 %v1326
          %v1578 = vpop.f32.mrf.mxu0
          %v1579 = vadd.f32 %v1530, %v1578
          %v1580 = vpop.f32.mrf.mxu0
          %v1581 = vadd.f32 %v1532, %v1580
          %1582 = vmatmul.bf16.gmra.mxu0 %v1328
          %v1583 = vpop.f32.mrf.mxu0
          %v1584 = vadd.f32 %v1535, %v1583
          %v1585 = vpop.f32.mrf.mxu0
          %v1586 = vadd.f32 %v1537, %v1585
          %1587 = vmatmul.bf16.gmra.mxu0 %v1330
          %v1588 = vpop.f32.mrf.mxu0
          %v1589 = vadd.f32 %v1540, %v1588
          %v1590 = vpop.f32.mrf.mxu0
          %v1591 = vadd.f32 %v1542, %v1590
          %1592 = vmatmul.bf16.gmra.mxu0 %v1332
          %v1593 = vpop.f32.mrf.mxu0
          %v1594 = vadd.f32 %v1545, %v1593
          %v1595 = vpop.f32.mrf.mxu0
          %v1596 = vadd.f32 %v1547, %v1595
          %1597 = vmatmul.bf16.gmra.mxu0 %v1334
          %v1598 = vpop.f32.mrf.mxu0
          %v1599 = vadd.f32 %v1550, %v1598
          %v1600 = vpop.f32.mrf.mxu0
          %v1601 = vadd.f32 %v1552, %v1600
          %1602 = vmatmul.bf16.gmra.mxu0 %v1336
          %v1603 = vpop.f32.mrf.mxu0
          %v1604 = vadd.f32 %v1555, %v1603
          %v1605 = vpop.f32.mrf.mxu0
          %v1606 = vadd.f32 %v1557, %v1605
          %1607 = vmatmul.bf16.gmra.mxu0 %v1338
          %v1608 = vpop.f32.mrf.mxu0
          %v1609 = vadd.f32 %v1560, %v1608
          %v1610 = vpop.f32.mrf.mxu0
          %v1611 = vadd.f32 %v1562, %v1610
          %1612 = vdwg.mxu0
          %1613 = vmatpush.bf16.msra.mxu0 %v1466
          %1614 = vmatpush.bf16.msra.mxu0 %v1464
          %1615 = vmatpush.bf16.msra.mxu0 %v1462
          %1616 = vmatpush.bf16.msra.mxu0 %v1460
          %1617 = vmatpush.bf16.msra.mxu0 %v1458
          %1618 = vmatpush.bf16.msra.mxu0 %v1456
          %1619 = vmatpush.bf16.msra.mxu0 %v1454
          %1620 = vmatpush.bf16.msra.mxu0 %v1452
          %1621 = vmatmul.bf16.gmra.mxu0 %v1323
          %v1622 = vpop.f32.mrf.mxu0
          %v1623 = vadd.f32 %v1272, %v1622
          %v1624 = vpop.f32.mrf.mxu0
          %v1625 = vadd.f32 %v1272, %v1624
          %1626 = vmatmul.bf16.gmra.mxu0 %v1325
          %v1627 = vpop.f32.mrf.mxu0
          %v1628 = vadd.f32 %v1272, %v1627
          %v1629 = vpop.f32.mrf.mxu0
          %v1630 = vadd.f32 %v1272, %v1629
          %1631 = vmatmul.bf16.gmra.mxu0 %v1327
          %v1632 = vpop.f32.mrf.mxu0
          %v1633 = vadd.f32 %v1272, %v1632
          %v1634 = vpop.f32.mrf.mxu0
          %v1635 = vadd.f32 %v1272, %v1634
          %1636 = vmatmul.bf16.gmra.mxu0 %v1329
          %v1637 = vpop.f32.mrf.mxu0
          %v1638 = vadd.f32 %v1272, %v1637
          %v1639 = vpop.f32.mrf.mxu0
          %v1640 = vadd.f32 %v1272, %v1639
          %1641 = vmatmul.bf16.gmra.mxu0 %v1331
          %v1642 = vpop.f32.mrf.mxu0
          %v1643 = vadd.f32 %v1272, %v1642
          %v1644 = vpop.f32.mrf.mxu0
          %v1645 = vadd.f32 %v1272, %v1644
          %1646 = vmatmul.bf16.gmra.mxu0 %v1333
          %v1647 = vpop.f32.mrf.mxu0
          %v1648 = vadd.f32 %v1272, %v1647
          %v1649 = vpop.f32.mrf.mxu0
          %v1650 = vadd.f32 %v1272, %v1649
          %1651 = vmatmul.bf16.gmra.mxu0 %v1335
          %v1652 = vpop.f32.mrf.mxu0
          %v1653 = vadd.f32 %v1272, %v1652
          %v1654 = vpop.f32.mrf.mxu0
          %v1655 = vadd.f32 %v1272, %v1654
          %1656 = vmatmul.bf16.gmra.mxu0 %v1337
          %v1657 = vpop.f32.mrf.mxu0
          %v1658 = vadd.f32 %v1272, %v1657
          %v1659 = vpop.f32.mrf.mxu0
          %v1660 = vadd.f32 %v1272, %v1659
          %1661 = vdwg.mxu0
          %1662 = vmatpush.bf16.msra.mxu0 %v1482
          %1663 = vmatpush.bf16.msra.mxu0 %v1480
          %1664 = vmatpush.bf16.msra.mxu0 %v1478
          %1665 = vmatpush.bf16.msra.mxu0 %v1476
          %1666 = vmatpush.bf16.msra.mxu0 %v1474
          %1667 = vmatpush.bf16.msra.mxu0 %v1472
          %1668 = vmatpush.bf16.msra.mxu0 %v1470
          %1669 = vmatpush.bf16.msra.mxu0 %v1468
          %1670 = vmatmul.bf16.gmra.mxu0 %v1324
          %v1671 = vpop.f32.mrf.mxu0
          %v1672 = vadd.f32 %v1623, %v1671
          %v1673 = vpop.f32.mrf.mxu0
          %v1674 = vadd.f32 %v1625, %v1673
          %1675 = vmatmul.bf16.gmra.mxu0 %v1326
          %v1676 = vpop.f32.mrf.mxu0
          %v1677 = vadd.f32 %v1628, %v1676
          %v1678 = vpop.f32.mrf.mxu0
          %v1679 = vadd.f32 %v1630, %v1678
          %1680 = vmatmul.bf16.gmra.mxu0 %v1328
          %v1681 = vpop.f32.mrf.mxu0
          %v1682 = vadd.f32 %v1633, %v1681
          %v1683 = vpop.f32.mrf.mxu0
          %v1684 = vadd.f32 %v1635, %v1683
          %1685 = vmatmul.bf16.gmra.mxu0 %v1330
          %v1686 = vpop.f32.mrf.mxu0
          %v1687 = vadd.f32 %v1638, %v1686
          %v1688 = vpop.f32.mrf.mxu0
          %v1689 = vadd.f32 %v1640, %v1688
          %1690 = vmatmul.bf16.gmra.mxu0 %v1332
          %v1691 = vpop.f32.mrf.mxu0
          %v1692 = vadd.f32 %v1643, %v1691
          %v1693 = vpop.f32.mrf.mxu0
          %v1694 = vadd.f32 %v1645, %v1693
          %1695 = vmatmul.bf16.gmra.mxu0 %v1334
          %v1696 = vpop.f32.mrf.mxu0
          %v1697 = vadd.f32 %v1648, %v1696
          %v1698 = vpop.f32.mrf.mxu0
          %v1699 = vadd.f32 %v1650, %v1698
          %1700 = vmatmul.bf16.gmra.mxu0 %v1336
          %v1701 = vpop.f32.mrf.mxu0
          %v1702 = vadd.f32 %v1653, %v1701
          %v1703 = vpop.f32.mrf.mxu0
          %v1704 = vadd.f32 %v1655, %v1703
          %1705 = vmatmul.bf16.gmra.mxu0 %v1338
          %v1706 = vpop.f32.mrf.mxu0
          %v1707 = vadd.f32 %v1658, %v1706
          %v1708 = vpop.f32.mrf.mxu0
          %v1709 = vadd.f32 %v1660, %v1708
          %1710 = vdwg.mxu0
          %v1711 = vpack.c.bf16 %v1195, %v1097
          %v1712 = vpack.c.bf16 %v1197, %v1099
          %v1713 = vpack.c.bf16 %v1200, %v1102
          %v1714 = vpack.c.bf16 %v1202, %v1104
          %v1715 = vpack.c.bf16 %v1205, %v1107
          %v1716 = vpack.c.bf16 %v1207, %v1109
          %v1717 = vpack.c.bf16 %v1210, %v1112
          %v1718 = vpack.c.bf16 %v1212, %v1114
          %v1719 = vpack.c.bf16 %v1215, %v1117
          %v1720 = vpack.c.bf16 %v1217, %v1119
          %v1721 = vpack.c.bf16 %v1220, %v1122
          %v1722 = vpack.c.bf16 %v1222, %v1124
          %v1723 = vpack.c.bf16 %v1225, %v1127
          %v1724 = vpack.c.bf16 %v1227, %v1129
          %v1725 = vpack.c.bf16 %v1230, %v1132
          %v1726 = vpack.c.bf16 %v1232, %v1134
          %s1727 = smul.u32 %s43, 32
          %s1728 = smul.addr %s1727, 4
          %s1729 = scalar_lea.vmem [#allocation3], %s1728
          %1730 = vst [vmem:[%s1729] sm:$0xff] %v1711
          %1731 = vst [vmem:[%s1729 + $0x8] sm:$0xff] %v1712
          %1732 = vst [vmem:[%s1729 + $0x10] sm:$0xff] %v1713
          %1733 = vst [vmem:[%s1729 + $0x18] sm:$0xff] %v1714
          %1734 = vst [vmem:[%s1729 + $0x20] sm:$0xff] %v1715
          %1735 = vst [vmem:[%s1729 + $0x28] sm:$0xff] %v1716
          %1736 = vst [vmem:[%s1729 + $0x30] sm:$0xff] %v1717
          %1737 = vst [vmem:[%s1729 + $0x38] sm:$0xff] %v1718
          %1738 = vst [vmem:[%s1729 + $0x40] sm:$0xff] %v1719
          %1739 = vst [vmem:[%s1729 + $0x48] sm:$0xff] %v1720
          %1740 = vst [vmem:[%s1729 + $0x50] sm:$0xff] %v1721
          %1741 = vst [vmem:[%s1729 + $0x58] sm:$0xff] %v1722
          %1742 = vst [vmem:[%s1729 + $0x60] sm:$0xff] %v1723
          %1743 = vst [vmem:[%s1729 + $0x68] sm:$0xff] %v1724
          %1744 = vst [vmem:[%s1729 + $0x70] sm:$0xff] %v1725
          %1745 = vst [vmem:[%s1729 + $0x78] sm:$0xff] %v1726
          %v1746 = vpack.c.bf16 %v1672, %v1574
          %v1747 = vpack.c.bf16 %v1674, %v1576
          %v1748 = vpack.c.bf16 %v1677, %v1579
          %v1749 = vpack.c.bf16 %v1679, %v1581
          %v1750 = vpack.c.bf16 %v1682, %v1584
          %v1751 = vpack.c.bf16 %v1684, %v1586
          %v1752 = vpack.c.bf16 %v1687, %v1589
          %v1753 = vpack.c.bf16 %v1689, %v1591
          %v1754 = vpack.c.bf16 %v1692, %v1594
          %v1755 = vpack.c.bf16 %v1694, %v1596
          %v1756 = vpack.c.bf16 %v1697, %v1599
          %v1757 = vpack.c.bf16 %v1699, %v1601
          %v1758 = vpack.c.bf16 %v1702, %v1604
          %v1759 = vpack.c.bf16 %v1704, %v1606
          %v1760 = vpack.c.bf16 %v1707, %v1609
          %v1761 = vpack.c.bf16 %v1709, %v1611
          %s1762 = smul.addr %s1727, 4
          %s1763 = scalar_lea.vmem [#allocation4], %s1762
          %1764 = vst [vmem:[%s1763] sm:$0xff] %v1746
          %1765 = vst [vmem:[%s1763 + $0x8] sm:$0xff] %v1747
          %1766 = vst [vmem:[%s1763 + $0x10] sm:$0xff] %v1748
          %1767 = vst [vmem:[%s1763 + $0x18] sm:$0xff] %v1749
          %1768 = vst [vmem:[%s1763 + $0x20] sm:$0xff] %v1750
          %1769 = vst [vmem:[%s1763 + $0x28] sm:$0xff] %v1751
          %1770 = vst [vmem:[%s1763 + $0x30] sm:$0xff] %v1752
          %1771 = vst [vmem:[%s1763 + $0x38] sm:$0xff] %v1753
          %1772 = vst [vmem:[%s1763 + $0x40] sm:$0xff] %v1754
          %1773 = vst [vmem:[%s1763 + $0x48] sm:$0xff] %v1755
          %1774 = vst [vmem:[%s1763 + $0x50] sm:$0xff] %v1756
          %1775 = vst [vmem:[%s1763 + $0x58] sm:$0xff] %v1757
          %1776 = vst [vmem:[%s1763 + $0x60] sm:$0xff] %v1758
          %1777 = vst [vmem:[%s1763 + $0x68] sm:$0xff] %v1759
          %1778 = vst [vmem:[%s1763 + $0x70] sm:$0xff] %v1760
          %1779 = vst [vmem:[%s1763 + $0x78] sm:$0xff] %v1761
        $region112: #{tpu_custom_call.1} parent=71 // pred_fallthru
          _
        %s1780 = smul.u32 %s43, 32
        %s1781 = smul.addr %s1780, 4
        %s1782 = scalar_lea.vmem [#allocation3], %s1781
        %v1783 = vld [vmem:[%s1782] sm:$0xff]
        %v1784 = vld [vmem:[%s1782 + $0x8] sm:$0xff]
        %v1785 = vld [vmem:[%s1782 + $0x10] sm:$0xff]
        %v1786 = vld [vmem:[%s1782 + $0x18] sm:$0xff]
        %v1787 = vld [vmem:[%s1782 + $0x20] sm:$0xff]
        %v1788 = vld [vmem:[%s1782 + $0x28] sm:$0xff]
        %v1789 = vld [vmem:[%s1782 + $0x30] sm:$0xff]
        %v1790 = vld [vmem:[%s1782 + $0x38] sm:$0xff]
        %v1791 = vld [vmem:[%s1782 + $0x40] sm:$0xff]
        %v1792 = vld [vmem:[%s1782 + $0x48] sm:$0xff]
        %v1793 = vld [vmem:[%s1782 + $0x50] sm:$0xff]
        %v1794 = vld [vmem:[%s1782 + $0x58] sm:$0xff]
        %v1795 = vld [vmem:[%s1782 + $0x60] sm:$0xff]
        %v1796 = vld [vmem:[%s1782 + $0x68] sm:$0xff]
        %v1797 = vld [vmem:[%s1782 + $0x70] sm:$0xff]
        %v1798 = vld [vmem:[%s1782 + $0x78] sm:$0xff]
        %s1799 = smul.addr %s1780, 4
        %s1800 = scalar_lea.vmem [#allocation4], %s1799
        %v1801 = vld [vmem:[%s1800] sm:$0xff]
        %v1802 = vld [vmem:[%s1800 + $0x8] sm:$0xff]
        %v1803 = vld [vmem:[%s1800 + $0x10] sm:$0xff]
        %v1804 = vld [vmem:[%s1800 + $0x18] sm:$0xff]
        %v1805 = vld [vmem:[%s1800 + $0x20] sm:$0xff]
        %v1806 = vld [vmem:[%s1800 + $0x28] sm:$0xff]
        %v1807 = vld [vmem:[%s1800 + $0x30] sm:$0xff]
        %v1808 = vld [vmem:[%s1800 + $0x38] sm:$0xff]
        %v1809 = vld [vmem:[%s1800 + $0x40] sm:$0xff]
        %v1810 = vld [vmem:[%s1800 + $0x48] sm:$0xff]
        %v1811 = vld [vmem:[%s1800 + $0x50] sm:$0xff]
        %v1812 = vld [vmem:[%s1800 + $0x58] sm:$0xff]
        %v1813 = vld [vmem:[%s1800 + $0x60] sm:$0xff]
        %v1814 = vld [vmem:[%s1800 + $0x68] sm:$0xff]
        %v1815 = vld [vmem:[%s1800 + $0x70] sm:$0xff]
        %v1816 = vld [vmem:[%s1800 + $0x78] sm:$0xff]
        %v1817 = vld [vmem:[%s550] sm:$0xff]
        %v1818 = vld [vmem:[%s550 + $0x8] sm:$0xff]
        %v1819 = vld [vmem:[%s550 + $0x10] sm:$0xff]
        %v1820 = vld [vmem:[%s550 + $0x18] sm:$0xff]
        %v1821 = vld [vmem:[%s550 + $0x20] sm:$0xff]
        %v1822 = vld [vmem:[%s550 + $0x28] sm:$0xff]
        %v1823 = vld [vmem:[%s550 + $0x30] sm:$0xff]
        %v1824 = vld [vmem:[%s550 + $0x38] sm:$0xff]
        %v1825 = vld [vmem:[%s550 + $0x40] sm:$0xff]
        %v1826 = vld [vmem:[%s550 + $0x48] sm:$0xff]
        %v1827 = vld [vmem:[%s550 + $0x50] sm:$0xff]
        %v1828 = vld [vmem:[%s550 + $0x58] sm:$0xff]
        %v1829 = vld [vmem:[%s550 + $0x60] sm:$0xff]
        %v1830 = vld [vmem:[%s550 + $0x68] sm:$0xff]
        %v1831 = vld [vmem:[%s550 + $0x70] sm:$0xff]
        %v1832 = vld [vmem:[%s550 + $0x78] sm:$0xff]
        %v1833 = vld [vmem:[%s550 + $0x80] sm:$0xff]
        %v1834 = vld [vmem:[%s550 + $0x88] sm:$0xff]
        %v1835 = vld [vmem:[%s550 + $0x90] sm:$0xff]
        %v1836 = vld [vmem:[%s550 + $0x98] sm:$0xff]
        %v1837 = vld [vmem:[%s550 + $0xa0] sm:$0xff]
        %v1838 = vld [vmem:[%s550 + $0xa8] sm:$0xff]
        %v1839 = vld [vmem:[%s550 + $0xb0] sm:$0xff]
        %v1840 = vld [vmem:[%s550 + $0xb8] sm:$0xff]
        %v1841 = vld [vmem:[%s550 + $0xc0] sm:$0xff]
        %v1842 = vld [vmem:[%s550 + $0xc8] sm:$0xff]
        %v1843 = vld [vmem:[%s550 + $0xd0] sm:$0xff]
        %v1844 = vld [vmem:[%s550 + $0xd8] sm:$0xff]
        %v1845 = vld [vmem:[%s550 + $0xe0] sm:$0xff]
        %v1846 = vld [vmem:[%s550 + $0xe8] sm:$0xff]
        %v1847 = vld [vmem:[%s550 + $0xf0] sm:$0xff]
        %v1848 = vld [vmem:[%s550 + $0xf8] sm:$0xff]
        %v1849 = vld [vmem:[%s550 + $0x100] sm:$0xff]
        %v1850 = vld [vmem:[%s550 + $0x108] sm:$0xff]
        %v1851 = vld [vmem:[%s550 + $0x110] sm:$0xff]
        %v1852 = vld [vmem:[%s550 + $0x118] sm:$0xff]
        %v1853 = vld [vmem:[%s550 + $0x120] sm:$0xff]
        %v1854 = vld [vmem:[%s550 + $0x128] sm:$0xff]
        %v1855 = vld [vmem:[%s550 + $0x130] sm:$0xff]
        %v1856 = vld [vmem:[%s550 + $0x138] sm:$0xff]
        %v1857 = vld [vmem:[%s550 + $0x140] sm:$0xff]
        %v1858 = vld [vmem:[%s550 + $0x148] sm:$0xff]
        %v1859 = vld [vmem:[%s550 + $0x150] sm:$0xff]
        %v1860 = vld [vmem:[%s550 + $0x158] sm:$0xff]
        %v1861 = vld [vmem:[%s550 + $0x160] sm:$0xff]
        %v1862 = vld [vmem:[%s550 + $0x168] sm:$0xff]
        %v1863 = vld [vmem:[%s550 + $0x170] sm:$0xff]
        %v1864 = vld [vmem:[%s550 + $0x178] sm:$0xff]
        %v1865 = vld [vmem:[%s550 + $0x180] sm:$0xff]
        %v1866 = vld [vmem:[%s550 + $0x188] sm:$0xff]
        %v1867 = vld [vmem:[%s550 + $0x190] sm:$0xff]
        %v1868 = vld [vmem:[%s550 + $0x198] sm:$0xff]
        %v1869 = vld [vmem:[%s550 + $0x1a0] sm:$0xff]
        %v1870 = vld [vmem:[%s550 + $0x1a8] sm:$0xff]
        %v1871 = vld [vmem:[%s550 + $0x1b0] sm:$0xff]
        %v1872 = vld [vmem:[%s550 + $0x1b8] sm:$0xff]
        %v1873 = vld [vmem:[%s550 + $0x1c0] sm:$0xff]
        %v1874 = vld [vmem:[%s550 + $0x1c8] sm:$0xff]
        %v1875 = vld [vmem:[%s550 + $0x1d0] sm:$0xff]
        %v1876 = vld [vmem:[%s550 + $0x1d8] sm:$0xff]
        %v1877 = vld [vmem:[%s550 + $0x1e0] sm:$0xff]
        %v1878 = vld [vmem:[%s550 + $0x1e8] sm:$0xff]
        %v1879 = vld [vmem:[%s550 + $0x1f0] sm:$0xff]
        %v1880 = vld [vmem:[%s550 + $0x1f8] sm:$0xff]
        %v1881 = vpack.c.bf16 %v1819, %v1817
        %v1882 = vpack.c.bf16 %v1820, %v1818
        %v1883 = vpack.c.bf16 %v1823, %v1821
        %v1884 = vpack.c.bf16 %v1824, %v1822
        %v1885 = vpack.c.bf16 %v1827, %v1825
        %v1886 = vpack.c.bf16 %v1828, %v1826
        %v1887 = vpack.c.bf16 %v1831, %v1829
        %v1888 = vpack.c.bf16 %v1832, %v1830
        %v1889 = vpack.c.bf16 %v1835, %v1833
        %v1890 = vpack.c.bf16 %v1836, %v1834
        %v1891 = vpack.c.bf16 %v1839, %v1837
        %v1892 = vpack.c.bf16 %v1840, %v1838
        %v1893 = vpack.c.bf16 %v1843, %v1841
        %v1894 = vpack.c.bf16 %v1844, %v1842
        %v1895 = vpack.c.bf16 %v1847, %v1845
        %v1896 = vpack.c.bf16 %v1848, %v1846
        %v1897 = vpack.c.bf16 %v1851, %v1849
        %v1898 = vpack.c.bf16 %v1852, %v1850
        %v1899 = vpack.c.bf16 %v1855, %v1853
        %v1900 = vpack.c.bf16 %v1856, %v1854
        %v1901 = vpack.c.bf16 %v1859, %v1857
        %v1902 = vpack.c.bf16 %v1860, %v1858
        %v1903 = vpack.c.bf16 %v1863, %v1861
        %v1904 = vpack.c.bf16 %v1864, %v1862
        %v1905 = vpack.c.bf16 %v1867, %v1865
        %v1906 = vpack.c.bf16 %v1868, %v1866
        %v1907 = vpack.c.bf16 %v1871, %v1869
        %v1908 = vpack.c.bf16 %v1872, %v1870
        %v1909 = vpack.c.bf16 %v1875, %v1873
        %v1910 = vpack.c.bf16 %v1876, %v1874
        %v1911 = vpack.c.bf16 %v1879, %v1877
        %v1912 = vpack.c.bf16 %v1880, %v1878
        %s1913 = smul.u32 %s43, 64
        %s1914 = smul.addr %s1913, 4
        %s1915 = scalar_lea.vmem [#allocation11], %s1914
        %v1916 = vld [vmem:[%s1915] sm:$0xff]
        %v1917 = vld [vmem:[%s1915 + $0x8] sm:$0xff]
        %v1918 = vld [vmem:[%s1915 + $0x10] sm:$0xff]
        %v1919 = vld [vmem:[%s1915 + $0x18] sm:$0xff]
        %v1920 = vld [vmem:[%s1915 + $0x20] sm:$0xff]
        %v1921 = vld [vmem:[%s1915 + $0x28] sm:$0xff]
        %v1922 = vld [vmem:[%s1915 + $0x30] sm:$0xff]
        %v1923 = vld [vmem:[%s1915 + $0x38] sm:$0xff]
        %v1924 = vld [vmem:[%s1915 + $0x40] sm:$0xff]
        %v1925 = vld [vmem:[%s1915 + $0x48] sm:$0xff]
        %v1926 = vld [vmem:[%s1915 + $0x50] sm:$0xff]
        %v1927 = vld [vmem:[%s1915 + $0x58] sm:$0xff]
        %v1928 = vld [vmem:[%s1915 + $0x60] sm:$0xff]
        %v1929 = vld [vmem:[%s1915 + $0x68] sm:$0xff]
        %v1930 = vld [vmem:[%s1915 + $0x70] sm:$0xff]
        %v1931 = vld [vmem:[%s1915 + $0x78] sm:$0xff]
        %v1932 = vld [vmem:[%s1915 + $0x80] sm:$0xff]
        %v1933 = vld [vmem:[%s1915 + $0x88] sm:$0xff]
        %v1934 = vld [vmem:[%s1915 + $0x90] sm:$0xff]
        %v1935 = vld [vmem:[%s1915 + $0x98] sm:$0xff]
        %v1936 = vld [vmem:[%s1915 + $0xa0] sm:$0xff]
        %v1937 = vld [vmem:[%s1915 + $0xa8] sm:$0xff]
        %v1938 = vld [vmem:[%s1915 + $0xb0] sm:$0xff]
        %v1939 = vld [vmem:[%s1915 + $0xb8] sm:$0xff]
        %v1940 = vld [vmem:[%s1915 + $0xc0] sm:$0xff]
        %v1941 = vld [vmem:[%s1915 + $0xc8] sm:$0xff]
        %v1942 = vld [vmem:[%s1915 + $0xd0] sm:$0xff]
        %v1943 = vld [vmem:[%s1915 + $0xd8] sm:$0xff]
        %v1944 = vld [vmem:[%s1915 + $0xe0] sm:$0xff]
        %v1945 = vld [vmem:[%s1915 + $0xe8] sm:$0xff]
        %v1946 = vld [vmem:[%s1915 + $0xf0] sm:$0xff]
        %v1947 = vld [vmem:[%s1915 + $0xf8] sm:$0xff]
        %s1948 = smul.u32 %s43, 2
        %s1949 = scalar_lea.vmem %s4, %s1948
        %v1950 = vld [vmem:[%s1949] sm:$0x3]
        %v1952 = vperm.slane %v1950, 0
        %v1953 = vperm.slane %v1950, 1
        %v1988 = vunpack.c.l.b16 %v1916
        %v1989 = vunpack.c.h.b16 %v1916
        %v1990 = vunpack.c.l.b16 %v1917
        %v1991 = vunpack.c.h.b16 %v1917
        %v1992 = vunpack.c.l.b16 %v1918
        %v1993 = vunpack.c.h.b16 %v1918
        %v1994 = vunpack.c.l.b16 %v1919
        %v1995 = vunpack.c.h.b16 %v1919
        %v1996 = vunpack.c.l.b16 %v1920
        %v1997 = vunpack.c.h.b16 %v1920
        %v1998 = vunpack.c.l.b16 %v1921
        %v1999 = vunpack.c.h.b16 %v1921
        %v2000 = vunpack.c.l.b16 %v1922
        %v2001 = vunpack.c.h.b16 %v1922
        %v2002 = vunpack.c.l.b16 %v1923
        %v2003 = vunpack.c.h.b16 %v1923
        %v2004 = vunpack.c.l.b16 %v1924
        %v2005 = vunpack.c.h.b16 %v1924
        %v2006 = vunpack.c.l.b16 %v1925
        %v2007 = vunpack.c.h.b16 %v1925
        %v2008 = vunpack.c.l.b16 %v1926
        %v2009 = vunpack.c.h.b16 %v1926
        %v2010 = vunpack.c.l.b16 %v1927
        %v2011 = vunpack.c.h.b16 %v1927
        %v2012 = vunpack.c.l.b16 %v1928
        %v2013 = vunpack.c.h.b16 %v1928
        %v2014 = vunpack.c.l.b16 %v1929
        %v2015 = vunpack.c.h.b16 %v1929
        %v2016 = vunpack.c.l.b16 %v1930
        %v2017 = vunpack.c.h.b16 %v1930
        %v2018 = vunpack.c.l.b16 %v1931
        %v2019 = vunpack.c.h.b16 %v1931
        %v2020 = vunpack.c.l.b16 %v1932
        %v2021 = vunpack.c.h.b16 %v1932
        %v2022 = vunpack.c.l.b16 %v1933
        %v2023 = vunpack.c.h.b16 %v1933
        %v2024 = vunpack.c.l.b16 %v1934
        %v2025 = vunpack.c.h.b16 %v1934
        %v2026 = vunpack.c.l.b16 %v1935
        %v2027 = vunpack.c.h.b16 %v1935
        %v2028 = vunpack.c.l.b16 %v1936
        %v2029 = vunpack.c.h.b16 %v1936
        %v2030 = vunpack.c.l.b16 %v1937
        %v2031 = vunpack.c.h.b16 %v1937
        %v2032 = vunpack.c.l.b16 %v1938
        %v2033 = vunpack.c.h.b16 %v1938
        %v2034 = vunpack.c.l.b16 %v1939
        %v2035 = vunpack.c.h.b16 %v1939
        %v2036 = vunpack.c.l.b16 %v1940
        %v2037 = vunpack.c.h.b16 %v1940
        %v2038 = vunpack.c.l.b16 %v1941
        %v2039 = vunpack.c.h.b16 %v1941
        %v2040 = vunpack.c.l.b16 %v1942
        %v2041 = vunpack.c.h.b16 %v1942
        %v2042 = vunpack.c.l.b16 %v1943
        %v2043 = vunpack.c.h.b16 %v1943
        %v2044 = vunpack.c.l.b16 %v1944
        %v2045 = vunpack.c.h.b16 %v1944
        %v2046 = vunpack.c.l.b16 %v1945
        %v2047 = vunpack.c.h.b16 %v1945
        %v2048 = vunpack.c.l.b16 %v1946
        %v2049 = vunpack.c.h.b16 %v1946
        %v2050 = vunpack.c.l.b16 %v1947
        %v2051 = vunpack.c.h.b16 %v1947
        %v2052 = vpack.c.b16 %v1990, %v1988
        %v2053 = vpack.c.b16 %v1991, %v1989
        %v2054 = vpack.c.b16 %v1994, %v1992
        %v2055 = vpack.c.b16 %v1995, %v1993
        %v2056 = vpack.c.b16 %v1998, %v1996
        %v2057 = vpack.c.b16 %v1999, %v1997
        %v2058 = vpack.c.b16 %v2002, %v2000
        %v2059 = vpack.c.b16 %v2003, %v2001
        %v2060 = vpack.c.b16 %v2006, %v2004
        %v2061 = vpack.c.b16 %v2007, %v2005
        %v2062 = vpack.c.b16 %v2010, %v2008
        %v2063 = vpack.c.b16 %v2011, %v2009
        %v2064 = vpack.c.b16 %v2014, %v2012
        %v2065 = vpack.c.b16 %v2015, %v2013
        %v2066 = vpack.c.b16 %v2018, %v2016
        %v2067 = vpack.c.b16 %v2019, %v2017
        %v2068 = vpack.c.b16 %v2022, %v2020
        %v2069 = vpack.c.b16 %v2023, %v2021
        %v2070 = vpack.c.b16 %v2026, %v2024
        %v2071 = vpack.c.b16 %v2027, %v2025
        %v2072 = vpack.c.b16 %v2030, %v2028
        %v2073 = vpack.c.b16 %v2031, %v2029
        %v2074 = vpack.c.b16 %v2034, %v2032
        %v2075 = vpack.c.b16 %v2035, %v2033
        %v2076 = vpack.c.b16 %v2038, %v2036
        %v2077 = vpack.c.b16 %v2039, %v2037
        %v2078 = vpack.c.b16 %v2042, %v2040
        %v2079 = vpack.c.b16 %v2043, %v2041
        %v2080 = vpack.c.b16 %v2046, %v2044
        %v2081 = vpack.c.b16 %v2047, %v2045
        %v2082 = vpack.c.b16 %v2050, %v2048
        %v2083 = vpack.c.b16 %v2051, %v2049
        %2116 = vmatpush.bf16.msra.mxu0 %v2066
        %2117 = vmatpush.bf16.msra.mxu0 %v2064
        %2118 = vmatpush.bf16.msra.mxu0 %v2062
        %2119 = vmatpush.bf16.msra.mxu0 %v2060
        %2120 = vmatpush.bf16.msra.mxu0 %v2058
        %2121 = vmatpush.bf16.msra.mxu0 %v2056
        %2122 = vmatpush.bf16.msra.mxu0 %v2054
        %2123 = vmatpush.bf16.msra.mxu0 %v2052
        %2124 = vmatmul.bf16.gmra.mxu0 %v1881
        %v2125 = vpop.f32.mrf.mxu0
        %v2126 = vadd.f32 %v1952, %v2125
        %v2127 = vpop.f32.mrf.mxu0
        %v2128 = vadd.f32 %v1952, %v2127
        %2129 = vmatmul.bf16.gmra.mxu0 %v1883
        %v2130 = vpop.f32.mrf.mxu0
        %v2131 = vadd.f32 %v1952, %v2130
        %v2132 = vpop.f32.mrf.mxu0
        %v2133 = vadd.f32 %v1952, %v2132
        %2134 = vmatmul.bf16.gmra.mxu0 %v1885
        %v2135 = vpop.f32.mrf.mxu0
        %v2136 = vadd.f32 %v1952, %v2135
        %v2137 = vpop.f32.mrf.mxu0
        %v2138 = vadd.f32 %v1952, %v2137
        %2139 = vmatmul.bf16.gmra.mxu0 %v1887
        %v2140 = vpop.f32.mrf.mxu0
        %v2141 = vadd.f32 %v1952, %v2140
        %v2142 = vpop.f32.mrf.mxu0
        %v2143 = vadd.f32 %v1952, %v2142
        %2144 = vmatmul.bf16.gmra.mxu0 %v1889
        %v2145 = vpop.f32.mrf.mxu0
        %v2146 = vadd.f32 %v1952, %v2145
        %v2147 = vpop.f32.mrf.mxu0
        %v2148 = vadd.f32 %v1952, %v2147
        %2149 = vmatmul.bf16.gmra.mxu0 %v1891
        %v2150 = vpop.f32.mrf.mxu0
        %v2151 = vadd.f32 %v1952, %v2150
        %v2152 = vpop.f32.mrf.mxu0
        %v2153 = vadd.f32 %v1952, %v2152
        %2154 = vmatmul.bf16.gmra.mxu0 %v1893
        %v2155 = vpop.f32.mrf.mxu0
        %v2156 = vadd.f32 %v1952, %v2155
        %v2157 = vpop.f32.mrf.mxu0
        %v2158 = vadd.f32 %v1952, %v2157
        %2159 = vmatmul.bf16.gmra.mxu0 %v1895
        %v2160 = vpop.f32.mrf.mxu0
        %v2161 = vadd.f32 %v1952, %v2160
        %v2162 = vpop.f32.mrf.mxu0
        %v2163 = vadd.f32 %v1952, %v2162
        %2164 = vmatmul.bf16.gmra.mxu0 %v1897
        %v2165 = vpop.f32.mrf.mxu0
        %v2166 = vadd.f32 %v1952, %v2165
        %v2167 = vpop.f32.mrf.mxu0
        %v2168 = vadd.f32 %v1952, %v2167
        %2169 = vmatmul.bf16.gmra.mxu0 %v1899
        %v2170 = vpop.f32.mrf.mxu0
        %v2171 = vadd.f32 %v1952, %v2170
        %v2172 = vpop.f32.mrf.mxu0
        %v2173 = vadd.f32 %v1952, %v2172
        %2174 = vmatmul.bf16.gmra.mxu0 %v1901
        %v2175 = vpop.f32.mrf.mxu0
        %v2176 = vadd.f32 %v1952, %v2175
        %v2177 = vpop.f32.mrf.mxu0
        %v2178 = vadd.f32 %v1952, %v2177
        %2179 = vmatmul.bf16.gmra.mxu0 %v1903
        %v2180 = vpop.f32.mrf.mxu0
        %v2181 = vadd.f32 %v1952, %v2180
        %v2182 = vpop.f32.mrf.mxu0
        %v2183 = vadd.f32 %v1952, %v2182
        %2184 = vmatmul.bf16.gmra.mxu0 %v1905
        %v2185 = vpop.f32.mrf.mxu0
        %v2186 = vadd.f32 %v1952, %v2185
        %v2187 = vpop.f32.mrf.mxu0
        %v2188 = vadd.f32 %v1952, %v2187
        %2189 = vmatmul.bf16.gmra.mxu0 %v1907
        %v2190 = vpop.f32.mrf.mxu0
        %v2191 = vadd.f32 %v1952, %v2190
        %v2192 = vpop.f32.mrf.mxu0
        %v2193 = vadd.f32 %v1952, %v2192
        %2194 = vmatmul.bf16.gmra.mxu0 %v1909
        %v2195 = vpop.f32.mrf.mxu0
        %v2196 = vadd.f32 %v1952, %v2195
        %v2197 = vpop.f32.mrf.mxu0
        %v2198 = vadd.f32 %v1952, %v2197
        %2199 = vmatmul.bf16.gmra.mxu0 %v1911
        %v2200 = vpop.f32.mrf.mxu0
        %v2201 = vadd.f32 %v1952, %v2200
        %v2202 = vpop.f32.mrf.mxu0
        %v2203 = vadd.f32 %v1952, %v2202
        %2204 = vdwg.mxu0
        %2205 = vmatpush.bf16.msra.mxu0 %v2082
        %2206 = vmatpush.bf16.msra.mxu0 %v2080
        %2207 = vmatpush.bf16.msra.mxu0 %v2078
        %2208 = vmatpush.bf16.msra.mxu0 %v2076
        %2209 = vmatpush.bf16.msra.mxu0 %v2074
        %2210 = vmatpush.bf16.msra.mxu0 %v2072
        %2211 = vmatpush.bf16.msra.mxu0 %v2070
        %2212 = vmatpush.bf16.msra.mxu0 %v2068
        %2213 = vmatmul.bf16.gmra.mxu0 %v1882
        %v2214 = vpop.f32.mrf.mxu0
        %v2215 = vadd.f32 %v2126, %v2214
        %v2216 = vpop.f32.mrf.mxu0
        %v2217 = vadd.f32 %v2128, %v2216
        %2218 = vmatmul.bf16.gmra.mxu0 %v1884
        %v2219 = vpop.f32.mrf.mxu0
        %v2220 = vadd.f32 %v2131, %v2219
        %v2221 = vpop.f32.mrf.mxu0
        %v2222 = vadd.f32 %v2133, %v2221
        %2223 = vmatmul.bf16.gmra.mxu0 %v1886
        %v2224 = vpop.f32.mrf.mxu0
        %v2225 = vadd.f32 %v2136, %v2224
        %v2226 = vpop.f32.mrf.mxu0
        %v2227 = vadd.f32 %v2138, %v2226
        %2228 = vmatmul.bf16.gmra.mxu0 %v1888
        %v2229 = vpop.f32.mrf.mxu0
        %v2230 = vadd.f32 %v2141, %v2229
        %v2231 = vpop.f32.mrf.mxu0
        %v2232 = vadd.f32 %v2143, %v2231
        %2233 = vmatmul.bf16.gmra.mxu0 %v1890
        %v2234 = vpop.f32.mrf.mxu0
        %v2235 = vadd.f32 %v2146, %v2234
        %v2236 = vpop.f32.mrf.mxu0
        %v2237 = vadd.f32 %v2148, %v2236
        %2238 = vmatmul.bf16.gmra.mxu0 %v1892
        %v2239 = vpop.f32.mrf.mxu0
        %v2240 = vadd.f32 %v2151, %v2239
        %v2241 = vpop.f32.mrf.mxu0
        %v2242 = vadd.f32 %v2153, %v2241
        %2243 = vmatmul.bf16.gmra.mxu0 %v1894
        %v2244 = vpop.f32.mrf.mxu0
        %v2245 = vadd.f32 %v2156, %v2244
        %v2246 = vpop.f32.mrf.mxu0
        %v2247 = vadd.f32 %v2158, %v2246
        %2248 = vmatmul.bf16.gmra.mxu0 %v1896
        %v2249 = vpop.f32.mrf.mxu0
        %v2250 = vadd.f32 %v2161, %v2249
        %v2251 = vpop.f32.mrf.mxu0
        %v2252 = vadd.f32 %v2163, %v2251
        %2253 = vmatmul.bf16.gmra.mxu0 %v1898
        %v2254 = vpop.f32.mrf.mxu0
        %v2255 = vadd.f32 %v2166, %v2254
        %v2256 = vpop.f32.mrf.mxu0
        %v2257 = vadd.f32 %v2168, %v2256
        %2258 = vmatmul.bf16.gmra.mxu0 %v1900
        %v2259 = vpop.f32.mrf.mxu0
        %v2260 = vadd.f32 %v2171, %v2259
        %v2261 = vpop.f32.mrf.mxu0
        %v2262 = vadd.f32 %v2173, %v2261
        %2263 = vmatmul.bf16.gmra.mxu0 %v1902
        %v2264 = vpop.f32.mrf.mxu0
        %v2265 = vadd.f32 %v2176, %v2264
        %v2266 = vpop.f32.mrf.mxu0
        %v2267 = vadd.f32 %v2178, %v2266
        %2268 = vmatmul.bf16.gmra.mxu0 %v1904
        %v2269 = vpop.f32.mrf.mxu0
        %v2270 = vadd.f32 %v2181, %v2269
        %v2271 = vpop.f32.mrf.mxu0
        %v2272 = vadd.f32 %v2183, %v2271
        %2273 = vmatmul.bf16.gmra.mxu0 %v1906
        %v2274 = vpop.f32.mrf.mxu0
        %v2275 = vadd.f32 %v2186, %v2274
        %v2276 = vpop.f32.mrf.mxu0
        %v2277 = vadd.f32 %v2188, %v2276
        %2278 = vmatmul.bf16.gmra.mxu0 %v1908
        %v2279 = vpop.f32.mrf.mxu0
        %v2280 = vadd.f32 %v2191, %v2279
        %v2281 = vpop.f32.mrf.mxu0
        %v2282 = vadd.f32 %v2193, %v2281
        %2283 = vmatmul.bf16.gmra.mxu0 %v1910
        %v2284 = vpop.f32.mrf.mxu0
        %v2285 = vadd.f32 %v2196, %v2284
        %v2286 = vpop.f32.mrf.mxu0
        %v2287 = vadd.f32 %v2198, %v2286
        %2288 = vmatmul.bf16.gmra.mxu0 %v1912
        %v2289 = vpop.f32.mrf.mxu0
        %v2290 = vadd.f32 %v2201, %v2289
        %v2291 = vpop.f32.mrf.mxu0
        %v2292 = vadd.f32 %v2203, %v2291
        %2293 = vdwg.mxu0
        %2294 = vmatpush.bf16.msra.mxu0 %v2067
        %2295 = vmatpush.bf16.msra.mxu0 %v2065
        %2296 = vmatpush.bf16.msra.mxu0 %v2063
        %2297 = vmatpush.bf16.msra.mxu0 %v2061
        %2298 = vmatpush.bf16.msra.mxu0 %v2059
        %2299 = vmatpush.bf16.msra.mxu0 %v2057
        %2300 = vmatpush.bf16.msra.mxu0 %v2055
        %2301 = vmatpush.bf16.msra.mxu0 %v2053
        %2302 = vmatmul.bf16.gmra.mxu0 %v1881
        %v2303 = vpop.f32.mrf.mxu0
        %v2304 = vadd.f32 %v1953, %v2303
        %v2305 = vpop.f32.mrf.mxu0
        %v2306 = vadd.f32 %v1953, %v2305
        %2307 = vmatmul.bf16.gmra.mxu0 %v1883
        %v2308 = vpop.f32.mrf.mxu0
        %v2309 = vadd.f32 %v1953, %v2308
        %v2310 = vpop.f32.mrf.mxu0
        %v2311 = vadd.f32 %v1953, %v2310
        %2312 = vmatmul.bf16.gmra.mxu0 %v1885
        %v2313 = vpop.f32.mrf.mxu0
        %v2314 = vadd.f32 %v1953, %v2313
        %v2315 = vpop.f32.mrf.mxu0
        %v2316 = vadd.f32 %v1953, %v2315
        %2317 = vmatmul.bf16.gmra.mxu0 %v1887
        %v2318 = vpop.f32.mrf.mxu0
        %v2319 = vadd.f32 %v1953, %v2318
        %v2320 = vpop.f32.mrf.mxu0
        %v2321 = vadd.f32 %v1953, %v2320
        %2322 = vmatmul.bf16.gmra.mxu0 %v1889
        %v2323 = vpop.f32.mrf.mxu0
        %v2324 = vadd.f32 %v1953, %v2323
        %v2325 = vpop.f32.mrf.mxu0
        %v2326 = vadd.f32 %v1953, %v2325
        %2327 = vmatmul.bf16.gmra.mxu0 %v1891
        %v2328 = vpop.f32.mrf.mxu0
        %v2329 = vadd.f32 %v1953, %v2328
        %v2330 = vpop.f32.mrf.mxu0
        %v2331 = vadd.f32 %v1953, %v2330
        %2332 = vmatmul.bf16.gmra.mxu0 %v1893
        %v2333 = vpop.f32.mrf.mxu0
        %v2334 = vadd.f32 %v1953, %v2333
        %v2335 = vpop.f32.mrf.mxu0
        %v2336 = vadd.f32 %v1953, %v2335
        %2337 = vmatmul.bf16.gmra.mxu0 %v1895
        %v2338 = vpop.f32.mrf.mxu0
        %v2339 = vadd.f32 %v1953, %v2338
        %v2340 = vpop.f32.mrf.mxu0
        %v2341 = vadd.f32 %v1953, %v2340
        %2342 = vmatmul.bf16.gmra.mxu0 %v1897
        %v2343 = vpop.f32.mrf.mxu0
        %v2344 = vadd.f32 %v1953, %v2343
        %v2345 = vpop.f32.mrf.mxu0
        %v2346 = vadd.f32 %v1953, %v2345
        %2347 = vmatmul.bf16.gmra.mxu0 %v1899
        %v2348 = vpop.f32.mrf.mxu0
        %v2349 = vadd.f32 %v1953, %v2348
        %v2350 = vpop.f32.mrf.mxu0
        %v2351 = vadd.f32 %v1953, %v2350
        %2352 = vmatmul.bf16.gmra.mxu0 %v1901
        %v2353 = vpop.f32.mrf.mxu0
        %v2354 = vadd.f32 %v1953, %v2353
        %v2355 = vpop.f32.mrf.mxu0
        %v2356 = vadd.f32 %v1953, %v2355
        %2357 = vmatmul.bf16.gmra.mxu0 %v1903
        %v2358 = vpop.f32.mrf.mxu0
        %v2359 = vadd.f32 %v1953, %v2358
        %v2360 = vpop.f32.mrf.mxu0
        %v2361 = vadd.f32 %v1953, %v2360
        %2362 = vmatmul.bf16.gmra.mxu0 %v1905
        %v2363 = vpop.f32.mrf.mxu0
        %v2364 = vadd.f32 %v1953, %v2363
        %v2365 = vpop.f32.mrf.mxu0
        %v2366 = vadd.f32 %v1953, %v2365
        %2367 = vmatmul.bf16.gmra.mxu0 %v1907
        %v2368 = vpop.f32.mrf.mxu0
        %v2369 = vadd.f32 %v1953, %v2368
        %v2370 = vpop.f32.mrf.mxu0
        %v2371 = vadd.f32 %v1953, %v2370
        %2372 = vmatmul.bf16.gmra.mxu0 %v1909
        %v2373 = vpop.f32.mrf.mxu0
        %v2374 = vadd.f32 %v1953, %v2373
        %v2375 = vpop.f32.mrf.mxu0
        %v2376 = vadd.f32 %v1953, %v2375
        %2377 = vmatmul.bf16.gmra.mxu0 %v1911
        %v2378 = vpop.f32.mrf.mxu0
        %v2379 = vadd.f32 %v1953, %v2378
        %v2380 = vpop.f32.mrf.mxu0
        %v2381 = vadd.f32 %v1953, %v2380
        %2382 = vdwg.mxu0
        %2383 = vmatpush.bf16.msra.mxu0 %v2083
        %2384 = vmatpush.bf16.msra.mxu0 %v2081
        %2385 = vmatpush.bf16.msra.mxu0 %v2079
        %2386 = vmatpush.bf16.msra.mxu0 %v2077
        %2387 = vmatpush.bf16.msra.mxu0 %v2075
        %2388 = vmatpush.bf16.msra.mxu0 %v2073
        %2389 = vmatpush.bf16.msra.mxu0 %v2071
        %2390 = vmatpush.bf16.msra.mxu0 %v2069
        %2391 = vmatmul.bf16.gmra.mxu0 %v1882
        %v2392 = vpop.f32.mrf.mxu0
        %v2393 = vadd.f32 %v2304, %v2392
        %v2394 = vpop.f32.mrf.mxu0
        %v2395 = vadd.f32 %v2306, %v2394
        %2396 = vmatmul.bf16.gmra.mxu0 %v1884
        %v2397 = vpop.f32.mrf.mxu0
        %v2398 = vadd.f32 %v2309, %v2397
        %v2399 = vpop.f32.mrf.mxu0
        %v2400 = vadd.f32 %v2311, %v2399
        %2401 = vmatmul.bf16.gmra.mxu0 %v1886
        %v2402 = vpop.f32.mrf.mxu0
        %v2403 = vadd.f32 %v2314, %v2402
        %v2404 = vpop.f32.mrf.mxu0
        %v2405 = vadd.f32 %v2316, %v2404
        %2406 = vmatmul.bf16.gmra.mxu0 %v1888
        %v2407 = vpop.f32.mrf.mxu0
        %v2408 = vadd.f32 %v2319, %v2407
        %v2409 = vpop.f32.mrf.mxu0
        %v2410 = vadd.f32 %v2321, %v2409
        %2411 = vmatmul.bf16.gmra.mxu0 %v1890
        %v2412 = vpop.f32.mrf.mxu0
        %v2413 = vadd.f32 %v2324, %v2412
        %v2414 = vpop.f32.mrf.mxu0
        %v2415 = vadd.f32 %v2326, %v2414
        %2416 = vmatmul.bf16.gmra.mxu0 %v1892
        %v2417 = vpop.f32.mrf.mxu0
        %v2418 = vadd.f32 %v2329, %v2417
        %v2419 = vpop.f32.mrf.mxu0
        %v2420 = vadd.f32 %v2331, %v2419
        %2421 = vmatmul.bf16.gmra.mxu0 %v1894
        %v2422 = vpop.f32.mrf.mxu0
        %v2423 = vadd.f32 %v2334, %v2422
        %v2424 = vpop.f32.mrf.mxu0
        %v2425 = vadd.f32 %v2336, %v2424
        %2426 = vmatmul.bf16.gmra.mxu0 %v1896
        %v2427 = vpop.f32.mrf.mxu0
        %v2428 = vadd.f32 %v2339, %v2427
        %v2429 = vpop.f32.mrf.mxu0
        %v2430 = vadd.f32 %v2341, %v2429
        %2431 = vmatmul.bf16.gmra.mxu0 %v1898
        %v2432 = vpop.f32.mrf.mxu0
        %v2433 = vadd.f32 %v2344, %v2432
        %v2434 = vpop.f32.mrf.mxu0
        %v2435 = vadd.f32 %v2346, %v2434
        %2436 = vmatmul.bf16.gmra.mxu0 %v1900
        %v2437 = vpop.f32.mrf.mxu0
        %v2438 = vadd.f32 %v2349, %v2437
        %v2439 = vpop.f32.mrf.mxu0
        %v2440 = vadd.f32 %v2351, %v2439
        %2441 = vmatmul.bf16.gmra.mxu0 %v1902
        %v2442 = vpop.f32.mrf.mxu0
        %v2443 = vadd.f32 %v2354, %v2442
        %v2444 = vpop.f32.mrf.mxu0
        %v2445 = vadd.f32 %v2356, %v2444
        %2446 = vmatmul.bf16.gmra.mxu0 %v1904
        %v2447 = vpop.f32.mrf.mxu0
        %v2448 = vadd.f32 %v2359, %v2447
        %v2449 = vpop.f32.mrf.mxu0
        %v2450 = vadd.f32 %v2361, %v2449
        %2451 = vmatmul.bf16.gmra.mxu0 %v1906
        %v2452 = vpop.f32.mrf.mxu0
        %v2453 = vadd.f32 %v2364, %v2452
        %v2454 = vpop.f32.mrf.mxu0
        %v2455 = vadd.f32 %v2366, %v2454
        %2456 = vmatmul.bf16.gmra.mxu0 %v1908
        %v2457 = vpop.f32.mrf.mxu0
        %v2458 = vadd.f32 %v2369, %v2457
        %v2459 = vpop.f32.mrf.mxu0
        %v2460 = vadd.f32 %v2371, %v2459
        %2461 = vmatmul.bf16.gmra.mxu0 %v1910
        %v2462 = vpop.f32.mrf.mxu0
        %v2463 = vadd.f32 %v2374, %v2462
        %v2464 = vpop.f32.mrf.mxu0
        %v2465 = vadd.f32 %v2376, %v2464
        %2466 = vmatmul.bf16.gmra.mxu0 %v1912
        %v2467 = vpop.f32.mrf.mxu0
        %v2468 = vadd.f32 %v2379, %v2467
        %v2469 = vpop.f32.mrf.mxu0
        %v2470 = vadd.f32 %v2381, %v2469
        %2471 = vdwg.mxu0
        %v2472 = vpack.c.bf16 %v2393, %v2215
        %v2473 = vpack.c.bf16 %v2395, %v2217
        %v2474 = vpack.c.bf16 %v2398, %v2220
        %v2475 = vpack.c.bf16 %v2400, %v2222
        %v2476 = vpack.c.bf16 %v2403, %v2225
        %v2477 = vpack.c.bf16 %v2405, %v2227
        %v2478 = vpack.c.bf16 %v2408, %v2230
        %v2479 = vpack.c.bf16 %v2410, %v2232
        %v2480 = vpack.c.bf16 %v2413, %v2235
        %v2481 = vpack.c.bf16 %v2415, %v2237
        %v2482 = vpack.c.bf16 %v2418, %v2240
        %v2483 = vpack.c.bf16 %v2420, %v2242
        %v2484 = vpack.c.bf16 %v2423, %v2245
        %v2485 = vpack.c.bf16 %v2425, %v2247
        %v2486 = vpack.c.bf16 %v2428, %v2250
        %v2487 = vpack.c.bf16 %v2430, %v2252
        %v2488 = vpack.c.bf16 %v2433, %v2255
        %v2489 = vpack.c.bf16 %v2435, %v2257
        %v2490 = vpack.c.bf16 %v2438, %v2260
        %v2491 = vpack.c.bf16 %v2440, %v2262
        %v2492 = vpack.c.bf16 %v2443, %v2265
        %v2493 = vpack.c.bf16 %v2445, %v2267
        %v2494 = vpack.c.bf16 %v2448, %v2270
        %v2495 = vpack.c.bf16 %v2450, %v2272
        %v2496 = vpack.c.bf16 %v2453, %v2275
        %v2497 = vpack.c.bf16 %v2455, %v2277
        %v2498 = vpack.c.bf16 %v2458, %v2280
        %v2499 = vpack.c.bf16 %v2460, %v2282
        %v2500 = vpack.c.bf16 %v2463, %v2285
        %v2501 = vpack.c.bf16 %v2465, %v2287
        %v2502 = vpack.c.bf16 %v2468, %v2290
        %v2503 = vpack.c.bf16 %v2470, %v2292
        %v2536 = vunpack.c.l.b16 %v2472
        %v2537 = vunpack.c.l.b16 %v2473
        %v2538 = vunpack.c.l.b16 %v2474
        %v2539 = vunpack.c.l.b16 %v2475
        %v2540 = vunpack.c.l.b16 %v2476
        %v2541 = vunpack.c.l.b16 %v2477
        %v2542 = vunpack.c.l.b16 %v2478
        %v2543 = vunpack.c.l.b16 %v2479
        %v2544 = vunpack.c.l.b16 %v2480
        %v2545 = vunpack.c.l.b16 %v2481
        %v2546 = vunpack.c.l.b16 %v2482
        %v2547 = vunpack.c.l.b16 %v2483
        %v2548 = vunpack.c.l.b16 %v2484
        %v2549 = vunpack.c.l.b16 %v2485
        %v2550 = vunpack.c.l.b16 %v2486
        %v2551 = vunpack.c.l.b16 %v2487
        %v2552 = vunpack.c.l.b16 %v2488
        %v2553 = vunpack.c.l.b16 %v2489
        %v2554 = vunpack.c.l.b16 %v2490
        %v2555 = vunpack.c.l.b16 %v2491
        %v2556 = vunpack.c.l.b16 %v2492
        %v2557 = vunpack.c.l.b16 %v2493
        %v2558 = vunpack.c.l.b16 %v2494
        %v2559 = vunpack.c.l.b16 %v2495
        %v2560 = vunpack.c.l.b16 %v2496
        %v2561 = vunpack.c.l.b16 %v2497
        %v2562 = vunpack.c.l.b16 %v2498
        %v2563 = vunpack.c.l.b16 %v2499
        %v2564 = vunpack.c.l.b16 %v2500
        %v2565 = vunpack.c.l.b16 %v2501
        %v2566 = vunpack.c.l.b16 %v2502
        %v2567 = vunpack.c.l.b16 %v2503
        %v2568 = vpack.c.b16 %v2537, %v2536
        %v2569 = vpack.c.b16 %v2539, %v2538
        %v2570 = vpack.c.b16 %v2541, %v2540
        %v2571 = vpack.c.b16 %v2543, %v2542
        %v2572 = vpack.c.b16 %v2545, %v2544
        %v2573 = vpack.c.b16 %v2547, %v2546
        %v2574 = vpack.c.b16 %v2549, %v2548
        %v2575 = vpack.c.b16 %v2551, %v2550
        %v2576 = vpack.c.b16 %v2553, %v2552
        %v2577 = vpack.c.b16 %v2555, %v2554
        %v2578 = vpack.c.b16 %v2557, %v2556
        %v2579 = vpack.c.b16 %v2559, %v2558
        %v2580 = vpack.c.b16 %v2561, %v2560
        %v2581 = vpack.c.b16 %v2563, %v2562
        %v2582 = vpack.c.b16 %v2565, %v2564
        %v2583 = vpack.c.b16 %v2567, %v2566
        %v2616 = vunpack.c.l.b16 %v1783
        %v2617 = vunpack.c.l.b16 %v1784
        %v2618 = vunpack.c.l.b16 %v1785
        %v2619 = vunpack.c.l.b16 %v1786
        %v2620 = vunpack.c.l.b16 %v1787
        %v2621 = vunpack.c.l.b16 %v1788
        %v2622 = vunpack.c.l.b16 %v1789
        %v2623 = vunpack.c.l.b16 %v1790
        %v2624 = vunpack.c.l.b16 %v1791
        %v2625 = vunpack.c.l.b16 %v1792
        %v2626 = vunpack.c.l.b16 %v1793
        %v2627 = vunpack.c.l.b16 %v1794
        %v2628 = vunpack.c.l.b16 %v1795
        %v2629 = vunpack.c.l.b16 %v1796
        %v2630 = vunpack.c.l.b16 %v1797
        %v2631 = vunpack.c.l.b16 %v1798
        %v2632 = vpack.c.b16 %v2617, %v2616
        %v2633 = vpack.c.b16 %v2619, %v2618
        %v2634 = vpack.c.b16 %v2621, %v2620
        %v2635 = vpack.c.b16 %v2623, %v2622
        %v2636 = vpack.c.b16 %v2625, %v2624
        %v2637 = vpack.c.b16 %v2627, %v2626
        %v2638 = vpack.c.b16 %v2629, %v2628
        %v2639 = vpack.c.b16 %v2631, %v2630
        %2648 = vmatpush.bf16.xpose.msra.mxu0 %v2639
        %2649 = vmatpush.bf16.xpose.msra.mxu0 %v2638
        %2650 = vmatpush.bf16.xpose.msra.mxu0 %v2637
        %2651 = vmatpush.bf16.xpose.msra.mxu0 %v2636
        %2652 = vmatpush.bf16.xpose.msra.mxu0 %v2635
        %2653 = vmatpush.bf16.xpose.msra.mxu0 %v2634
        %2654 = vmatpush.bf16.xpose.msra.mxu0 %v2633
        %2655 = vmatpush.bf16.xpose.msra.mxu0 %v2632
        %2656 = vmatmul.bf16.gmra.mxu0 %v2568
        %v2657 = vpop.f32.mrf.mxu0
        %v2658 = vadd.f32 0.0, %v2657
        %v2659 = vpop.f32.mrf.mxu0
        %v2660 = vadd.f32 0.0, %v2659
        %2661 = vmatmul.bf16.gmra.mxu0 %v2569
        %v2662 = vpop.f32.mrf.mxu0
        %v2663 = vadd.f32 0.0, %v2662
        %v2664 = vpop.f32.mrf.mxu0
        %v2665 = vadd.f32 0.0, %v2664
        %2666 = vmatmul.bf16.gmra.mxu0 %v2570
        %v2667 = vpop.f32.mrf.mxu0
        %v2668 = vadd.f32 0.0, %v2667
        %v2669 = vpop.f32.mrf.mxu0
        %v2670 = vadd.f32 0.0, %v2669
        %2671 = vmatmul.bf16.gmra.mxu0 %v2571
        %v2672 = vpop.f32.mrf.mxu0
        %v2673 = vadd.f32 0.0, %v2672
        %v2674 = vpop.f32.mrf.mxu0
        %v2675 = vadd.f32 0.0, %v2674
        %2676 = vmatmul.bf16.gmra.mxu0 %v2572
        %v2677 = vpop.f32.mrf.mxu0
        %v2678 = vadd.f32 0.0, %v2677
        %v2679 = vpop.f32.mrf.mxu0
        %v2680 = vadd.f32 0.0, %v2679
        %2681 = vmatmul.bf16.gmra.mxu0 %v2573
        %v2682 = vpop.f32.mrf.mxu0
        %v2683 = vadd.f32 0.0, %v2682
        %v2684 = vpop.f32.mrf.mxu0
        %v2685 = vadd.f32 0.0, %v2684
        %2686 = vmatmul.bf16.gmra.mxu0 %v2574
        %v2687 = vpop.f32.mrf.mxu0
        %v2688 = vadd.f32 0.0, %v2687
        %v2689 = vpop.f32.mrf.mxu0
        %v2690 = vadd.f32 0.0, %v2689
        %2691 = vmatmul.bf16.gmra.mxu0 %v2575
        %v2692 = vpop.f32.mrf.mxu0
        %v2693 = vadd.f32 0.0, %v2692
        %v2694 = vpop.f32.mrf.mxu0
        %v2695 = vadd.f32 0.0, %v2694
        %2696 = vmatmul.bf16.gmra.mxu0 %v2576
        %v2697 = vpop.f32.mrf.mxu0
        %v2698 = vadd.f32 0.0, %v2697
        %v2699 = vpop.f32.mrf.mxu0
        %v2700 = vadd.f32 0.0, %v2699
        %2701 = vmatmul.bf16.gmra.mxu0 %v2577
        %v2702 = vpop.f32.mrf.mxu0
        %v2703 = vadd.f32 0.0, %v2702
        %v2704 = vpop.f32.mrf.mxu0
        %v2705 = vadd.f32 0.0, %v2704
        %2706 = vmatmul.bf16.gmra.mxu0 %v2578
        %v2707 = vpop.f32.mrf.mxu0
        %v2708 = vadd.f32 0.0, %v2707
        %v2709 = vpop.f32.mrf.mxu0
        %v2710 = vadd.f32 0.0, %v2709
        %2711 = vmatmul.bf16.gmra.mxu0 %v2579
        %v2712 = vpop.f32.mrf.mxu0
        %v2713 = vadd.f32 0.0, %v2712
        %v2714 = vpop.f32.mrf.mxu0
        %v2715 = vadd.f32 0.0, %v2714
        %2716 = vmatmul.bf16.gmra.mxu0 %v2580
        %v2717 = vpop.f32.mrf.mxu0
        %v2718 = vadd.f32 0.0, %v2717
        %v2719 = vpop.f32.mrf.mxu0
        %v2720 = vadd.f32 0.0, %v2719
        %2721 = vmatmul.bf16.gmra.mxu0 %v2581
        %v2722 = vpop.f32.mrf.mxu0
        %v2723 = vadd.f32 0.0, %v2722
        %v2724 = vpop.f32.mrf.mxu0
        %v2725 = vadd.f32 0.0, %v2724
        %2726 = vmatmul.bf16.gmra.mxu0 %v2582
        %v2727 = vpop.f32.mrf.mxu0
        %v2728 = vadd.f32 0.0, %v2727
        %v2729 = vpop.f32.mrf.mxu0
        %v2730 = vadd.f32 0.0, %v2729
        %2731 = vmatmul.bf16.gmra.mxu0 %v2583
        %v2732 = vpop.f32.mrf.mxu0
        %v2733 = vadd.f32 0.0, %v2732
        %v2734 = vpop.f32.mrf.mxu0
        %v2735 = vadd.f32 0.0, %v2734
        %2736 = vdwg.mxu0
        %2737 = vmax.xlane.f32.xlu0 %v2658
        %v2738 = vpop.xlane.xlu0 %2737
        %2739 = vmax.xlane.f32.xlu0 %v2660
        %v2740 = vpop.xlane.xlu0 %2739
        %2741 = vmax.xlane.f32.xlu0 %v2663
        %v2742 = vpop.xlane.xlu0 %2741
        %2743 = vmax.xlane.f32.xlu0 %v2665
        %v2744 = vpop.xlane.xlu0 %2743
        %2745 = vmax.xlane.f32.xlu0 %v2668
        %v2746 = vpop.xlane.xlu0 %2745
        %2747 = vmax.xlane.f32.xlu0 %v2670
        %v2748 = vpop.xlane.xlu0 %2747
        %2749 = vmax.xlane.f32.xlu0 %v2673
        %v2750 = vpop.xlane.xlu0 %2749
        %2751 = vmax.xlane.f32.xlu0 %v2675
        %v2752 = vpop.xlane.xlu0 %2751
        %2753 = vmax.xlane.f32.xlu0 %v2678
        %v2754 = vpop.xlane.xlu0 %2753
        %2755 = vmax.xlane.f32.xlu0 %v2680
        %v2756 = vpop.xlane.xlu0 %2755
        %2757 = vmax.xlane.f32.xlu0 %v2683
        %v2758 = vpop.xlane.xlu0 %2757
        %2759 = vmax.xlane.f32.xlu0 %v2685
        %v2760 = vpop.xlane.xlu0 %2759
        %2761 = vmax.xlane.f32.xlu0 %v2688
        %v2762 = vpop.xlane.xlu0 %2761
        %2763 = vmax.xlane.f32.xlu0 %v2690
        %v2764 = vpop.xlane.xlu0 %2763
        %2765 = vmax.xlane.f32.xlu0 %v2693
        %v2766 = vpop.xlane.xlu0 %2765
        %2767 = vmax.xlane.f32.xlu0 %v2695
        %v2768 = vpop.xlane.xlu0 %2767
        %2769 = vmax.xlane.f32.xlu0 %v2698
        %v2770 = vpop.xlane.xlu0 %2769
        %2771 = vmax.xlane.f32.xlu0 %v2700
        %v2772 = vpop.xlane.xlu0 %2771
        %2773 = vmax.xlane.f32.xlu0 %v2703
        %v2774 = vpop.xlane.xlu0 %2773
        %2775 = vmax.xlane.f32.xlu0 %v2705
        %v2776 = vpop.xlane.xlu0 %2775
        %2777 = vmax.xlane.f32.xlu0 %v2708
        %v2778 = vpop.xlane.xlu0 %2777
        %2779 = vmax.xlane.f32.xlu0 %v2710
        %v2780 = vpop.xlane.xlu0 %2779
        %2781 = vmax.xlane.f32.xlu0 %v2713
        %v2782 = vpop.xlane.xlu0 %2781
        %2783 = vmax.xlane.f32.xlu0 %v2715
        %v2784 = vpop.xlane.xlu0 %2783
        %2785 = vmax.xlane.f32.xlu0 %v2718
        %v2786 = vpop.xlane.xlu0 %2785
        %2787 = vmax.xlane.f32.xlu0 %v2720
        %v2788 = vpop.xlane.xlu0 %2787
        %2789 = vmax.xlane.f32.xlu0 %v2723
        %v2790 = vpop.xlane.xlu0 %2789
        %2791 = vmax.xlane.f32.xlu0 %v2725
        %v2792 = vpop.xlane.xlu0 %2791
        %2793 = vmax.xlane.f32.xlu0 %v2728
        %v2794 = vpop.xlane.xlu0 %2793
        %2795 = vmax.xlane.f32.xlu0 %v2730
        %v2796 = vpop.xlane.xlu0 %2795
        %2797 = vmax.xlane.f32.xlu0 %v2733
        %v2798 = vpop.xlane.xlu0 %2797
        %2799 = vmax.xlane.f32.xlu0 %v2735
        %v2800 = vpop.xlane.xlu0 %2799
        %v2801 = vsub.f32 %v2658, %v2738
        %v2802 = vsub.f32 %v2660, %v2740
        %v2803 = vsub.f32 %v2663, %v2742
        %v2804 = vsub.f32 %v2665, %v2744
        %v2805 = vsub.f32 %v2668, %v2746
        %v2806 = vsub.f32 %v2670, %v2748
        %v2807 = vsub.f32 %v2673, %v2750
        %v2808 = vsub.f32 %v2675, %v2752
        %v2809 = vsub.f32 %v2678, %v2754
        %v2810 = vsub.f32 %v2680, %v2756
        %v2811 = vsub.f32 %v2683, %v2758
        %v2812 = vsub.f32 %v2685, %v2760
        %v2813 = vsub.f32 %v2688, %v2762
        %v2814 = vsub.f32 %v2690, %v2764
        %v2815 = vsub.f32 %v2693, %v2766
        %v2816 = vsub.f32 %v2695, %v2768
        %v2817 = vsub.f32 %v2698, %v2770
        %v2818 = vsub.f32 %v2700, %v2772
        %v2819 = vsub.f32 %v2703, %v2774
        %v2820 = vsub.f32 %v2705, %v2776
        %v2821 = vsub.f32 %v2708, %v2778
        %v2822 = vsub.f32 %v2710, %v2780
        %v2823 = vsub.f32 %v2713, %v2782
        %v2824 = vsub.f32 %v2715, %v2784
        %v2825 = vsub.f32 %v2718, %v2786
        %v2826 = vsub.f32 %v2720, %v2788
        %v2827 = vsub.f32 %v2723, %v2790
        %v2828 = vsub.f32 %v2725, %v2792
        %v2829 = vsub.f32 %v2728, %v2794
        %v2830 = vsub.f32 %v2730, %v2796
        %v2831 = vsub.f32 %v2733, %v2798
        %v2832 = vsub.f32 %v2735, %v2800
        %v2833 = vmul.f32 %v2801, 1.442695
        %v2834 = vpow.pop %v2833
        %v2835 = vmul.f32 %v2802, 1.442695
        %v2836 = vpow.pop %v2835
        %v2837 = vmul.f32 %v2803, 1.442695
        %v2838 = vpow.pop %v2837
        %v2839 = vmul.f32 %v2804, 1.442695
        %v2840 = vpow.pop %v2839
        %v2841 = vmul.f32 %v2805, 1.442695
        %v2842 = vpow.pop %v2841
        %v2843 = vmul.f32 %v2806, 1.442695
        %v2844 = vpow.pop %v2843
        %v2845 = vmul.f32 %v2807, 1.442695
        %v2846 = vpow.pop %v2845
        %v2847 = vmul.f32 %v2808, 1.442695
        %v2848 = vpow.pop %v2847
        %v2849 = vmul.f32 %v2809, 1.442695
        %v2850 = vpow.pop %v2849
        %v2851 = vmul.f32 %v2810, 1.442695
        %v2852 = vpow.pop %v2851
        %v2853 = vmul.f32 %v2811, 1.442695
        %v2854 = vpow.pop %v2853
        %v2855 = vmul.f32 %v2812, 1.442695
        %v2856 = vpow.pop %v2855
        %v2857 = vmul.f32 %v2813, 1.442695
        %v2858 = vpow.pop %v2857
        %v2859 = vmul.f32 %v2814, 1.442695
        %v2860 = vpow.pop %v2859
        %v2861 = vmul.f32 %v2815, 1.442695
        %v2862 = vpow.pop %v2861
        %v2863 = vmul.f32 %v2816, 1.442695
        %v2864 = vpow.pop %v2863
        %v2865 = vmul.f32 %v2817, 1.442695
        %v2866 = vpow.pop %v2865
        %v2867 = vmul.f32 %v2818, 1.442695
        %v2868 = vpow.pop %v2867
        %v2869 = vmul.f32 %v2819, 1.442695
        %v2870 = vpow.pop %v2869
        %v2871 = vmul.f32 %v2820, 1.442695
        %v2872 = vpow.pop %v2871
        %v2873 = vmul.f32 %v2821, 1.442695
        %v2874 = vpow.pop %v2873
        %v2875 = vmul.f32 %v2822, 1.442695
        %v2876 = vpow.pop %v2875
        %v2877 = vmul.f32 %v2823, 1.442695
        %v2878 = vpow.pop %v2877
        %v2879 = vmul.f32 %v2824, 1.442695
        %v2880 = vpow.pop %v2879
        %v2881 = vmul.f32 %v2825, 1.442695
        %v2882 = vpow.pop %v2881
        %v2883 = vmul.f32 %v2826, 1.442695
        %v2884 = vpow.pop %v2883
        %v2885 = vmul.f32 %v2827, 1.442695
        %v2886 = vpow.pop %v2885
        %v2887 = vmul.f32 %v2828, 1.442695
        %v2888 = vpow.pop %v2887
        %v2889 = vmul.f32 %v2829, 1.442695
        %v2890 = vpow.pop %v2889
        %v2891 = vmul.f32 %v2830, 1.442695
        %v2892 = vpow.pop %v2891
        %v2893 = vmul.f32 %v2831, 1.442695
        %v2894 = vpow.pop %v2893
        %v2895 = vmul.f32 %v2832, 1.442695
        %v2896 = vpow.pop %v2895
        %2897 = vadd.xlane.f32.xlu0 %v2834
        %v2898 = vpop.xlane.xlu0 %2897
        %2899 = vadd.xlane.f32.xlu0 %v2836
        %v2900 = vpop.xlane.xlu0 %2899
        %2901 = vadd.xlane.f32.xlu0 %v2838
        %v2902 = vpop.xlane.xlu0 %2901
        %2903 = vadd.xlane.f32.xlu0 %v2840
        %v2904 = vpop.xlane.xlu0 %2903
        %2905 = vadd.xlane.f32.xlu0 %v2842
        %v2906 = vpop.xlane.xlu0 %2905
        %2907 = vadd.xlane.f32.xlu0 %v2844
        %v2908 = vpop.xlane.xlu0 %2907
        %2909 = vadd.xlane.f32.xlu0 %v2846
        %v2910 = vpop.xlane.xlu0 %2909
        %2911 = vadd.xlane.f32.xlu0 %v2848
        %v2912 = vpop.xlane.xlu0 %2911
        %2913 = vadd.xlane.f32.xlu0 %v2850
        %v2914 = vpop.xlane.xlu0 %2913
        %2915 = vadd.xlane.f32.xlu0 %v2852
        %v2916 = vpop.xlane.xlu0 %2915
        %2917 = vadd.xlane.f32.xlu0 %v2854
        %v2918 = vpop.xlane.xlu0 %2917
        %2919 = vadd.xlane.f32.xlu0 %v2856
        %v2920 = vpop.xlane.xlu0 %2919
        %2921 = vadd.xlane.f32.xlu0 %v2858
        %v2922 = vpop.xlane.xlu0 %2921
        %2923 = vadd.xlane.f32.xlu0 %v2860
        %v2924 = vpop.xlane.xlu0 %2923
        %2925 = vadd.xlane.f32.xlu0 %v2862
        %v2926 = vpop.xlane.xlu0 %2925
        %2927 = vadd.xlane.f32.xlu0 %v2864
        %v2928 = vpop.xlane.xlu0 %2927
        %2929 = vadd.xlane.f32.xlu0 %v2866
        %v2930 = vpop.xlane.xlu0 %2929
        %2931 = vadd.xlane.f32.xlu0 %v2868
        %v2932 = vpop.xlane.xlu0 %2931
        %2933 = vadd.xlane.f32.xlu0 %v2870
        %v2934 = vpop.xlane.xlu0 %2933
        %2935 = vadd.xlane.f32.xlu0 %v2872
        %v2936 = vpop.xlane.xlu0 %2935
        %2937 = vadd.xlane.f32.xlu0 %v2874
        %v2938 = vpop.xlane.xlu0 %2937
        %2939 = vadd.xlane.f32.xlu0 %v2876
        %v2940 = vpop.xlane.xlu0 %2939
        %2941 = vadd.xlane.f32.xlu0 %v2878
        %v2942 = vpop.xlane.xlu0 %2941
        %2943 = vadd.xlane.f32.xlu0 %v2880
        %v2944 = vpop.xlane.xlu0 %2943
        %2945 = vadd.xlane.f32.xlu0 %v2882
        %v2946 = vpop.xlane.xlu0 %2945
        %2947 = vadd.xlane.f32.xlu0 %v2884
        %v2948 = vpop.xlane.xlu0 %2947
        %2949 = vadd.xlane.f32.xlu0 %v2886
        %v2950 = vpop.xlane.xlu0 %2949
        %2951 = vadd.xlane.f32.xlu0 %v2888
        %v2952 = vpop.xlane.xlu0 %2951
        %2953 = vadd.xlane.f32.xlu0 %v2890
        %v2954 = vpop.xlane.xlu0 %2953
        %2955 = vadd.xlane.f32.xlu0 %v2892
        %v2956 = vpop.xlane.xlu0 %2955
        %2957 = vadd.xlane.f32.xlu0 %v2894
        %v2958 = vpop.xlane.xlu0 %2957
        %2959 = vadd.xlane.f32.xlu0 %v2896
        %v2960 = vpop.xlane.xlu0 %2959
        %v2961 = vpack.c.bf16 %v2836, %v2834
        %v2962 = vpack.c.bf16 %v2840, %v2838
        %v2963 = vpack.c.bf16 %v2844, %v2842
        %v2964 = vpack.c.bf16 %v2848, %v2846
        %v2965 = vpack.c.bf16 %v2852, %v2850
        %v2966 = vpack.c.bf16 %v2856, %v2854
        %v2967 = vpack.c.bf16 %v2860, %v2858
        %v2968 = vpack.c.bf16 %v2864, %v2862
        %v2969 = vpack.c.bf16 %v2868, %v2866
        %v2970 = vpack.c.bf16 %v2872, %v2870
        %v2971 = vpack.c.bf16 %v2876, %v2874
        %v2972 = vpack.c.bf16 %v2880, %v2878
        %v2973 = vpack.c.bf16 %v2884, %v2882
        %v2974 = vpack.c.bf16 %v2888, %v2886
        %v2975 = vpack.c.bf16 %v2892, %v2890
        %v2976 = vpack.c.bf16 %v2896, %v2894
        %v2993 = vunpack.c.l.b16 %v1801
        %v2994 = vunpack.c.l.b16 %v1802
        %v2995 = vunpack.c.l.b16 %v1803
        %v2996 = vunpack.c.l.b16 %v1804
        %v2997 = vunpack.c.l.b16 %v1805
        %v2998 = vunpack.c.l.b16 %v1806
        %v2999 = vunpack.c.l.b16 %v1807
        %v3000 = vunpack.c.l.b16 %v1808
        %v3001 = vunpack.c.l.b16 %v1809
        %v3002 = vunpack.c.l.b16 %v1810
        %v3003 = vunpack.c.l.b16 %v1811
        %v3004 = vunpack.c.l.b16 %v1812
        %v3005 = vunpack.c.l.b16 %v1813
        %v3006 = vunpack.c.l.b16 %v1814
        %v3007 = vunpack.c.l.b16 %v1815
        %v3008 = vunpack.c.l.b16 %v1816
        %v3009 = vpack.c.b16 %v2994, %v2993
        %v3010 = vpack.c.b16 %v2996, %v2995
        %v3011 = vpack.c.b16 %v2998, %v2997
        %v3012 = vpack.c.b16 %v3000, %v2999
        %v3013 = vpack.c.b16 %v3002, %v3001
        %v3014 = vpack.c.b16 %v3004, %v3003
        %v3015 = vpack.c.b16 %v3006, %v3005
        %v3016 = vpack.c.b16 %v3008, %v3007
        %3025 = vmatpush.bf16.msra.mxu0 %v3016
        %3026 = vmatpush.bf16.msra.mxu0 %v3015
        %3027 = vmatpush.bf16.msra.mxu0 %v3014
        %3028 = vmatpush.bf16.msra.mxu0 %v3013
        %3029 = vmatpush.bf16.msra.mxu0 %v3012
        %3030 = vmatpush.bf16.msra.mxu0 %v3011
        %3031 = vmatpush.bf16.msra.mxu0 %v3010
        %3032 = vmatpush.bf16.msra.mxu0 %v3009
        %3033 = vmatmul.bf16.gmra.mxu0 %v2961
        %v3034 = vpop.f32.mrf.mxu0
        %v3035 = vadd.f32 0.0, %v3034
        %v3036 = vpop.f32.mrf.mxu0
        %v3037 = vadd.f32 0.0, %v3036
        %3038 = vmatmul.bf16.gmra.mxu0 %v2962
        %v3039 = vpop.f32.mrf.mxu0
        %v3040 = vadd.f32 0.0, %v3039
        %v3041 = vpop.f32.mrf.mxu0
        %v3042 = vadd.f32 0.0, %v3041
        %3043 = vmatmul.bf16.gmra.mxu0 %v2963
        %v3044 = vpop.f32.mrf.mxu0
        %v3045 = vadd.f32 0.0, %v3044
        %v3046 = vpop.f32.mrf.mxu0
        %v3047 = vadd.f32 0.0, %v3046
        %3048 = vmatmul.bf16.gmra.mxu0 %v2964
        %v3049 = vpop.f32.mrf.mxu0
        %v3050 = vadd.f32 0.0, %v3049
        %v3051 = vpop.f32.mrf.mxu0
        %v3052 = vadd.f32 0.0, %v3051
        %3053 = vmatmul.bf16.gmra.mxu0 %v2965
        %v3054 = vpop.f32.mrf.mxu0
        %v3055 = vadd.f32 0.0, %v3054
        %v3056 = vpop.f32.mrf.mxu0
        %v3057 = vadd.f32 0.0, %v3056
        %3058 = vmatmul.bf16.gmra.mxu0 %v2966
        %v3059 = vpop.f32.mrf.mxu0
        %v3060 = vadd.f32 0.0, %v3059
        %v3061 = vpop.f32.mrf.mxu0
        %v3062 = vadd.f32 0.0, %v3061
        %3063 = vmatmul.bf16.gmra.mxu0 %v2967
        %v3064 = vpop.f32.mrf.mxu0
        %v3065 = vadd.f32 0.0, %v3064
        %v3066 = vpop.f32.mrf.mxu0
        %v3067 = vadd.f32 0.0, %v3066
        %3068 = vmatmul.bf16.gmra.mxu0 %v2968
        %v3069 = vpop.f32.mrf.mxu0
        %v3070 = vadd.f32 0.0, %v3069
        %v3071 = vpop.f32.mrf.mxu0
        %v3072 = vadd.f32 0.0, %v3071
        %3073 = vmatmul.bf16.gmra.mxu0 %v2969
        %v3074 = vpop.f32.mrf.mxu0
        %v3075 = vadd.f32 0.0, %v3074
        %v3076 = vpop.f32.mrf.mxu0
        %v3077 = vadd.f32 0.0, %v3076
        %3078 = vmatmul.bf16.gmra.mxu0 %v2970
        %v3079 = vpop.f32.mrf.mxu0
        %v3080 = vadd.f32 0.0, %v3079
        %v3081 = vpop.f32.mrf.mxu0
        %v3082 = vadd.f32 0.0, %v3081
        %3083 = vmatmul.bf16.gmra.mxu0 %v2971
        %v3084 = vpop.f32.mrf.mxu0
        %v3085 = vadd.f32 0.0, %v3084
        %v3086 = vpop.f32.mrf.mxu0
        %v3087 = vadd.f32 0.0, %v3086
        %3088 = vmatmul.bf16.gmra.mxu0 %v2972
        %v3089 = vpop.f32.mrf.mxu0
        %v3090 = vadd.f32 0.0, %v3089
        %v3091 = vpop.f32.mrf.mxu0
        %v3092 = vadd.f32 0.0, %v3091
        %3093 = vmatmul.bf16.gmra.mxu0 %v2973
        %v3094 = vpop.f32.mrf.mxu0
        %v3095 = vadd.f32 0.0, %v3094
        %v3096 = vpop.f32.mrf.mxu0
        %v3097 = vadd.f32 0.0, %v3096
        %3098 = vmatmul.bf16.gmra.mxu0 %v2974
        %v3099 = vpop.f32.mrf.mxu0
        %v3100 = vadd.f32 0.0, %v3099
        %v3101 = vpop.f32.mrf.mxu0
        %v3102 = vadd.f32 0.0, %v3101
        %3103 = vmatmul.bf16.gmra.mxu0 %v2975
        %v3104 = vpop.f32.mrf.mxu0
        %v3105 = vadd.f32 0.0, %v3104
        %v3106 = vpop.f32.mrf.mxu0
        %v3107 = vadd.f32 0.0, %v3106
        %3108 = vmatmul.bf16.gmra.mxu0 %v2976
        %v3109 = vpop.f32.mrf.mxu0
        %v3110 = vadd.f32 0.0, %v3109
        %v3111 = vpop.f32.mrf.mxu0
        %v3112 = vadd.f32 0.0, %v3111
        %3113 = vdwg.mxu0
        %v3114 = vrcp.pop %v2898
        %v3115 = vrcp.pop %v2900
        %v3116 = vrcp.pop %v2902
        %v3117 = vrcp.pop %v2904
        %v3118 = vrcp.pop %v2906
        %v3119 = vrcp.pop %v2908
        %v3120 = vrcp.pop %v2910
        %v3121 = vrcp.pop %v2912
        %v3122 = vrcp.pop %v2914
        %v3123 = vrcp.pop %v2916
        %v3124 = vrcp.pop %v2918
        %v3125 = vrcp.pop %v2920
        %v3126 = vrcp.pop %v2922
        %v3127 = vrcp.pop %v2924
        %v3128 = vrcp.pop %v2926
        %v3129 = vrcp.pop %v2928
        %v3130 = vrcp.pop %v2930
        %v3131 = vrcp.pop %v2932
        %v3132 = vrcp.pop %v2934
        %v3133 = vrcp.pop %v2936
        %v3134 = vrcp.pop %v2938
        %v3135 = vrcp.pop %v2940
        %v3136 = vrcp.pop %v2942
        %v3137 = vrcp.pop %v2944
        %v3138 = vrcp.pop %v2946
        %v3139 = vrcp.pop %v2948
        %v3140 = vrcp.pop %v2950
        %v3141 = vrcp.pop %v2952
        %v3142 = vrcp.pop %v2954
        %v3143 = vrcp.pop %v2956
        %v3144 = vrcp.pop %v2958
        %v3145 = vrcp.pop %v2960
        %v3146 = vmul.f32 %v3035, %v3114
        %v3147 = vmul.f32 %v3037, %v3115
        %v3148 = vmul.f32 %v3040, %v3116
        %v3149 = vmul.f32 %v3042, %v3117
        %v3150 = vmul.f32 %v3045, %v3118
        %v3151 = vmul.f32 %v3047, %v3119
        %v3152 = vmul.f32 %v3050, %v3120
        %v3153 = vmul.f32 %v3052, %v3121
        %v3154 = vmul.f32 %v3055, %v3122
        %v3155 = vmul.f32 %v3057, %v3123
        %v3156 = vmul.f32 %v3060, %v3124
        %v3157 = vmul.f32 %v3062, %v3125
        %v3158 = vmul.f32 %v3065, %v3126
        %v3159 = vmul.f32 %v3067, %v3127
        %v3160 = vmul.f32 %v3070, %v3128
        %v3161 = vmul.f32 %v3072, %v3129
        %v3162 = vmul.f32 %v3075, %v3130
        %v3163 = vmul.f32 %v3077, %v3131
        %v3164 = vmul.f32 %v3080, %v3132
        %v3165 = vmul.f32 %v3082, %v3133
        %v3166 = vmul.f32 %v3085, %v3134
        %v3167 = vmul.f32 %v3087, %v3135
        %v3168 = vmul.f32 %v3090, %v3136
        %v3169 = vmul.f32 %v3092, %v3137
        %v3170 = vmul.f32 %v3095, %v3138
        %v3171 = vmul.f32 %v3097, %v3139
        %v3172 = vmul.f32 %v3100, %v3140
        %v3173 = vmul.f32 %v3102, %v3141
        %v3174 = vmul.f32 %v3105, %v3142
        %v3175 = vmul.f32 %v3107, %v3143
        %v3176 = vmul.f32 %v3110, %v3144
        %v3177 = vmul.f32 %v3112, %v3145
        %v3178 = vpack.c.bf16 %v3146, %v3146
        %v3179 = vpack.c.bf16 %v3147, %v3147
        %v3180 = vpack.c.bf16 %v3148, %v3148
        %v3181 = vpack.c.bf16 %v3149, %v3149
        %v3182 = vpack.c.bf16 %v3150, %v3150
        %v3183 = vpack.c.bf16 %v3151, %v3151
        %v3184 = vpack.c.bf16 %v3152, %v3152
        %v3185 = vpack.c.bf16 %v3153, %v3153
        %v3186 = vpack.c.bf16 %v3154, %v3154
        %v3187 = vpack.c.bf16 %v3155, %v3155
        %v3188 = vpack.c.bf16 %v3156, %v3156
        %v3189 = vpack.c.bf16 %v3157, %v3157
        %v3190 = vpack.c.bf16 %v3158, %v3158
        %v3191 = vpack.c.bf16 %v3159, %v3159
        %v3192 = vpack.c.bf16 %v3160, %v3160
        %v3193 = vpack.c.bf16 %v3161, %v3161
        %v3194 = vpack.c.bf16 %v3162, %v3162
        %v3195 = vpack.c.bf16 %v3163, %v3163
        %v3196 = vpack.c.bf16 %v3164, %v3164
        %v3197 = vpack.c.bf16 %v3165, %v3165
        %v3198 = vpack.c.bf16 %v3166, %v3166
        %v3199 = vpack.c.bf16 %v3167, %v3167
        %v3200 = vpack.c.bf16 %v3168, %v3168
        %v3201 = vpack.c.bf16 %v3169, %v3169
        %v3202 = vpack.c.bf16 %v3170, %v3170
        %v3203 = vpack.c.bf16 %v3171, %v3171
        %v3204 = vpack.c.bf16 %v3172, %v3172
        %v3205 = vpack.c.bf16 %v3173, %v3173
        %v3206 = vpack.c.bf16 %v3174, %v3174
        %v3207 = vpack.c.bf16 %v3175, %v3175
        %v3208 = vpack.c.bf16 %v3176, %v3176
        %v3209 = vpack.c.bf16 %v3177, %v3177
        %v3210 = vunpack.c.h.b16 %v2472
        %v3211 = vunpack.c.h.b16 %v2473
        %v3212 = vunpack.c.h.b16 %v2474
        %v3213 = vunpack.c.h.b16 %v2475
        %v3214 = vunpack.c.h.b16 %v2476
        %v3215 = vunpack.c.h.b16 %v2477
        %v3216 = vunpack.c.h.b16 %v2478
        %v3217 = vunpack.c.h.b16 %v2479
        %v3218 = vunpack.c.h.b16 %v2480
        %v3219 = vunpack.c.h.b16 %v2481
        %v3220 = vunpack.c.h.b16 %v2482
        %v3221 = vunpack.c.h.b16 %v2483
        %v3222 = vunpack.c.h.b16 %v2484
        %v3223 = vunpack.c.h.b16 %v2485
        %v3224 = vunpack.c.h.b16 %v2486
        %v3225 = vunpack.c.h.b16 %v2487
        %v3226 = vunpack.c.h.b16 %v2488
        %v3227 = vunpack.c.h.b16 %v2489
        %v3228 = vunpack.c.h.b16 %v2490
        %v3229 = vunpack.c.h.b16 %v2491
        %v3230 = vunpack.c.h.b16 %v2492
        %v3231 = vunpack.c.h.b16 %v2493
        %v3232 = vunpack.c.h.b16 %v2494
        %v3233 = vunpack.c.h.b16 %v2495
        %v3234 = vunpack.c.h.b16 %v2496
        %v3235 = vunpack.c.h.b16 %v2497
        %v3236 = vunpack.c.h.b16 %v2498
        %v3237 = vunpack.c.h.b16 %v2499
        %v3238 = vunpack.c.h.b16 %v2500
        %v3239 = vunpack.c.h.b16 %v2501
        %v3240 = vunpack.c.h.b16 %v2502
        %v3241 = vunpack.c.h.b16 %v2503
        %v3242 = vpack.c.b16 %v3211, %v3210
        %v3243 = vpack.c.b16 %v3213, %v3212
        %v3244 = vpack.c.b16 %v3215, %v3214
        %v3245 = vpack.c.b16 %v3217, %v3216
        %v3246 = vpack.c.b16 %v3219, %v3218
        %v3247 = vpack.c.b16 %v3221, %v3220
        %v3248 = vpack.c.b16 %v3223, %v3222
        %v3249 = vpack.c.b16 %v3225, %v3224
        %v3250 = vpack.c.b16 %v3227, %v3226
        %v3251 = vpack.c.b16 %v3229, %v3228
        %v3252 = vpack.c.b16 %v3231, %v3230
        %v3253 = vpack.c.b16 %v3233, %v3232
        %v3254 = vpack.c.b16 %v3235, %v3234
        %v3255 = vpack.c.b16 %v3237, %v3236
        %v3256 = vpack.c.b16 %v3239, %v3238
        %v3257 = vpack.c.b16 %v3241, %v3240
        %v3274 = vunpack.c.h.b16 %v1783
        %v3275 = vunpack.c.h.b16 %v1784
        %v3276 = vunpack.c.h.b16 %v1785
        %v3277 = vunpack.c.h.b16 %v1786
        %v3278 = vunpack.c.h.b16 %v1787
        %v3279 = vunpack.c.h.b16 %v1788
        %v3280 = vunpack.c.h.b16 %v1789
        %v3281 = vunpack.c.h.b16 %v1790
        %v3282 = vunpack.c.h.b16 %v1791
        %v3283 = vunpack.c.h.b16 %v1792
        %v3284 = vunpack.c.h.b16 %v1793
        %v3285 = vunpack.c.h.b16 %v1794
        %v3286 = vunpack.c.h.b16 %v1795
        %v3287 = vunpack.c.h.b16 %v1796
        %v3288 = vunpack.c.h.b16 %v1797
        %v3289 = vunpack.c.h.b16 %v1798
        %v3290 = vpack.c.b16 %v3275, %v3274
        %v3291 = vpack.c.b16 %v3277, %v3276
        %v3292 = vpack.c.b16 %v3279, %v3278
        %v3293 = vpack.c.b16 %v3281, %v3280
        %v3294 = vpack.c.b16 %v3283, %v3282
        %v3295 = vpack.c.b16 %v3285, %v3284
        %v3296 = vpack.c.b16 %v3287, %v3286
        %v3297 = vpack.c.b16 %v3289, %v3288
        %3306 = vmatpush.bf16.xpose.msra.mxu0 %v3297
        %3307 = vmatpush.bf16.xpose.msra.mxu0 %v3296
        %3308 = vmatpush.bf16.xpose.msra.mxu0 %v3295
        %3309 = vmatpush.bf16.xpose.msra.mxu0 %v3294
        %3310 = vmatpush.bf16.xpose.msra.mxu0 %v3293
        %3311 = vmatpush.bf16.xpose.msra.mxu0 %v3292
        %3312 = vmatpush.bf16.xpose.msra.mxu0 %v3291
        %3313 = vmatpush.bf16.xpose.msra.mxu0 %v3290
        %3314 = vmatmul.bf16.gmra.mxu0 %v3242
        %v3315 = vpop.f32.mrf.mxu0
        %v3316 = vadd.f32 0.0, %v3315
        %v3317 = vpop.f32.mrf.mxu0
        %v3318 = vadd.f32 0.0, %v3317
        %3319 = vmatmul.bf16.gmra.mxu0 %v3243
        %v3320 = vpop.f32.mrf.mxu0
        %v3321 = vadd.f32 0.0, %v3320
        %v3322 = vpop.f32.mrf.mxu0
        %v3323 = vadd.f32 0.0, %v3322
        %3324 = vmatmul.bf16.gmra.mxu0 %v3244
        %v3325 = vpop.f32.mrf.mxu0
        %v3326 = vadd.f32 0.0, %v3325
        %v3327 = vpop.f32.mrf.mxu0
        %v3328 = vadd.f32 0.0, %v3327
        %3329 = vmatmul.bf16.gmra.mxu0 %v3245
        %v3330 = vpop.f32.mrf.mxu0
        %v3331 = vadd.f32 0.0, %v3330
        %v3332 = vpop.f32.mrf.mxu0
        %v3333 = vadd.f32 0.0, %v3332
        %3334 = vmatmul.bf16.gmra.mxu0 %v3246
        %v3335 = vpop.f32.mrf.mxu0
        %v3336 = vadd.f32 0.0, %v3335
        %v3337 = vpop.f32.mrf.mxu0
        %v3338 = vadd.f32 0.0, %v3337
        %3339 = vmatmul.bf16.gmra.mxu0 %v3247
        %v3340 = vpop.f32.mrf.mxu0
        %v3341 = vadd.f32 0.0, %v3340
        %v3342 = vpop.f32.mrf.mxu0
        %v3343 = vadd.f32 0.0, %v3342
        %3344 = vmatmul.bf16.gmra.mxu0 %v3248
        %v3345 = vpop.f32.mrf.mxu0
        %v3346 = vadd.f32 0.0, %v3345
        %v3347 = vpop.f32.mrf.mxu0
        %v3348 = vadd.f32 0.0, %v3347
        %3349 = vmatmul.bf16.gmra.mxu0 %v3249
        %v3350 = vpop.f32.mrf.mxu0
        %v3351 = vadd.f32 0.0, %v3350
        %v3352 = vpop.f32.mrf.mxu0
        %v3353 = vadd.f32 0.0, %v3352
        %3354 = vmatmul.bf16.gmra.mxu0 %v3250
        %v3355 = vpop.f32.mrf.mxu0
        %v3356 = vadd.f32 0.0, %v3355
        %v3357 = vpop.f32.mrf.mxu0
        %v3358 = vadd.f32 0.0, %v3357
        %3359 = vmatmul.bf16.gmra.mxu0 %v3251
        %v3360 = vpop.f32.mrf.mxu0
        %v3361 = vadd.f32 0.0, %v3360
        %v3362 = vpop.f32.mrf.mxu0
        %v3363 = vadd.f32 0.0, %v3362
        %3364 = vmatmul.bf16.gmra.mxu0 %v3252
        %v3365 = vpop.f32.mrf.mxu0
        %v3366 = vadd.f32 0.0, %v3365
        %v3367 = vpop.f32.mrf.mxu0
        %v3368 = vadd.f32 0.0, %v3367
        %3369 = vmatmul.bf16.gmra.mxu0 %v3253
        %v3370 = vpop.f32.mrf.mxu0
        %v3371 = vadd.f32 0.0, %v3370
        %v3372 = vpop.f32.mrf.mxu0
        %v3373 = vadd.f32 0.0, %v3372
        %3374 = vmatmul.bf16.gmra.mxu0 %v3254
        %v3375 = vpop.f32.mrf.mxu0
        %v3376 = vadd.f32 0.0, %v3375
        %v3377 = vpop.f32.mrf.mxu0
        %v3378 = vadd.f32 0.0, %v3377
        %3379 = vmatmul.bf16.gmra.mxu0 %v3255
        %v3380 = vpop.f32.mrf.mxu0
        %v3381 = vadd.f32 0.0, %v3380
        %v3382 = vpop.f32.mrf.mxu0
        %v3383 = vadd.f32 0.0, %v3382
        %3384 = vmatmul.bf16.gmra.mxu0 %v3256
        %v3385 = vpop.f32.mrf.mxu0
        %v3386 = vadd.f32 0.0, %v3385
        %v3387 = vpop.f32.mrf.mxu0
        %v3388 = vadd.f32 0.0, %v3387
        %3389 = vmatmul.bf16.gmra.mxu0 %v3257
        %v3390 = vpop.f32.mrf.mxu0
        %v3391 = vadd.f32 0.0, %v3390
        %v3392 = vpop.f32.mrf.mxu0
        %v3393 = vadd.f32 0.0, %v3392
        %3394 = vdwg.mxu0
        %3395 = vmax.xlane.f32.xlu0 %v3316
        %v3396 = vpop.xlane.xlu0 %3395
        %3397 = vmax.xlane.f32.xlu0 %v3318
        %v3398 = vpop.xlane.xlu0 %3397
        %3399 = vmax.xlane.f32.xlu0 %v3321
        %v3400 = vpop.xlane.xlu0 %3399
        %3401 = vmax.xlane.f32.xlu0 %v3323
        %v3402 = vpop.xlane.xlu0 %3401
        %3403 = vmax.xlane.f32.xlu0 %v3326
        %v3404 = vpop.xlane.xlu0 %3403
        %3405 = vmax.xlane.f32.xlu0 %v3328
        %v3406 = vpop.xlane.xlu0 %3405
        %3407 = vmax.xlane.f32.xlu0 %v3331
        %v3408 = vpop.xlane.xlu0 %3407
        %3409 = vmax.xlane.f32.xlu0 %v3333
        %v3410 = vpop.xlane.xlu0 %3409
        %3411 = vmax.xlane.f32.xlu0 %v3336
        %v3412 = vpop.xlane.xlu0 %3411
        %3413 = vmax.xlane.f32.xlu0 %v3338
        %v3414 = vpop.xlane.xlu0 %3413
        %3415 = vmax.xlane.f32.xlu0 %v3341
        %v3416 = vpop.xlane.xlu0 %3415
        %3417 = vmax.xlane.f32.xlu0 %v3343
        %v3418 = vpop.xlane.xlu0 %3417
        %3419 = vmax.xlane.f32.xlu0 %v3346
        %v3420 = vpop.xlane.xlu0 %3419
        %3421 = vmax.xlane.f32.xlu0 %v3348
        %v3422 = vpop.xlane.xlu0 %3421
        %3423 = vmax.xlane.f32.xlu0 %v3351
        %v3424 = vpop.xlane.xlu0 %3423
        %3425 = vmax.xlane.f32.xlu0 %v3353
        %v3426 = vpop.xlane.xlu0 %3425
        %3427 = vmax.xlane.f32.xlu0 %v3356
        %v3428 = vpop.xlane.xlu0 %3427
        %3429 = vmax.xlane.f32.xlu0 %v3358
        %v3430 = vpop.xlane.xlu0 %3429
        %3431 = vmax.xlane.f32.xlu0 %v3361
        %v3432 = vpop.xlane.xlu0 %3431
        %3433 = vmax.xlane.f32.xlu0 %v3363
        %v3434 = vpop.xlane.xlu0 %3433
        %3435 = vmax.xlane.f32.xlu0 %v3366
        %v3436 = vpop.xlane.xlu0 %3435
        %3437 = vmax.xlane.f32.xlu0 %v3368
        %v3438 = vpop.xlane.xlu0 %3437
        %3439 = vmax.xlane.f32.xlu0 %v3371
        %v3440 = vpop.xlane.xlu0 %3439
        %3441 = vmax.xlane.f32.xlu0 %v3373
        %v3442 = vpop.xlane.xlu0 %3441
        %3443 = vmax.xlane.f32.xlu0 %v3376
        %v3444 = vpop.xlane.xlu0 %3443
        %3445 = vmax.xlane.f32.xlu0 %v3378
        %v3446 = vpop.xlane.xlu0 %3445
        %3447 = vmax.xlane.f32.xlu0 %v3381
        %v3448 = vpop.xlane.xlu0 %3447
        %3449 = vmax.xlane.f32.xlu0 %v3383
        %v3450 = vpop.xlane.xlu0 %3449
        %3451 = vmax.xlane.f32.xlu0 %v3386
        %v3452 = vpop.xlane.xlu0 %3451
        %3453 = vmax.xlane.f32.xlu0 %v3388
        %v3454 = vpop.xlane.xlu0 %3453
        %3455 = vmax.xlane.f32.xlu0 %v3391
        %v3456 = vpop.xlane.xlu0 %3455
        %3457 = vmax.xlane.f32.xlu0 %v3393
        %v3458 = vpop.xlane.xlu0 %3457
        %v3459 = vsub.f32 %v3316, %v3396
        %v3460 = vsub.f32 %v3318, %v3398
        %v3461 = vsub.f32 %v3321, %v3400
        %v3462 = vsub.f32 %v3323, %v3402
        %v3463 = vsub.f32 %v3326, %v3404
        %v3464 = vsub.f32 %v3328, %v3406
        %v3465 = vsub.f32 %v3331, %v3408
        %v3466 = vsub.f32 %v3333, %v3410
        %v3467 = vsub.f32 %v3336, %v3412
        %v3468 = vsub.f32 %v3338, %v3414
        %v3469 = vsub.f32 %v3341, %v3416
        %v3470 = vsub.f32 %v3343, %v3418
        %v3471 = vsub.f32 %v3346, %v3420
        %v3472 = vsub.f32 %v3348, %v3422
        %v3473 = vsub.f32 %v3351, %v3424
        %v3474 = vsub.f32 %v3353, %v3426
        %v3475 = vsub.f32 %v3356, %v3428
        %v3476 = vsub.f32 %v3358, %v3430
        %v3477 = vsub.f32 %v3361, %v3432
        %v3478 = vsub.f32 %v3363, %v3434
        %v3479 = vsub.f32 %v3366, %v3436
        %v3480 = vsub.f32 %v3368, %v3438
        %v3481 = vsub.f32 %v3371, %v3440
        %v3482 = vsub.f32 %v3373, %v3442
        %v3483 = vsub.f32 %v3376, %v3444
        %v3484 = vsub.f32 %v3378, %v3446
        %v3485 = vsub.f32 %v3381, %v3448
        %v3486 = vsub.f32 %v3383, %v3450
        %v3487 = vsub.f32 %v3386, %v3452
        %v3488 = vsub.f32 %v3388, %v3454
        %v3489 = vsub.f32 %v3391, %v3456
        %v3490 = vsub.f32 %v3393, %v3458
        %v3491 = vmul.f32 %v3459, 1.442695
        %v3492 = vpow.pop %v3491
        %v3493 = vmul.f32 %v3460, 1.442695
        %v3494 = vpow.pop %v3493
        %v3495 = vmul.f32 %v3461, 1.442695
        %v3496 = vpow.pop %v3495
        %v3497 = vmul.f32 %v3462, 1.442695
        %v3498 = vpow.pop %v3497
        %v3499 = vmul.f32 %v3463, 1.442695
        %v3500 = vpow.pop %v3499
        %v3501 = vmul.f32 %v3464, 1.442695
        %v3502 = vpow.pop %v3501
        %v3503 = vmul.f32 %v3465, 1.442695
        %v3504 = vpow.pop %v3503
        %v3505 = vmul.f32 %v3466, 1.442695
        %v3506 = vpow.pop %v3505
        %v3507 = vmul.f32 %v3467, 1.442695
        %v3508 = vpow.pop %v3507
        %v3509 = vmul.f32 %v3468, 1.442695
        %v3510 = vpow.pop %v3509
        %v3511 = vmul.f32 %v3469, 1.442695
        %v3512 = vpow.pop %v3511
        %v3513 = vmul.f32 %v3470, 1.442695
        %v3514 = vpow.pop %v3513
        %v3515 = vmul.f32 %v3471, 1.442695
        %v3516 = vpow.pop %v3515
        %v3517 = vmul.f32 %v3472, 1.442695
        %v3518 = vpow.pop %v3517
        %v3519 = vmul.f32 %v3473, 1.442695
        %v3520 = vpow.pop %v3519
        %v3521 = vmul.f32 %v3474, 1.442695
        %v3522 = vpow.pop %v3521
        %v3523 = vmul.f32 %v3475, 1.442695
        %v3524 = vpow.pop %v3523
        %v3525 = vmul.f32 %v3476, 1.442695
        %v3526 = vpow.pop %v3525
        %v3527 = vmul.f32 %v3477, 1.442695
        %v3528 = vpow.pop %v3527
        %v3529 = vmul.f32 %v3478, 1.442695
        %v3530 = vpow.pop %v3529
        %v3531 = vmul.f32 %v3479, 1.442695
        %v3532 = vpow.pop %v3531
        %v3533 = vmul.f32 %v3480, 1.442695
        %v3534 = vpow.pop %v3533
        %v3535 = vmul.f32 %v3481, 1.442695
        %v3536 = vpow.pop %v3535
        %v3537 = vmul.f32 %v3482, 1.442695
        %v3538 = vpow.pop %v3537
        %v3539 = vmul.f32 %v3483, 1.442695
        %v3540 = vpow.pop %v3539
        %v3541 = vmul.f32 %v3484, 1.442695
        %v3542 = vpow.pop %v3541
        %v3543 = vmul.f32 %v3485, 1.442695
        %v3544 = vpow.pop %v3543
        %v3545 = vmul.f32 %v3486, 1.442695
        %v3546 = vpow.pop %v3545
        %v3547 = vmul.f32 %v3487, 1.442695
        %v3548 = vpow.pop %v3547
        %v3549 = vmul.f32 %v3488, 1.442695
        %v3550 = vpow.pop %v3549
        %v3551 = vmul.f32 %v3489, 1.442695
        %v3552 = vpow.pop %v3551
        %v3553 = vmul.f32 %v3490, 1.442695
        %v3554 = vpow.pop %v3553
        %3555 = vadd.xlane.f32.xlu0 %v3492
        %v3556 = vpop.xlane.xlu0 %3555
        %3557 = vadd.xlane.f32.xlu0 %v3494
        %v3558 = vpop.xlane.xlu0 %3557
        %3559 = vadd.xlane.f32.xlu0 %v3496
        %v3560 = vpop.xlane.xlu0 %3559
        %3561 = vadd.xlane.f32.xlu0 %v3498
        %v3562 = vpop.xlane.xlu0 %3561
        %3563 = vadd.xlane.f32.xlu0 %v3500
        %v3564 = vpop.xlane.xlu0 %3563
        %3565 = vadd.xlane.f32.xlu0 %v3502
        %v3566 = vpop.xlane.xlu0 %3565
        %3567 = vadd.xlane.f32.xlu0 %v3504
        %v3568 = vpop.xlane.xlu0 %3567
        %3569 = vadd.xlane.f32.xlu0 %v3506
        %v3570 = vpop.xlane.xlu0 %3569
        %3571 = vadd.xlane.f32.xlu0 %v3508
        %v3572 = vpop.xlane.xlu0 %3571
        %3573 = vadd.xlane.f32.xlu0 %v3510
        %v3574 = vpop.xlane.xlu0 %3573
        %3575 = vadd.xlane.f32.xlu0 %v3512
        %v3576 = vpop.xlane.xlu0 %3575
        %3577 = vadd.xlane.f32.xlu0 %v3514
        %v3578 = vpop.xlane.xlu0 %3577
        %3579 = vadd.xlane.f32.xlu0 %v3516
        %v3580 = vpop.xlane.xlu0 %3579
        %3581 = vadd.xlane.f32.xlu0 %v3518
        %v3582 = vpop.xlane.xlu0 %3581
        %3583 = vadd.xlane.f32.xlu0 %v3520
        %v3584 = vpop.xlane.xlu0 %3583
        %3585 = vadd.xlane.f32.xlu0 %v3522
        %v3586 = vpop.xlane.xlu0 %3585
        %3587 = vadd.xlane.f32.xlu0 %v3524
        %v3588 = vpop.xlane.xlu0 %3587
        %3589 = vadd.xlane.f32.xlu0 %v3526
        %v3590 = vpop.xlane.xlu0 %3589
        %3591 = vadd.xlane.f32.xlu0 %v3528
        %v3592 = vpop.xlane.xlu0 %3591
        %3593 = vadd.xlane.f32.xlu0 %v3530
        %v3594 = vpop.xlane.xlu0 %3593
        %3595 = vadd.xlane.f32.xlu0 %v3532
        %v3596 = vpop.xlane.xlu0 %3595
        %3597 = vadd.xlane.f32.xlu0 %v3534
        %v3598 = vpop.xlane.xlu0 %3597
        %3599 = vadd.xlane.f32.xlu0 %v3536
        %v3600 = vpop.xlane.xlu0 %3599
        %3601 = vadd.xlane.f32.xlu0 %v3538
        %v3602 = vpop.xlane.xlu0 %3601
        %3603 = vadd.xlane.f32.xlu0 %v3540
        %v3604 = vpop.xlane.xlu0 %3603
        %3605 = vadd.xlane.f32.xlu0 %v3542
        %v3606 = vpop.xlane.xlu0 %3605
        %3607 = vadd.xlane.f32.xlu0 %v3544
        %v3608 = vpop.xlane.xlu0 %3607
        %3609 = vadd.xlane.f32.xlu0 %v3546
        %v3610 = vpop.xlane.xlu0 %3609
        %3611 = vadd.xlane.f32.xlu0 %v3548
        %v3612 = vpop.xlane.xlu0 %3611
        %3613 = vadd.xlane.f32.xlu0 %v3550
        %v3614 = vpop.xlane.xlu0 %3613
        %3615 = vadd.xlane.f32.xlu0 %v3552
        %v3616 = vpop.xlane.xlu0 %3615
        %3617 = vadd.xlane.f32.xlu0 %v3554
        %v3618 = vpop.xlane.xlu0 %3617
        %v3619 = vpack.c.bf16 %v3494, %v3492
        %v3620 = vpack.c.bf16 %v3498, %v3496
        %v3621 = vpack.c.bf16 %v3502, %v3500
        %v3622 = vpack.c.bf16 %v3506, %v3504
        %v3623 = vpack.c.bf16 %v3510, %v3508
        %v3624 = vpack.c.bf16 %v3514, %v3512
        %v3625 = vpack.c.bf16 %v3518, %v3516
        %v3626 = vpack.c.bf16 %v3522, %v3520
        %v3627 = vpack.c.bf16 %v3526, %v3524
        %v3628 = vpack.c.bf16 %v3530, %v3528
        %v3629 = vpack.c.bf16 %v3534, %v3532
        %v3630 = vpack.c.bf16 %v3538, %v3536
        %v3631 = vpack.c.bf16 %v3542, %v3540
        %v3632 = vpack.c.bf16 %v3546, %v3544
        %v3633 = vpack.c.bf16 %v3550, %v3548
        %v3634 = vpack.c.bf16 %v3554, %v3552
        %v3635 = vunpack.c.h.b16 %v1801
        %v3636 = vunpack.c.h.b16 %v1802
        %v3637 = vunpack.c.h.b16 %v1803
        %v3638 = vunpack.c.h.b16 %v1804
        %v3639 = vunpack.c.h.b16 %v1805
        %v3640 = vunpack.c.h.b16 %v1806
        %v3641 = vunpack.c.h.b16 %v1807
        %v3642 = vunpack.c.h.b16 %v1808
        %v3643 = vunpack.c.h.b16 %v1809
        %v3644 = vunpack.c.h.b16 %v1810
        %v3645 = vunpack.c.h.b16 %v1811
        %v3646 = vunpack.c.h.b16 %v1812
        %v3647 = vunpack.c.h.b16 %v1813
        %v3648 = vunpack.c.h.b16 %v1814
        %v3649 = vunpack.c.h.b16 %v1815
        %v3650 = vunpack.c.h.b16 %v1816
        %v3651 = vpack.c.b16 %v3636, %v3635
        %v3652 = vpack.c.b16 %v3638, %v3637
        %v3653 = vpack.c.b16 %v3640, %v3639
        %v3654 = vpack.c.b16 %v3642, %v3641
        %v3655 = vpack.c.b16 %v3644, %v3643
        %v3656 = vpack.c.b16 %v3646, %v3645
        %v3657 = vpack.c.b16 %v3648, %v3647
        %v3658 = vpack.c.b16 %v3650, %v3649
        %3667 = vmatpush.bf16.msra.mxu0 %v3658
        %3668 = vmatpush.bf16.msra.mxu0 %v3657
        %3669 = vmatpush.bf16.msra.mxu0 %v3656
        %3670 = vmatpush.bf16.msra.mxu0 %v3655
        %3671 = vmatpush.bf16.msra.mxu0 %v3654
        %3672 = vmatpush.bf16.msra.mxu0 %v3653
        %3673 = vmatpush.bf16.msra.mxu0 %v3652
        %3674 = vmatpush.bf16.msra.mxu0 %v3651
        %3675 = vmatmul.bf16.gmra.mxu0 %v3619
        %v3676 = vpop.f32.mrf.mxu0
        %v3677 = vadd.f32 0.0, %v3676
        %v3678 = vpop.f32.mrf.mxu0
        %v3679 = vadd.f32 0.0, %v3678
        %3680 = vmatmul.bf16.gmra.mxu0 %v3620
        %v3681 = vpop.f32.mrf.mxu0
        %v3682 = vadd.f32 0.0, %v3681
        %v3683 = vpop.f32.mrf.mxu0
        %v3684 = vadd.f32 0.0, %v3683
        %3685 = vmatmul.bf16.gmra.mxu0 %v3621
        %v3686 = vpop.f32.mrf.mxu0
        %v3687 = vadd.f32 0.0, %v3686
        %v3688 = vpop.f32.mrf.mxu0
        %v3689 = vadd.f32 0.0, %v3688
        %3690 = vmatmul.bf16.gmra.mxu0 %v3622
        %v3691 = vpop.f32.mrf.mxu0
        %v3692 = vadd.f32 0.0, %v3691
        %v3693 = vpop.f32.mrf.mxu0
        %v3694 = vadd.f32 0.0, %v3693
        %3695 = vmatmul.bf16.gmra.mxu0 %v3623
        %v3696 = vpop.f32.mrf.mxu0
        %v3697 = vadd.f32 0.0, %v3696
        %v3698 = vpop.f32.mrf.mxu0
        %v3699 = vadd.f32 0.0, %v3698
        %3700 = vmatmul.bf16.gmra.mxu0 %v3624
        %v3701 = vpop.f32.mrf.mxu0
        %v3702 = vadd.f32 0.0, %v3701
        %v3703 = vpop.f32.mrf.mxu0
        %v3704 = vadd.f32 0.0, %v3703
        %3705 = vmatmul.bf16.gmra.mxu0 %v3625
        %v3706 = vpop.f32.mrf.mxu0
        %v3707 = vadd.f32 0.0, %v3706
        %v3708 = vpop.f32.mrf.mxu0
        %v3709 = vadd.f32 0.0, %v3708
        %3710 = vmatmul.bf16.gmra.mxu0 %v3626
        %v3711 = vpop.f32.mrf.mxu0
        %v3712 = vadd.f32 0.0, %v3711
        %v3713 = vpop.f32.mrf.mxu0
        %v3714 = vadd.f32 0.0, %v3713
        %3715 = vmatmul.bf16.gmra.mxu0 %v3627
        %v3716 = vpop.f32.mrf.mxu0
        %v3717 = vadd.f32 0.0, %v3716
        %v3718 = vpop.f32.mrf.mxu0
        %v3719 = vadd.f32 0.0, %v3718
        %3720 = vmatmul.bf16.gmra.mxu0 %v3628
        %v3721 = vpop.f32.mrf.mxu0
        %v3722 = vadd.f32 0.0, %v3721
        %v3723 = vpop.f32.mrf.mxu0
        %v3724 = vadd.f32 0.0, %v3723
        %3725 = vmatmul.bf16.gmra.mxu0 %v3629
        %v3726 = vpop.f32.mrf.mxu0
        %v3727 = vadd.f32 0.0, %v3726
        %v3728 = vpop.f32.mrf.mxu0
        %v3729 = vadd.f32 0.0, %v3728
        %3730 = vmatmul.bf16.gmra.mxu0 %v3630
        %v3731 = vpop.f32.mrf.mxu0
        %v3732 = vadd.f32 0.0, %v3731
        %v3733 = vpop.f32.mrf.mxu0
        %v3734 = vadd.f32 0.0, %v3733
        %3735 = vmatmul.bf16.gmra.mxu0 %v3631
        %v3736 = vpop.f32.mrf.mxu0
        %v3737 = vadd.f32 0.0, %v3736
        %v3738 = vpop.f32.mrf.mxu0
        %v3739 = vadd.f32 0.0, %v3738
        %3740 = vmatmul.bf16.gmra.mxu0 %v3632
        %v3741 = vpop.f32.mrf.mxu0
        %v3742 = vadd.f32 0.0, %v3741
        %v3743 = vpop.f32.mrf.mxu0
        %v3744 = vadd.f32 0.0, %v3743
        %3745 = vmatmul.bf16.gmra.mxu0 %v3633
        %v3746 = vpop.f32.mrf.mxu0
        %v3747 = vadd.f32 0.0, %v3746
        %v3748 = vpop.f32.mrf.mxu0
        %v3749 = vadd.f32 0.0, %v3748
        %3750 = vmatmul.bf16.gmra.mxu0 %v3634
        %v3751 = vpop.f32.mrf.mxu0
        %v3752 = vadd.f32 0.0, %v3751
        %v3753 = vpop.f32.mrf.mxu0
        %v3754 = vadd.f32 0.0, %v3753
        %3755 = vdwg.mxu0
        %v3756 = vrcp.pop %v3556
        %v3757 = vrcp.pop %v3558
        %v3758 = vrcp.pop %v3560
        %v3759 = vrcp.pop %v3562
        %v3760 = vrcp.pop %v3564
        %v3761 = vrcp.pop %v3566
        %v3762 = vrcp.pop %v3568
        %v3763 = vrcp.pop %v3570
        %v3764 = vrcp.pop %v3572
        %v3765 = vrcp.pop %v3574
        %v3766 = vrcp.pop %v3576
        %v3767 = vrcp.pop %v3578
        %v3768 = vrcp.pop %v3580
        %v3769 = vrcp.pop %v3582
        %v3770 = vrcp.pop %v3584
        %v3771 = vrcp.pop %v3586
        %v3772 = vrcp.pop %v3588
        %v3773 = vrcp.pop %v3590
        %v3774 = vrcp.pop %v3592
        %v3775 = vrcp.pop %v3594
        %v3776 = vrcp.pop %v3596
        %v3777 = vrcp.pop %v3598
        %v3778 = vrcp.pop %v3600
        %v3779 = vrcp.pop %v3602
        %v3780 = vrcp.pop %v3604
        %v3781 = vrcp.pop %v3606
        %v3782 = vrcp.pop %v3608
        %v3783 = vrcp.pop %v3610
        %v3784 = vrcp.pop %v3612
        %v3785 = vrcp.pop %v3614
        %v3786 = vrcp.pop %v3616
        %v3787 = vrcp.pop %v3618
        %v3788 = vmul.f32 %v3677, %v3756
        %v3789 = vmul.f32 %v3679, %v3757
        %v3790 = vmul.f32 %v3682, %v3758
        %v3791 = vmul.f32 %v3684, %v3759
        %v3792 = vmul.f32 %v3687, %v3760
        %v3793 = vmul.f32 %v3689, %v3761
        %v3794 = vmul.f32 %v3692, %v3762
        %v3795 = vmul.f32 %v3694, %v3763
        %v3796 = vmul.f32 %v3697, %v3764
        %v3797 = vmul.f32 %v3699, %v3765
        %v3798 = vmul.f32 %v3702, %v3766
        %v3799 = vmul.f32 %v3704, %v3767
        %v3800 = vmul.f32 %v3707, %v3768
        %v3801 = vmul.f32 %v3709, %v3769
        %v3802 = vmul.f32 %v3712, %v3770
        %v3803 = vmul.f32 %v3714, %v3771
        %v3804 = vmul.f32 %v3717, %v3772
        %v3805 = vmul.f32 %v3719, %v3773
        %v3806 = vmul.f32 %v3722, %v3774
        %v3807 = vmul.f32 %v3724, %v3775
        %v3808 = vmul.f32 %v3727, %v3776
        %v3809 = vmul.f32 %v3729, %v3777
        %v3810 = vmul.f32 %v3732, %v3778
        %v3811 = vmul.f32 %v3734, %v3779
        %v3812 = vmul.f32 %v3737, %v3780
        %v3813 = vmul.f32 %v3739, %v3781
        %v3814 = vmul.f32 %v3742, %v3782
        %v3815 = vmul.f32 %v3744, %v3783
        %v3816 = vmul.f32 %v3747, %v3784
        %v3817 = vmul.f32 %v3749, %v3785
        %v3818 = vmul.f32 %v3752, %v3786
        %v3819 = vmul.f32 %v3754, %v3787
        %v3820 = vpack.c.bf16 %v3788, %v3788
        %v3821 = vpack.c.bf16 %v3789, %v3789
        %v3822 = vpack.c.bf16 %v3790, %v3790
        %v3823 = vpack.c.bf16 %v3791, %v3791
        %v3824 = vpack.c.bf16 %v3792, %v3792
        %v3825 = vpack.c.bf16 %v3793, %v3793
        %v3826 = vpack.c.bf16 %v3794, %v3794
        %v3827 = vpack.c.bf16 %v3795, %v3795
        %v3828 = vpack.c.bf16 %v3796, %v3796
        %v3829 = vpack.c.bf16 %v3797, %v3797
        %v3830 = vpack.c.bf16 %v3798, %v3798
        %v3831 = vpack.c.bf16 %v3799, %v3799
        %v3832 = vpack.c.bf16 %v3800, %v3800
        %v3833 = vpack.c.bf16 %v3801, %v3801
        %v3834 = vpack.c.bf16 %v3802, %v3802
        %v3835 = vpack.c.bf16 %v3803, %v3803
        %v3836 = vpack.c.bf16 %v3804, %v3804
        %v3837 = vpack.c.bf16 %v3805, %v3805
        %v3838 = vpack.c.bf16 %v3806, %v3806
        %v3839 = vpack.c.bf16 %v3807, %v3807
        %v3840 = vpack.c.bf16 %v3808, %v3808
        %v3841 = vpack.c.bf16 %v3809, %v3809
        %v3842 = vpack.c.bf16 %v3810, %v3810
        %v3843 = vpack.c.bf16 %v3811, %v3811
        %v3844 = vpack.c.bf16 %v3812, %v3812
        %v3845 = vpack.c.bf16 %v3813, %v3813
        %v3846 = vpack.c.bf16 %v3814, %v3814
        %v3847 = vpack.c.bf16 %v3815, %v3815
        %v3848 = vpack.c.bf16 %v3816, %v3816
        %v3849 = vpack.c.bf16 %v3817, %v3817
        %v3850 = vpack.c.bf16 %v3818, %v3818
        %v3851 = vpack.c.bf16 %v3819, %v3819
        %v3884 = vunpack.c.l.b16 %v3178
        %v3885 = vunpack.c.l.b16 %v3179
        %v3886 = vunpack.c.l.b16 %v3180
        %v3887 = vunpack.c.l.b16 %v3181
        %v3888 = vunpack.c.l.b16 %v3182
        %v3889 = vunpack.c.l.b16 %v3183
        %v3890 = vunpack.c.l.b16 %v3184
        %v3891 = vunpack.c.l.b16 %v3185
        %v3892 = vunpack.c.l.b16 %v3186
        %v3893 = vunpack.c.l.b16 %v3187
        %v3894 = vunpack.c.l.b16 %v3188
        %v3895 = vunpack.c.l.b16 %v3189
        %v3896 = vunpack.c.l.b16 %v3190
        %v3897 = vunpack.c.l.b16 %v3191
        %v3898 = vunpack.c.l.b16 %v3192
        %v3899 = vunpack.c.l.b16 %v3193
        %v3900 = vunpack.c.l.b16 %v3194
        %v3901 = vunpack.c.l.b16 %v3195
        %v3902 = vunpack.c.l.b16 %v3196
        %v3903 = vunpack.c.l.b16 %v3197
        %v3904 = vunpack.c.l.b16 %v3198
        %v3905 = vunpack.c.l.b16 %v3199
        %v3906 = vunpack.c.l.b16 %v3200
        %v3907 = vunpack.c.l.b16 %v3201
        %v3908 = vunpack.c.l.b16 %v3202
        %v3909 = vunpack.c.l.b16 %v3203
        %v3910 = vunpack.c.l.b16 %v3204
        %v3911 = vunpack.c.l.b16 %v3205
        %v3912 = vunpack.c.l.b16 %v3206
        %v3913 = vunpack.c.l.b16 %v3207
        %v3914 = vunpack.c.l.b16 %v3208
        %v3915 = vunpack.c.l.b16 %v3209
        %v3916 = vpack.c.b16 %v3885, %v3884
        %v3917 = vpack.c.b16 %v3887, %v3886
        %v3918 = vpack.c.b16 %v3889, %v3888
        %v3919 = vpack.c.b16 %v3891, %v3890
        %v3920 = vpack.c.b16 %v3893, %v3892
        %v3921 = vpack.c.b16 %v3895, %v3894
        %v3922 = vpack.c.b16 %v3897, %v3896
        %v3923 = vpack.c.b16 %v3899, %v3898
        %v3924 = vpack.c.b16 %v3901, %v3900
        %v3925 = vpack.c.b16 %v3903, %v3902
        %v3926 = vpack.c.b16 %v3905, %v3904
        %v3927 = vpack.c.b16 %v3907, %v3906
        %v3928 = vpack.c.b16 %v3909, %v3908
        %v3929 = vpack.c.b16 %v3911, %v3910
        %v3930 = vpack.c.b16 %v3913, %v3912
        %v3931 = vpack.c.b16 %v3915, %v3914
        %v3980 = vunpack.c.l.b16 %v3820
        %v3981 = vunpack.c.l.b16 %v3821
        %v3982 = vunpack.c.l.b16 %v3822
        %v3983 = vunpack.c.l.b16 %v3823
        %v3984 = vunpack.c.l.b16 %v3824
        %v3985 = vunpack.c.l.b16 %v3825
        %v3986 = vunpack.c.l.b16 %v3826
        %v3987 = vunpack.c.l.b16 %v3827
        %v3988 = vunpack.c.l.b16 %v3828
        %v3989 = vunpack.c.l.b16 %v3829
        %v3990 = vunpack.c.l.b16 %v3830
        %v3991 = vunpack.c.l.b16 %v3831
        %v3992 = vunpack.c.l.b16 %v3832
        %v3993 = vunpack.c.l.b16 %v3833
        %v3994 = vunpack.c.l.b16 %v3834
        %v3995 = vunpack.c.l.b16 %v3835
        %v3996 = vunpack.c.l.b16 %v3836
        %v3997 = vunpack.c.l.b16 %v3837
        %v3998 = vunpack.c.l.b16 %v3838
        %v3999 = vunpack.c.l.b16 %v3839
        %v4000 = vunpack.c.l.b16 %v3840
        %v4001 = vunpack.c.l.b16 %v3841
        %v4002 = vunpack.c.l.b16 %v3842
        %v4003 = vunpack.c.l.b16 %v3843
        %v4004 = vunpack.c.l.b16 %v3844
        %v4005 = vunpack.c.l.b16 %v3845
        %v4006 = vunpack.c.l.b16 %v3846
        %v4007 = vunpack.c.l.b16 %v3847
        %v4008 = vunpack.c.l.b16 %v3848
        %v4009 = vunpack.c.l.b16 %v3849
        %v4010 = vunpack.c.l.b16 %v3850
        %v4011 = vunpack.c.l.b16 %v3851
        %v4012 = vpack.c.b16 %v3981, %v3980
        %v4013 = vpack.c.b16 %v3983, %v3982
        %v4014 = vpack.c.b16 %v3985, %v3984
        %v4015 = vpack.c.b16 %v3987, %v3986
        %v4016 = vpack.c.b16 %v3989, %v3988
        %v4017 = vpack.c.b16 %v3991, %v3990
        %v4018 = vpack.c.b16 %v3993, %v3992
        %v4019 = vpack.c.b16 %v3995, %v3994
        %v4020 = vpack.c.b16 %v3997, %v3996
        %v4021 = vpack.c.b16 %v3999, %v3998
        %v4022 = vpack.c.b16 %v4001, %v4000
        %v4023 = vpack.c.b16 %v4003, %v4002
        %v4024 = vpack.c.b16 %v4005, %v4004
        %v4025 = vpack.c.b16 %v4007, %v4006
        %v4026 = vpack.c.b16 %v4009, %v4008
        %v4027 = vpack.c.b16 %v4011, %v4010
        %v4044 = vld [vmem:[#allocation2] sm:$0xff]
        %v4045 = vld [vmem:[#allocation2 + $0x8] sm:$0xff]
        %v4046 = vld [vmem:[#allocation2 + $0x10] sm:$0xff]
        %v4047 = vld [vmem:[#allocation2 + $0x18] sm:$0xff]
        %v4048 = vld [vmem:[#allocation2 + $0x20] sm:$0xff]
        %v4049 = vld [vmem:[#allocation2 + $0x28] sm:$0xff]
        %v4050 = vld [vmem:[#allocation2 + $0x30] sm:$0xff]
        %v4051 = vld [vmem:[#allocation2 + $0x38] sm:$0xff]
        %v4052 = vld [vmem:[#allocation2 + $0x40] sm:$0xff]
        %v4053 = vld [vmem:[#allocation2 + $0x48] sm:$0xff]
        %v4054 = vld [vmem:[#allocation2 + $0x50] sm:$0xff]
        %v4055 = vld [vmem:[#allocation2 + $0x58] sm:$0xff]
        %v4056 = vld [vmem:[#allocation2 + $0x60] sm:$0xff]
        %v4057 = vld [vmem:[#allocation2 + $0x68] sm:$0xff]
        %v4058 = vld [vmem:[#allocation2 + $0x70] sm:$0xff]
        %v4059 = vld [vmem:[#allocation2 + $0x78] sm:$0xff]
        %v4060 = vld [vmem:[#allocation2 + $0x80] sm:$0xff]
        %v4061 = vld [vmem:[#allocation2 + $0x88] sm:$0xff]
        %v4062 = vld [vmem:[#allocation2 + $0x90] sm:$0xff]
        %v4063 = vld [vmem:[#allocation2 + $0x98] sm:$0xff]
        %v4064 = vld [vmem:[#allocation2 + $0xa0] sm:$0xff]
        %v4065 = vld [vmem:[#allocation2 + $0xa8] sm:$0xff]
        %v4066 = vld [vmem:[#allocation2 + $0xb0] sm:$0xff]
        %v4067 = vld [vmem:[#allocation2 + $0xb8] sm:$0xff]
        %v4068 = vld [vmem:[#allocation2 + $0xc0] sm:$0xff]
        %v4069 = vld [vmem:[#allocation2 + $0xc8] sm:$0xff]
        %v4070 = vld [vmem:[#allocation2 + $0xd0] sm:$0xff]
        %v4071 = vld [vmem:[#allocation2 + $0xd8] sm:$0xff]
        %v4072 = vld [vmem:[#allocation2 + $0xe0] sm:$0xff]
        %v4073 = vld [vmem:[#allocation2 + $0xe8] sm:$0xff]
        %v4074 = vld [vmem:[#allocation2 + $0xf0] sm:$0xff]
        %v4075 = vld [vmem:[#allocation2 + $0xf8] sm:$0xff]
        %v4076 = vld [vmem:[#allocation2 + $0x100] sm:$0xff]
        %v4077 = vld [vmem:[#allocation2 + $0x108] sm:$0xff]
        %v4078 = vld [vmem:[#allocation2 + $0x110] sm:$0xff]
        %v4079 = vld [vmem:[#allocation2 + $0x118] sm:$0xff]
        %v4080 = vld [vmem:[#allocation2 + $0x120] sm:$0xff]
        %v4081 = vld [vmem:[#allocation2 + $0x128] sm:$0xff]
        %v4082 = vld [vmem:[#allocation2 + $0x130] sm:$0xff]
        %v4083 = vld [vmem:[#allocation2 + $0x138] sm:$0xff]
        %v4084 = vld [vmem:[#allocation2 + $0x140] sm:$0xff]
        %v4085 = vld [vmem:[#allocation2 + $0x148] sm:$0xff]
        %v4086 = vld [vmem:[#allocation2 + $0x150] sm:$0xff]
        %v4087 = vld [vmem:[#allocation2 + $0x158] sm:$0xff]
        %v4088 = vld [vmem:[#allocation2 + $0x160] sm:$0xff]
        %v4089 = vld [vmem:[#allocation2 + $0x168] sm:$0xff]
        %v4090 = vld [vmem:[#allocation2 + $0x170] sm:$0xff]
        %v4091 = vld [vmem:[#allocation2 + $0x178] sm:$0xff]
        %v4092 = vld [vmem:[#allocation2 + $0x180] sm:$0xff]
        %v4093 = vld [vmem:[#allocation2 + $0x188] sm:$0xff]
        %v4094 = vld [vmem:[#allocation2 + $0x190] sm:$0xff]
        %v4095 = vld [vmem:[#allocation2 + $0x198] sm:$0xff]
        %v4096 = vld [vmem:[#allocation2 + $0x1a0] sm:$0xff]
        %v4097 = vld [vmem:[#allocation2 + $0x1a8] sm:$0xff]
        %v4098 = vld [vmem:[#allocation2 + $0x1b0] sm:$0xff]
        %v4099 = vld [vmem:[#allocation2 + $0x1b8] sm:$0xff]
        %v4100 = vld [vmem:[#allocation2 + $0x1c0] sm:$0xff]
        %v4101 = vld [vmem:[#allocation2 + $0x1c8] sm:$0xff]
        %v4102 = vld [vmem:[#allocation2 + $0x1d0] sm:$0xff]
        %v4103 = vld [vmem:[#allocation2 + $0x1d8] sm:$0xff]
        %v4104 = vld [vmem:[#allocation2 + $0x1e0] sm:$0xff]
        %v4105 = vld [vmem:[#allocation2 + $0x1e8] sm:$0xff]
        %v4106 = vld [vmem:[#allocation2 + $0x1f0] sm:$0xff]
        %v4107 = vld [vmem:[#allocation2 + $0x1f8] sm:$0xff]
        %s4108 = smul.addr %s1913, 4
        %s4109 = scalar_lea.vmem [#allocation16], %s4108
        %v4110 = vld [vmem:[%s4109] sm:$0xff]
        %v4111 = vld [vmem:[%s4109 + $0x8] sm:$0xff]
        %v4112 = vld [vmem:[%s4109 + $0x10] sm:$0xff]
        %v4113 = vld [vmem:[%s4109 + $0x18] sm:$0xff]
        %v4114 = vld [vmem:[%s4109 + $0x20] sm:$0xff]
        %v4115 = vld [vmem:[%s4109 + $0x28] sm:$0xff]
        %v4116 = vld [vmem:[%s4109 + $0x30] sm:$0xff]
        %v4117 = vld [vmem:[%s4109 + $0x38] sm:$0xff]
        %v4118 = vld [vmem:[%s4109 + $0x40] sm:$0xff]
        %v4119 = vld [vmem:[%s4109 + $0x48] sm:$0xff]
        %v4120 = vld [vmem:[%s4109 + $0x50] sm:$0xff]
        %v4121 = vld [vmem:[%s4109 + $0x58] sm:$0xff]
        %v4122 = vld [vmem:[%s4109 + $0x60] sm:$0xff]
        %v4123 = vld [vmem:[%s4109 + $0x68] sm:$0xff]
        %v4124 = vld [vmem:[%s4109 + $0x70] sm:$0xff]
        %v4125 = vld [vmem:[%s4109 + $0x78] sm:$0xff]
        %v4126 = vld [vmem:[%s4109 + $0x80] sm:$0xff]
        %v4127 = vld [vmem:[%s4109 + $0x88] sm:$0xff]
        %v4128 = vld [vmem:[%s4109 + $0x90] sm:$0xff]
        %v4129 = vld [vmem:[%s4109 + $0x98] sm:$0xff]
        %v4130 = vld [vmem:[%s4109 + $0xa0] sm:$0xff]
        %v4131 = vld [vmem:[%s4109 + $0xa8] sm:$0xff]
        %v4132 = vld [vmem:[%s4109 + $0xb0] sm:$0xff]
        %v4133 = vld [vmem:[%s4109 + $0xb8] sm:$0xff]
        %v4134 = vld [vmem:[%s4109 + $0xc0] sm:$0xff]
        %v4135 = vld [vmem:[%s4109 + $0xc8] sm:$0xff]
        %v4136 = vld [vmem:[%s4109 + $0xd0] sm:$0xff]
        %v4137 = vld [vmem:[%s4109 + $0xd8] sm:$0xff]
        %v4138 = vld [vmem:[%s4109 + $0xe0] sm:$0xff]
        %v4139 = vld [vmem:[%s4109 + $0xe8] sm:$0xff]
        %v4140 = vld [vmem:[%s4109 + $0xf0] sm:$0xff]
        %v4141 = vld [vmem:[%s4109 + $0xf8] sm:$0xff]
        %v4174 = vunpack.c.l.b16 %v4110
        %v4175 = vunpack.c.h.b16 %v4110
        %v4176 = vunpack.c.l.b16 %v4111
        %v4177 = vunpack.c.h.b16 %v4111
        %v4178 = vunpack.c.l.b16 %v4112
        %v4179 = vunpack.c.h.b16 %v4112
        %v4180 = vunpack.c.l.b16 %v4113
        %v4181 = vunpack.c.h.b16 %v4113
        %v4182 = vunpack.c.l.b16 %v4114
        %v4183 = vunpack.c.h.b16 %v4114
        %v4184 = vunpack.c.l.b16 %v4115
        %v4185 = vunpack.c.h.b16 %v4115
        %v4186 = vunpack.c.l.b16 %v4116
        %v4187 = vunpack.c.h.b16 %v4116
        %v4188 = vunpack.c.l.b16 %v4117
        %v4189 = vunpack.c.h.b16 %v4117
        %v4190 = vunpack.c.l.b16 %v4118
        %v4191 = vunpack.c.h.b16 %v4118
        %v4192 = vunpack.c.l.b16 %v4119
        %v4193 = vunpack.c.h.b16 %v4119
        %v4194 = vunpack.c.l.b16 %v4120
        %v4195 = vunpack.c.h.b16 %v4120
        %v4196 = vunpack.c.l.b16 %v4121
        %v4197 = vunpack.c.h.b16 %v4121
        %v4198 = vunpack.c.l.b16 %v4122
        %v4199 = vunpack.c.h.b16 %v4122
        %v4200 = vunpack.c.l.b16 %v4123
        %v4201 = vunpack.c.h.b16 %v4123
        %v4202 = vunpack.c.l.b16 %v4124
        %v4203 = vunpack.c.h.b16 %v4124
        %v4204 = vunpack.c.l.b16 %v4125
        %v4205 = vunpack.c.h.b16 %v4125
        %v4206 = vunpack.c.l.b16 %v4126
        %v4207 = vunpack.c.h.b16 %v4126
        %v4208 = vunpack.c.l.b16 %v4127
        %v4209 = vunpack.c.h.b16 %v4127
        %v4210 = vunpack.c.l.b16 %v4128
        %v4211 = vunpack.c.h.b16 %v4128
        %v4212 = vunpack.c.l.b16 %v4129
        %v4213 = vunpack.c.h.b16 %v4129
        %v4214 = vunpack.c.l.b16 %v4130
        %v4215 = vunpack.c.h.b16 %v4130
        %v4216 = vunpack.c.l.b16 %v4131
        %v4217 = vunpack.c.h.b16 %v4131
        %v4218 = vunpack.c.l.b16 %v4132
        %v4219 = vunpack.c.h.b16 %v4132
        %v4220 = vunpack.c.l.b16 %v4133
        %v4221 = vunpack.c.h.b16 %v4133
        %v4222 = vunpack.c.l.b16 %v4134
        %v4223 = vunpack.c.h.b16 %v4134
        %v4224 = vunpack.c.l.b16 %v4135
        %v4225 = vunpack.c.h.b16 %v4135
        %v4226 = vunpack.c.l.b16 %v4136
        %v4227 = vunpack.c.h.b16 %v4136
        %v4228 = vunpack.c.l.b16 %v4137
        %v4229 = vunpack.c.h.b16 %v4137
        %v4230 = vunpack.c.l.b16 %v4138
        %v4231 = vunpack.c.h.b16 %v4138
        %v4232 = vunpack.c.l.b16 %v4139
        %v4233 = vunpack.c.h.b16 %v4139
        %v4234 = vunpack.c.l.b16 %v4140
        %v4235 = vunpack.c.h.b16 %v4140
        %v4236 = vunpack.c.l.b16 %v4141
        %v4237 = vunpack.c.h.b16 %v4141
        %v4238 = vpack.c.b16 %v4176, %v4174
        %v4239 = vpack.c.b16 %v4177, %v4175
        %v4240 = vpack.c.b16 %v4180, %v4178
        %v4241 = vpack.c.b16 %v4181, %v4179
        %v4242 = vpack.c.b16 %v4184, %v4182
        %v4243 = vpack.c.b16 %v4185, %v4183
        %v4244 = vpack.c.b16 %v4188, %v4186
        %v4245 = vpack.c.b16 %v4189, %v4187
        %v4246 = vpack.c.b16 %v4192, %v4190
        %v4247 = vpack.c.b16 %v4193, %v4191
        %v4248 = vpack.c.b16 %v4196, %v4194
        %v4249 = vpack.c.b16 %v4197, %v4195
        %v4250 = vpack.c.b16 %v4200, %v4198
        %v4251 = vpack.c.b16 %v4201, %v4199
        %v4252 = vpack.c.b16 %v4204, %v4202
        %v4253 = vpack.c.b16 %v4205, %v4203
        %v4254 = vpack.c.b16 %v4208, %v4206
        %v4255 = vpack.c.b16 %v4209, %v4207
        %v4256 = vpack.c.b16 %v4212, %v4210
        %v4257 = vpack.c.b16 %v4213, %v4211
        %v4258 = vpack.c.b16 %v4216, %v4214
        %v4259 = vpack.c.b16 %v4217, %v4215
        %v4260 = vpack.c.b16 %v4220, %v4218
        %v4261 = vpack.c.b16 %v4221, %v4219
        %v4262 = vpack.c.b16 %v4224, %v4222
        %v4263 = vpack.c.b16 %v4225, %v4223
        %v4264 = vpack.c.b16 %v4228, %v4226
        %v4265 = vpack.c.b16 %v4229, %v4227
        %v4266 = vpack.c.b16 %v4232, %v4230
        %v4267 = vpack.c.b16 %v4233, %v4231
        %v4268 = vpack.c.b16 %v4236, %v4234
        %v4269 = vpack.c.b16 %v4237, %v4235
        %4302 = vmatpush.bf16.msra.mxu0 %v4252
        %4303 = vmatpush.bf16.msra.mxu0 %v4250
        %4304 = vmatpush.bf16.msra.mxu0 %v4248
        %4305 = vmatpush.bf16.msra.mxu0 %v4246
        %4306 = vmatpush.bf16.msra.mxu0 %v4244
        %4307 = vmatpush.bf16.msra.mxu0 %v4242
        %4308 = vmatpush.bf16.msra.mxu0 %v4240
        %4309 = vmatpush.bf16.msra.mxu0 %v4238
        %4310 = vmatmul.bf16.gmra.mxu0 %v3916
        %v4311 = vpop.f32.mrf.mxu0
        %v4312 = vadd.f32 0.0, %v4311
        %v4313 = vpop.f32.mrf.mxu0
        %v4314 = vadd.f32 0.0, %v4313
        %4315 = vmatmul.bf16.gmra.mxu0 %v3917
        %v4316 = vpop.f32.mrf.mxu0
        %v4317 = vadd.f32 0.0, %v4316
        %v4318 = vpop.f32.mrf.mxu0
        %v4319 = vadd.f32 0.0, %v4318
        %4320 = vmatmul.bf16.gmra.mxu0 %v3918
        %v4321 = vpop.f32.mrf.mxu0
        %v4322 = vadd.f32 0.0, %v4321
        %v4323 = vpop.f32.mrf.mxu0
        %v4324 = vadd.f32 0.0, %v4323
        %4325 = vmatmul.bf16.gmra.mxu0 %v3919
        %v4326 = vpop.f32.mrf.mxu0
        %v4327 = vadd.f32 0.0, %v4326
        %v4328 = vpop.f32.mrf.mxu0
        %v4329 = vadd.f32 0.0, %v4328
        %4330 = vmatmul.bf16.gmra.mxu0 %v3920
        %v4331 = vpop.f32.mrf.mxu0
        %v4332 = vadd.f32 0.0, %v4331
        %v4333 = vpop.f32.mrf.mxu0
        %v4334 = vadd.f32 0.0, %v4333
        %4335 = vmatmul.bf16.gmra.mxu0 %v3921
        %v4336 = vpop.f32.mrf.mxu0
        %v4337 = vadd.f32 0.0, %v4336
        %v4338 = vpop.f32.mrf.mxu0
        %v4339 = vadd.f32 0.0, %v4338
        %4340 = vmatmul.bf16.gmra.mxu0 %v3922
        %v4341 = vpop.f32.mrf.mxu0
        %v4342 = vadd.f32 0.0, %v4341
        %v4343 = vpop.f32.mrf.mxu0
        %v4344 = vadd.f32 0.0, %v4343
        %4345 = vmatmul.bf16.gmra.mxu0 %v3923
        %v4346 = vpop.f32.mrf.mxu0
        %v4347 = vadd.f32 0.0, %v4346
        %v4348 = vpop.f32.mrf.mxu0
        %v4349 = vadd.f32 0.0, %v4348
        %4350 = vmatmul.bf16.gmra.mxu0 %v3924
        %v4351 = vpop.f32.mrf.mxu0
        %v4352 = vadd.f32 0.0, %v4351
        %v4353 = vpop.f32.mrf.mxu0
        %v4354 = vadd.f32 0.0, %v4353
        %4355 = vmatmul.bf16.gmra.mxu0 %v3925
        %v4356 = vpop.f32.mrf.mxu0
        %v4357 = vadd.f32 0.0, %v4356
        %v4358 = vpop.f32.mrf.mxu0
        %v4359 = vadd.f32 0.0, %v4358
        %4360 = vmatmul.bf16.gmra.mxu0 %v3926
        %v4361 = vpop.f32.mrf.mxu0
        %v4362 = vadd.f32 0.0, %v4361
        %v4363 = vpop.f32.mrf.mxu0
        %v4364 = vadd.f32 0.0, %v4363
        %4365 = vmatmul.bf16.gmra.mxu0 %v3927
        %v4366 = vpop.f32.mrf.mxu0
        %v4367 = vadd.f32 0.0, %v4366
        %v4368 = vpop.f32.mrf.mxu0
        %v4369 = vadd.f32 0.0, %v4368
        %4370 = vmatmul.bf16.gmra.mxu0 %v3928
        %v4371 = vpop.f32.mrf.mxu0
        %v4372 = vadd.f32 0.0, %v4371
        %v4373 = vpop.f32.mrf.mxu0
        %v4374 = vadd.f32 0.0, %v4373
        %4375 = vmatmul.bf16.gmra.mxu0 %v3929
        %v4376 = vpop.f32.mrf.mxu0
        %v4377 = vadd.f32 0.0, %v4376
        %v4378 = vpop.f32.mrf.mxu0
        %v4379 = vadd.f32 0.0, %v4378
        %4380 = vmatmul.bf16.gmra.mxu0 %v3930
        %v4381 = vpop.f32.mrf.mxu0
        %v4382 = vadd.f32 0.0, %v4381
        %v4383 = vpop.f32.mrf.mxu0
        %v4384 = vadd.f32 0.0, %v4383
        %4385 = vmatmul.bf16.gmra.mxu0 %v3931
        %v4386 = vpop.f32.mrf.mxu0
        %v4387 = vadd.f32 0.0, %v4386
        %v4388 = vpop.f32.mrf.mxu0
        %v4389 = vadd.f32 0.0, %v4388
        %4390 = vdwg.mxu0
        %4391 = vmatpush.bf16.msra.mxu0 %v4268
        %4392 = vmatpush.bf16.msra.mxu0 %v4266
        %4393 = vmatpush.bf16.msra.mxu0 %v4264
        %4394 = vmatpush.bf16.msra.mxu0 %v4262
        %4395 = vmatpush.bf16.msra.mxu0 %v4260
        %4396 = vmatpush.bf16.msra.mxu0 %v4258
        %4397 = vmatpush.bf16.msra.mxu0 %v4256
        %4398 = vmatpush.bf16.msra.mxu0 %v4254
        %4399 = vmatmul.bf16.gmra.mxu0 %v4012
        %v4400 = vpop.f32.mrf.mxu0
        %v4401 = vadd.f32 %v4312, %v4400
        %v4402 = vpop.f32.mrf.mxu0
        %v4403 = vadd.f32 %v4314, %v4402
        %4404 = vmatmul.bf16.gmra.mxu0 %v4013
        %v4405 = vpop.f32.mrf.mxu0
        %v4406 = vadd.f32 %v4317, %v4405
        %v4407 = vpop.f32.mrf.mxu0
        %v4408 = vadd.f32 %v4319, %v4407
        %4409 = vmatmul.bf16.gmra.mxu0 %v4014
        %v4410 = vpop.f32.mrf.mxu0
        %v4411 = vadd.f32 %v4322, %v4410
        %v4412 = vpop.f32.mrf.mxu0
        %v4413 = vadd.f32 %v4324, %v4412
        %4414 = vmatmul.bf16.gmra.mxu0 %v4015
        %v4415 = vpop.f32.mrf.mxu0
        %v4416 = vadd.f32 %v4327, %v4415
        %v4417 = vpop.f32.mrf.mxu0
        %v4418 = vadd.f32 %v4329, %v4417
        %4419 = vmatmul.bf16.gmra.mxu0 %v4016
        %v4420 = vpop.f32.mrf.mxu0
        %v4421 = vadd.f32 %v4332, %v4420
        %v4422 = vpop.f32.mrf.mxu0
        %v4423 = vadd.f32 %v4334, %v4422
        %4424 = vmatmul.bf16.gmra.mxu0 %v4017
        %v4425 = vpop.f32.mrf.mxu0
        %v4426 = vadd.f32 %v4337, %v4425
        %v4427 = vpop.f32.mrf.mxu0
        %v4428 = vadd.f32 %v4339, %v4427
        %4429 = vmatmul.bf16.gmra.mxu0 %v4018
        %v4430 = vpop.f32.mrf.mxu0
        %v4431 = vadd.f32 %v4342, %v4430
        %v4432 = vpop.f32.mrf.mxu0
        %v4433 = vadd.f32 %v4344, %v4432
        %4434 = vmatmul.bf16.gmra.mxu0 %v4019
        %v4435 = vpop.f32.mrf.mxu0
        %v4436 = vadd.f32 %v4347, %v4435
        %v4437 = vpop.f32.mrf.mxu0
        %v4438 = vadd.f32 %v4349, %v4437
        %4439 = vmatmul.bf16.gmra.mxu0 %v4020
        %v4440 = vpop.f32.mrf.mxu0
        %v4441 = vadd.f32 %v4352, %v4440
        %v4442 = vpop.f32.mrf.mxu0
        %v4443 = vadd.f32 %v4354, %v4442
        %4444 = vmatmul.bf16.gmra.mxu0 %v4021
        %v4445 = vpop.f32.mrf.mxu0
        %v4446 = vadd.f32 %v4357, %v4445
        %v4447 = vpop.f32.mrf.mxu0
        %v4448 = vadd.f32 %v4359, %v4447
        %4449 = vmatmul.bf16.gmra.mxu0 %v4022
        %v4450 = vpop.f32.mrf.mxu0
        %v4451 = vadd.f32 %v4362, %v4450
        %v4452 = vpop.f32.mrf.mxu0
        %v4453 = vadd.f32 %v4364, %v4452
        %4454 = vmatmul.bf16.gmra.mxu0 %v4023
        %v4455 = vpop.f32.mrf.mxu0
        %v4456 = vadd.f32 %v4367, %v4455
        %v4457 = vpop.f32.mrf.mxu0
        %v4458 = vadd.f32 %v4369, %v4457
        %4459 = vmatmul.bf16.gmra.mxu0 %v4024
        %v4460 = vpop.f32.mrf.mxu0
        %v4461 = vadd.f32 %v4372, %v4460
        %v4462 = vpop.f32.mrf.mxu0
        %v4463 = vadd.f32 %v4374, %v4462
        %4464 = vmatmul.bf16.gmra.mxu0 %v4025
        %v4465 = vpop.f32.mrf.mxu0
        %v4466 = vadd.f32 %v4377, %v4465
        %v4467 = vpop.f32.mrf.mxu0
        %v4468 = vadd.f32 %v4379, %v4467
        %4469 = vmatmul.bf16.gmra.mxu0 %v4026
        %v4470 = vpop.f32.mrf.mxu0
        %v4471 = vadd.f32 %v4382, %v4470
        %v4472 = vpop.f32.mrf.mxu0
        %v4473 = vadd.f32 %v4384, %v4472
        %4474 = vmatmul.bf16.gmra.mxu0 %v4027
        %v4475 = vpop.f32.mrf.mxu0
        %v4476 = vadd.f32 %v4387, %v4475
        %v4477 = vpop.f32.mrf.mxu0
        %v4478 = vadd.f32 %v4389, %v4477
        %4479 = vdwg.mxu0
        %4480 = vmatpush.bf16.msra.mxu0 %v4253
        %4481 = vmatpush.bf16.msra.mxu0 %v4251
        %4482 = vmatpush.bf16.msra.mxu0 %v4249
        %4483 = vmatpush.bf16.msra.mxu0 %v4247
        %4484 = vmatpush.bf16.msra.mxu0 %v4245
        %4485 = vmatpush.bf16.msra.mxu0 %v4243
        %4486 = vmatpush.bf16.msra.mxu0 %v4241
        %4487 = vmatpush.bf16.msra.mxu0 %v4239
        %4488 = vmatmul.bf16.gmra.mxu0 %v3916
        %v4489 = vpop.f32.mrf.mxu0
        %v4490 = vadd.f32 0.0, %v4489
        %v4491 = vpop.f32.mrf.mxu0
        %v4492 = vadd.f32 0.0, %v4491
        %4493 = vmatmul.bf16.gmra.mxu0 %v3917
        %v4494 = vpop.f32.mrf.mxu0
        %v4495 = vadd.f32 0.0, %v4494
        %v4496 = vpop.f32.mrf.mxu0
        %v4497 = vadd.f32 0.0, %v4496
        %4498 = vmatmul.bf16.gmra.mxu0 %v3918
        %v4499 = vpop.f32.mrf.mxu0
        %v4500 = vadd.f32 0.0, %v4499
        %v4501 = vpop.f32.mrf.mxu0
        %v4502 = vadd.f32 0.0, %v4501
        %4503 = vmatmul.bf16.gmra.mxu0 %v3919
        %v4504 = vpop.f32.mrf.mxu0
        %v4505 = vadd.f32 0.0, %v4504
        %v4506 = vpop.f32.mrf.mxu0
        %v4507 = vadd.f32 0.0, %v4506
        %4508 = vmatmul.bf16.gmra.mxu0 %v3920
        %v4509 = vpop.f32.mrf.mxu0
        %v4510 = vadd.f32 0.0, %v4509
        %v4511 = vpop.f32.mrf.mxu0
        %v4512 = vadd.f32 0.0, %v4511
        %4513 = vmatmul.bf16.gmra.mxu0 %v3921
        %v4514 = vpop.f32.mrf.mxu0
        %v4515 = vadd.f32 0.0, %v4514
        %v4516 = vpop.f32.mrf.mxu0
        %v4517 = vadd.f32 0.0, %v4516
        %4518 = vmatmul.bf16.gmra.mxu0 %v3922
        %v4519 = vpop.f32.mrf.mxu0
        %v4520 = vadd.f32 0.0, %v4519
        %v4521 = vpop.f32.mrf.mxu0
        %v4522 = vadd.f32 0.0, %v4521
        %4523 = vmatmul.bf16.gmra.mxu0 %v3923
        %v4524 = vpop.f32.mrf.mxu0
        %v4525 = vadd.f32 0.0, %v4524
        %v4526 = vpop.f32.mrf.mxu0
        %v4527 = vadd.f32 0.0, %v4526
        %4528 = vmatmul.bf16.gmra.mxu0 %v3924
        %v4529 = vpop.f32.mrf.mxu0
        %v4530 = vadd.f32 0.0, %v4529
        %v4531 = vpop.f32.mrf.mxu0
        %v4532 = vadd.f32 0.0, %v4531
        %4533 = vmatmul.bf16.gmra.mxu0 %v3925
        %v4534 = vpop.f32.mrf.mxu0
        %v4535 = vadd.f32 0.0, %v4534
        %v4536 = vpop.f32.mrf.mxu0
        %v4537 = vadd.f32 0.0, %v4536
        %4538 = vmatmul.bf16.gmra.mxu0 %v3926
        %v4539 = vpop.f32.mrf.mxu0
        %v4540 = vadd.f32 0.0, %v4539
        %v4541 = vpop.f32.mrf.mxu0
        %v4542 = vadd.f32 0.0, %v4541
        %4543 = vmatmul.bf16.gmra.mxu0 %v3927
        %v4544 = vpop.f32.mrf.mxu0
        %v4545 = vadd.f32 0.0, %v4544
        %v4546 = vpop.f32.mrf.mxu0
        %v4547 = vadd.f32 0.0, %v4546
        %4548 = vmatmul.bf16.gmra.mxu0 %v3928
        %v4549 = vpop.f32.mrf.mxu0
        %v4550 = vadd.f32 0.0, %v4549
        %v4551 = vpop.f32.mrf.mxu0
        %v4552 = vadd.f32 0.0, %v4551
        %4553 = vmatmul.bf16.gmra.mxu0 %v3929
        %v4554 = vpop.f32.mrf.mxu0
        %v4555 = vadd.f32 0.0, %v4554
        %v4556 = vpop.f32.mrf.mxu0
        %v4557 = vadd.f32 0.0, %v4556
        %4558 = vmatmul.bf16.gmra.mxu0 %v3930
        %v4559 = vpop.f32.mrf.mxu0
        %v4560 = vadd.f32 0.0, %v4559
        %v4561 = vpop.f32.mrf.mxu0
        %v4562 = vadd.f32 0.0, %v4561
        %4563 = vmatmul.bf16.gmra.mxu0 %v3931
        %v4564 = vpop.f32.mrf.mxu0
        %v4565 = vadd.f32 0.0, %v4564
        %v4566 = vpop.f32.mrf.mxu0
        %v4567 = vadd.f32 0.0, %v4566
        %4568 = vdwg.mxu0
        %4569 = vmatpush.bf16.msra.mxu0 %v4269
        %4570 = vmatpush.bf16.msra.mxu0 %v4267
        %4571 = vmatpush.bf16.msra.mxu0 %v4265
        %4572 = vmatpush.bf16.msra.mxu0 %v4263
        %4573 = vmatpush.bf16.msra.mxu0 %v4261
        %4574 = vmatpush.bf16.msra.mxu0 %v4259
        %4575 = vmatpush.bf16.msra.mxu0 %v4257
        %4576 = vmatpush.bf16.msra.mxu0 %v4255
        %4577 = vmatmul.bf16.gmra.mxu0 %v4012
        %v4578 = vpop.f32.mrf.mxu0
        %v4579 = vadd.f32 %v4490, %v4578
        %v4580 = vpop.f32.mrf.mxu0
        %v4581 = vadd.f32 %v4492, %v4580
        %4582 = vmatmul.bf16.gmra.mxu0 %v4013
        %v4583 = vpop.f32.mrf.mxu0
        %v4584 = vadd.f32 %v4495, %v4583
        %v4585 = vpop.f32.mrf.mxu0
        %v4586 = vadd.f32 %v4497, %v4585
        %4587 = vmatmul.bf16.gmra.mxu0 %v4014
        %v4588 = vpop.f32.mrf.mxu0
        %v4589 = vadd.f32 %v4500, %v4588
        %v4590 = vpop.f32.mrf.mxu0
        %v4591 = vadd.f32 %v4502, %v4590
        %4592 = vmatmul.bf16.gmra.mxu0 %v4015
        %v4593 = vpop.f32.mrf.mxu0
        %v4594 = vadd.f32 %v4505, %v4593
        %v4595 = vpop.f32.mrf.mxu0
        %v4596 = vadd.f32 %v4507, %v4595
        %4597 = vmatmul.bf16.gmra.mxu0 %v4016
        %v4598 = vpop.f32.mrf.mxu0
        %v4599 = vadd.f32 %v4510, %v4598
        %v4600 = vpop.f32.mrf.mxu0
        %v4601 = vadd.f32 %v4512, %v4600
        %4602 = vmatmul.bf16.gmra.mxu0 %v4017
        %v4603 = vpop.f32.mrf.mxu0
        %v4604 = vadd.f32 %v4515, %v4603
        %v4605 = vpop.f32.mrf.mxu0
        %v4606 = vadd.f32 %v4517, %v4605
        %4607 = vmatmul.bf16.gmra.mxu0 %v4018
        %v4608 = vpop.f32.mrf.mxu0
        %v4609 = vadd.f32 %v4520, %v4608
        %v4610 = vpop.f32.mrf.mxu0
        %v4611 = vadd.f32 %v4522, %v4610
        %4612 = vmatmul.bf16.gmra.mxu0 %v4019
        %v4613 = vpop.f32.mrf.mxu0
        %v4614 = vadd.f32 %v4525, %v4613
        %v4615 = vpop.f32.mrf.mxu0
        %v4616 = vadd.f32 %v4527, %v4615
        %4617 = vmatmul.bf16.gmra.mxu0 %v4020
        %v4618 = vpop.f32.mrf.mxu0
        %v4619 = vadd.f32 %v4530, %v4618
        %v4620 = vpop.f32.mrf.mxu0
        %v4621 = vadd.f32 %v4532, %v4620
        %4622 = vmatmul.bf16.gmra.mxu0 %v4021
        %v4623 = vpop.f32.mrf.mxu0
        %v4624 = vadd.f32 %v4535, %v4623
        %v4625 = vpop.f32.mrf.mxu0
        %v4626 = vadd.f32 %v4537, %v4625
        %4627 = vmatmul.bf16.gmra.mxu0 %v4022
        %v4628 = vpop.f32.mrf.mxu0
        %v4629 = vadd.f32 %v4540, %v4628
        %v4630 = vpop.f32.mrf.mxu0
        %v4631 = vadd.f32 %v4542, %v4630
        %4632 = vmatmul.bf16.gmra.mxu0 %v4023
        %v4633 = vpop.f32.mrf.mxu0
        %v4634 = vadd.f32 %v4545, %v4633
        %v4635 = vpop.f32.mrf.mxu0
        %v4636 = vadd.f32 %v4547, %v4635
        %4637 = vmatmul.bf16.gmra.mxu0 %v4024
        %v4638 = vpop.f32.mrf.mxu0
        %v4639 = vadd.f32 %v4550, %v4638
        %v4640 = vpop.f32.mrf.mxu0
        %v4641 = vadd.f32 %v4552, %v4640
        %4642 = vmatmul.bf16.gmra.mxu0 %v4025
        %v4643 = vpop.f32.mrf.mxu0
        %v4644 = vadd.f32 %v4555, %v4643
        %v4645 = vpop.f32.mrf.mxu0
        %v4646 = vadd.f32 %v4557, %v4645
        %4647 = vmatmul.bf16.gmra.mxu0 %v4026
        %v4648 = vpop.f32.mrf.mxu0
        %v4649 = vadd.f32 %v4560, %v4648
        %v4650 = vpop.f32.mrf.mxu0
        %v4651 = vadd.f32 %v4562, %v4650
        %4652 = vmatmul.bf16.gmra.mxu0 %v4027
        %v4653 = vpop.f32.mrf.mxu0
        %v4654 = vadd.f32 %v4565, %v4653
        %v4655 = vpop.f32.mrf.mxu0
        %v4656 = vadd.f32 %v4567, %v4655
        %4657 = vdwg.mxu0
        %v4658 = vadd.f32 %v4044, %v4401
        %v4659 = vadd.f32 %v4045, %v4579
        %v4660 = vadd.f32 %v4046, %v4403
        %v4661 = vadd.f32 %v4047, %v4581
        %v4662 = vadd.f32 %v4048, %v4406
        %v4663 = vadd.f32 %v4049, %v4584
        %v4664 = vadd.f32 %v4050, %v4408
        %v4665 = vadd.f32 %v4051, %v4586
        %v4666 = vadd.f32 %v4052, %v4411
        %v4667 = vadd.f32 %v4053, %v4589
        %v4668 = vadd.f32 %v4054, %v4413
        %v4669 = vadd.f32 %v4055, %v4591
        %v4670 = vadd.f32 %v4056, %v4416
        %v4671 = vadd.f32 %v4057, %v4594
        %v4672 = vadd.f32 %v4058, %v4418
        %v4673 = vadd.f32 %v4059, %v4596
        %v4674 = vadd.f32 %v4060, %v4421
        %v4675 = vadd.f32 %v4061, %v4599
        %v4676 = vadd.f32 %v4062, %v4423
        %v4677 = vadd.f32 %v4063, %v4601
        %v4678 = vadd.f32 %v4064, %v4426
        %v4679 = vadd.f32 %v4065, %v4604
        %v4680 = vadd.f32 %v4066, %v4428
        %v4681 = vadd.f32 %v4067, %v4606
        %v4682 = vadd.f32 %v4068, %v4431
        %v4683 = vadd.f32 %v4069, %v4609
        %v4684 = vadd.f32 %v4070, %v4433
        %v4685 = vadd.f32 %v4071, %v4611
        %v4686 = vadd.f32 %v4072, %v4436
        %v4687 = vadd.f32 %v4073, %v4614
        %v4688 = vadd.f32 %v4074, %v4438
        %v4689 = vadd.f32 %v4075, %v4616
        %v4690 = vadd.f32 %v4076, %v4441
        %v4691 = vadd.f32 %v4077, %v4619
        %v4692 = vadd.f32 %v4078, %v4443
        %v4693 = vadd.f32 %v4079, %v4621
        %v4694 = vadd.f32 %v4080, %v4446
        %v4695 = vadd.f32 %v4081, %v4624
        %v4696 = vadd.f32 %v4082, %v4448
        %v4697 = vadd.f32 %v4083, %v4626
        %v4698 = vadd.f32 %v4084, %v4451
        %v4699 = vadd.f32 %v4085, %v4629
        %v4700 = vadd.f32 %v4086, %v4453
        %v4701 = vadd.f32 %v4087, %v4631
        %v4702 = vadd.f32 %v4088, %v4456
        %v4703 = vadd.f32 %v4089, %v4634
        %v4704 = vadd.f32 %v4090, %v4458
        %v4705 = vadd.f32 %v4091, %v4636
        %v4706 = vadd.f32 %v4092, %v4461
        %v4707 = vadd.f32 %v4093, %v4639
        %v4708 = vadd.f32 %v4094, %v4463
        %v4709 = vadd.f32 %v4095, %v4641
        %v4710 = vadd.f32 %v4096, %v4466
        %v4711 = vadd.f32 %v4097, %v4644
        %v4712 = vadd.f32 %v4098, %v4468
        %v4713 = vadd.f32 %v4099, %v4646
        %v4714 = vadd.f32 %v4100, %v4471
        %v4715 = vadd.f32 %v4101, %v4649
        %v4716 = vadd.f32 %v4102, %v4473
        %v4717 = vadd.f32 %v4103, %v4651
        %v4718 = vadd.f32 %v4104, %v4476
        %v4719 = vadd.f32 %v4105, %v4654
        %v4720 = vadd.f32 %v4106, %v4478
        %v4721 = vadd.f32 %v4107, %v4656
        %4722 = vst [vmem:[#allocation2] sm:$0xff] %v4658
        %4723 = vst [vmem:[#allocation2 + $0x8] sm:$0xff] %v4659
        %4724 = vst [vmem:[#allocation2 + $0x10] sm:$0xff] %v4660
        %4725 = vst [vmem:[#allocation2 + $0x18] sm:$0xff] %v4661
        %4726 = vst [vmem:[#allocation2 + $0x20] sm:$0xff] %v4662
        %4727 = vst [vmem:[#allocation2 + $0x28] sm:$0xff] %v4663
        %4728 = vst [vmem:[#allocation2 + $0x30] sm:$0xff] %v4664
        %4729 = vst [vmem:[#allocation2 + $0x38] sm:$0xff] %v4665
        %4730 = vst [vmem:[#allocation2 + $0x40] sm:$0xff] %v4666
        %4731 = vst [vmem:[#allocation2 + $0x48] sm:$0xff] %v4667
        %4732 = vst [vmem:[#allocation2 + $0x50] sm:$0xff] %v4668
        %4733 = vst [vmem:[#allocation2 + $0x58] sm:$0xff] %v4669
        %4734 = vst [vmem:[#allocation2 + $0x60] sm:$0xff] %v4670
        %4735 = vst [vmem:[#allocation2 + $0x68] sm:$0xff] %v4671
        %4736 = vst [vmem:[#allocation2 + $0x70] sm:$0xff] %v4672
        %4737 = vst [vmem:[#allocation2 + $0x78] sm:$0xff] %v4673
        %4738 = vst [vmem:[#allocation2 + $0x80] sm:$0xff] %v4674
        %4739 = vst [vmem:[#allocation2 + $0x88] sm:$0xff] %v4675
        %4740 = vst [vmem:[#allocation2 + $0x90] sm:$0xff] %v4676
        %4741 = vst [vmem:[#allocation2 + $0x98] sm:$0xff] %v4677
        %4742 = vst [vmem:[#allocation2 + $0xa0] sm:$0xff] %v4678
        %4743 = vst [vmem:[#allocation2 + $0xa8] sm:$0xff] %v4679
        %4744 = vst [vmem:[#allocation2 + $0xb0] sm:$0xff] %v4680
        %4745 = vst [vmem:[#allocation2 + $0xb8] sm:$0xff] %v4681
        %4746 = vst [vmem:[#allocation2 + $0xc0] sm:$0xff] %v4682
        %4747 = vst [vmem:[#allocation2 + $0xc8] sm:$0xff] %v4683
        %4748 = vst [vmem:[#allocation2 + $0xd0] sm:$0xff] %v4684
        %4749 = vst [vmem:[#allocation2 + $0xd8] sm:$0xff] %v4685
        %4750 = vst [vmem:[#allocation2 + $0xe0] sm:$0xff] %v4686
        %4751 = vst [vmem:[#allocation2 + $0xe8] sm:$0xff] %v4687
        %4752 = vst [vmem:[#allocation2 + $0xf0] sm:$0xff] %v4688
        %4753 = vst [vmem:[#allocation2 + $0xf8] sm:$0xff] %v4689
        %4754 = vst [vmem:[#allocation2 + $0x100] sm:$0xff] %v4690
        %4755 = vst [vmem:[#allocation2 + $0x108] sm:$0xff] %v4691
        %4756 = vst [vmem:[#allocation2 + $0x110] sm:$0xff] %v4692
        %4757 = vst [vmem:[#allocation2 + $0x118] sm:$0xff] %v4693
        %4758 = vst [vmem:[#allocation2 + $0x120] sm:$0xff] %v4694
        %4759 = vst [vmem:[#allocation2 + $0x128] sm:$0xff] %v4695
        %4760 = vst [vmem:[#allocation2 + $0x130] sm:$0xff] %v4696
        %4761 = vst [vmem:[#allocation2 + $0x138] sm:$0xff] %v4697
        %4762 = vst [vmem:[#allocation2 + $0x140] sm:$0xff] %v4698
        %4763 = vst [vmem:[#allocation2 + $0x148] sm:$0xff] %v4699
        %4764 = vst [vmem:[#allocation2 + $0x150] sm:$0xff] %v4700
        %4765 = vst [vmem:[#allocation2 + $0x158] sm:$0xff] %v4701
        %4766 = vst [vmem:[#allocation2 + $0x160] sm:$0xff] %v4702
        %4767 = vst [vmem:[#allocation2 + $0x168] sm:$0xff] %v4703
        %4768 = vst [vmem:[#allocation2 + $0x170] sm:$0xff] %v4704
        %4769 = vst [vmem:[#allocation2 + $0x178] sm:$0xff] %v4705
        %4770 = vst [vmem:[#allocation2 + $0x180] sm:$0xff] %v4706
        %4771 = vst [vmem:[#allocation2 + $0x188] sm:$0xff] %v4707
        %4772 = vst [vmem:[#allocation2 + $0x190] sm:$0xff] %v4708
        %4773 = vst [vmem:[#allocation2 + $0x198] sm:$0xff] %v4709
        %4774 = vst [vmem:[#allocation2 + $0x1a0] sm:$0xff] %v4710
        %4775 = vst [vmem:[#allocation2 + $0x1a8] sm:$0xff] %v4711
        %4776 = vst [vmem:[#allocation2 + $0x1b0] sm:$0xff] %v4712
        %4777 = vst [vmem:[#allocation2 + $0x1b8] sm:$0xff] %v4713
        %4778 = vst [vmem:[#allocation2 + $0x1c0] sm:$0xff] %v4714
        %4779 = vst [vmem:[#allocation2 + $0x1c8] sm:$0xff] %v4715
        %4780 = vst [vmem:[#allocation2 + $0x1d0] sm:$0xff] %v4716
        %4781 = vst [vmem:[#allocation2 + $0x1d8] sm:$0xff] %v4717
        %4782 = vst [vmem:[#allocation2 + $0x1e0] sm:$0xff] %v4718
        %4783 = vst [vmem:[#allocation2 + $0x1e8] sm:$0xff] %v4719
        %4784 = vst [vmem:[#allocation2 + $0x1f0] sm:$0xff] %v4720
        %4785 = vst [vmem:[#allocation2 + $0x1f8] sm:$0xff] %v4721
        // Predicated region
        $region113: #{tpu_custom_call.1} parent=71 // pred_check
          %p4786 = pneg %p651
        $region114: #{tpu_custom_call.1} parent=71 // pred_check_branch
          %4788 = sbr.rel (%p4786) target = $region116
        $region115: #{tpu_custom_call.1} parent=71 // pred_region
          %v4789 = vld [vmem:[#allocation2] sm:$0xff]
          %v4790 = vld [vmem:[#allocation2 + $0x8] sm:$0xff]
          %v4791 = vld [vmem:[#allocation2 + $0x10] sm:$0xff]
          %v4792 = vld [vmem:[#allocation2 + $0x18] sm:$0xff]
          %v4793 = vld [vmem:[#allocation2 + $0x20] sm:$0xff]
          %v4794 = vld [vmem:[#allocation2 + $0x28] sm:$0xff]
          %v4795 = vld [vmem:[#allocation2 + $0x30] sm:$0xff]
          %v4796 = vld [vmem:[#allocation2 + $0x38] sm:$0xff]
          %v4797 = vld [vmem:[#allocation2 + $0x40] sm:$0xff]
          %v4798 = vld [vmem:[#allocation2 + $0x48] sm:$0xff]
          %v4799 = vld [vmem:[#allocation2 + $0x50] sm:$0xff]
          %v4800 = vld [vmem:[#allocation2 + $0x58] sm:$0xff]
          %v4801 = vld [vmem:[#allocation2 + $0x60] sm:$0xff]
          %v4802 = vld [vmem:[#allocation2 + $0x68] sm:$0xff]
          %v4803 = vld [vmem:[#allocation2 + $0x70] sm:$0xff]
          %v4804 = vld [vmem:[#allocation2 + $0x78] sm:$0xff]
          %v4805 = vld [vmem:[#allocation2 + $0x80] sm:$0xff]
          %v4806 = vld [vmem:[#allocation2 + $0x88] sm:$0xff]
          %v4807 = vld [vmem:[#allocation2 + $0x90] sm:$0xff]
          %v4808 = vld [vmem:[#allocation2 + $0x98] sm:$0xff]
          %v4809 = vld [vmem:[#allocation2 + $0xa0] sm:$0xff]
          %v4810 = vld [vmem:[#allocation2 + $0xa8] sm:$0xff]
          %v4811 = vld [vmem:[#allocation2 + $0xb0] sm:$0xff]
          %v4812 = vld [vmem:[#allocation2 + $0xb8] sm:$0xff]
          %v4813 = vld [vmem:[#allocation2 + $0xc0] sm:$0xff]
          %v4814 = vld [vmem:[#allocation2 + $0xc8] sm:$0xff]
          %v4815 = vld [vmem:[#allocation2 + $0xd0] sm:$0xff]
          %v4816 = vld [vmem:[#allocation2 + $0xd8] sm:$0xff]
          %v4817 = vld [vmem:[#allocation2 + $0xe0] sm:$0xff]
          %v4818 = vld [vmem:[#allocation2 + $0xe8] sm:$0xff]
          %v4819 = vld [vmem:[#allocation2 + $0xf0] sm:$0xff]
          %v4820 = vld [vmem:[#allocation2 + $0xf8] sm:$0xff]
          %v4821 = vld [vmem:[#allocation2 + $0x100] sm:$0xff]
          %v4822 = vld [vmem:[#allocation2 + $0x108] sm:$0xff]
          %v4823 = vld [vmem:[#allocation2 + $0x110] sm:$0xff]
          %v4824 = vld [vmem:[#allocation2 + $0x118] sm:$0xff]
          %v4825 = vld [vmem:[#allocation2 + $0x120] sm:$0xff]
          %v4826 = vld [vmem:[#allocation2 + $0x128] sm:$0xff]
          %v4827 = vld [vmem:[#allocation2 + $0x130] sm:$0xff]
          %v4828 = vld [vmem:[#allocation2 + $0x138] sm:$0xff]
          %v4829 = vld [vmem:[#allocation2 + $0x140] sm:$0xff]
          %v4830 = vld [vmem:[#allocation2 + $0x148] sm:$0xff]
          %v4831 = vld [vmem:[#allocation2 + $0x150] sm:$0xff]
          %v4832 = vld [vmem:[#allocation2 + $0x158] sm:$0xff]
          %v4833 = vld [vmem:[#allocation2 + $0x160] sm:$0xff]
          %v4834 = vld [vmem:[#allocation2 + $0x168] sm:$0xff]
          %v4835 = vld [vmem:[#allocation2 + $0x170] sm:$0xff]
          %v4836 = vld [vmem:[#allocation2 + $0x178] sm:$0xff]
          %v4837 = vld [vmem:[#allocation2 + $0x180] sm:$0xff]
          %v4838 = vld [vmem:[#allocation2 + $0x188] sm:$0xff]
          %v4839 = vld [vmem:[#allocation2 + $0x190] sm:$0xff]
          %v4840 = vld [vmem:[#allocation2 + $0x198] sm:$0xff]
          %v4841 = vld [vmem:[#allocation2 + $0x1a0] sm:$0xff]
          %v4842 = vld [vmem:[#allocation2 + $0x1a8] sm:$0xff]
          %v4843 = vld [vmem:[#allocation2 + $0x1b0] sm:$0xff]
          %v4844 = vld [vmem:[#allocation2 + $0x1b8] sm:$0xff]
          %v4845 = vld [vmem:[#allocation2 + $0x1c0] sm:$0xff]
          %v4846 = vld [vmem:[#allocation2 + $0x1c8] sm:$0xff]
          %v4847 = vld [vmem:[#allocation2 + $0x1d0] sm:$0xff]
          %v4848 = vld [vmem:[#allocation2 + $0x1d8] sm:$0xff]
          %v4849 = vld [vmem:[#allocation2 + $0x1e0] sm:$0xff]
          %v4850 = vld [vmem:[#allocation2 + $0x1e8] sm:$0xff]
          %v4851 = vld [vmem:[#allocation2 + $0x1f0] sm:$0xff]
          %v4852 = vld [vmem:[#allocation2 + $0x1f8] sm:$0xff]
          %v4853 = vadd.f32 %v1817, %v4789
          %v4854 = vadd.f32 %v1818, %v4790
          %v4855 = vadd.f32 %v1819, %v4791
          %v4856 = vadd.f32 %v1820, %v4792
          %v4857 = vadd.f32 %v1821, %v4793
          %v4858 = vadd.f32 %v1822, %v4794
          %v4859 = vadd.f32 %v1823, %v4795
          %v4860 = vadd.f32 %v1824, %v4796
          %v4861 = vadd.f32 %v1825, %v4797
          %v4862 = vadd.f32 %v1826, %v4798
          %v4863 = vadd.f32 %v1827, %v4799
          %v4864 = vadd.f32 %v1828, %v4800
          %v4865 = vadd.f32 %v1829, %v4801
          %v4866 = vadd.f32 %v1830, %v4802
          %v4867 = vadd.f32 %v1831, %v4803
          %v4868 = vadd.f32 %v1832, %v4804
          %v4869 = vadd.f32 %v1833, %v4805
          %v4870 = vadd.f32 %v1834, %v4806
          %v4871 = vadd.f32 %v1835, %v4807
          %v4872 = vadd.f32 %v1836, %v4808
          %v4873 = vadd.f32 %v1837, %v4809
          %v4874 = vadd.f32 %v1838, %v4810
          %v4875 = vadd.f32 %v1839, %v4811
          %v4876 = vadd.f32 %v1840, %v4812
          %v4877 = vadd.f32 %v1841, %v4813
          %v4878 = vadd.f32 %v1842, %v4814
          %v4879 = vadd.f32 %v1843, %v4815
          %v4880 = vadd.f32 %v1844, %v4816
          %v4881 = vadd.f32 %v1845, %v4817
          %v4882 = vadd.f32 %v1846, %v4818
          %v4883 = vadd.f32 %v1847, %v4819
          %v4884 = vadd.f32 %v1848, %v4820
          %v4885 = vadd.f32 %v1849, %v4821
          %v4886 = vadd.f32 %v1850, %v4822
          %v4887 = vadd.f32 %v1851, %v4823
          %v4888 = vadd.f32 %v1852, %v4824
          %v4889 = vadd.f32 %v1853, %v4825
          %v4890 = vadd.f32 %v1854, %v4826
          %v4891 = vadd.f32 %v1855, %v4827
          %v4892 = vadd.f32 %v1856, %v4828
          %v4893 = vadd.f32 %v1857, %v4829
          %v4894 = vadd.f32 %v1858, %v4830
          %v4895 = vadd.f32 %v1859, %v4831
          %v4896 = vadd.f32 %v1860, %v4832
          %v4897 = vadd.f32 %v1861, %v4833
          %v4898 = vadd.f32 %v1862, %v4834
          %v4899 = vadd.f32 %v1863, %v4835
          %v4900 = vadd.f32 %v1864, %v4836
          %v4901 = vadd.f32 %v1865, %v4837
          %v4902 = vadd.f32 %v1866, %v4838
          %v4903 = vadd.f32 %v1867, %v4839
          %v4904 = vadd.f32 %v1868, %v4840
          %v4905 = vadd.f32 %v1869, %v4841
          %v4906 = vadd.f32 %v1870, %v4842
          %v4907 = vadd.f32 %v1871, %v4843
          %v4908 = vadd.f32 %v1872, %v4844
          %v4909 = vadd.f32 %v1873, %v4845
          %v4910 = vadd.f32 %v1874, %v4846
          %v4911 = vadd.f32 %v1875, %v4847
          %v4912 = vadd.f32 %v1876, %v4848
          %v4913 = vadd.f32 %v1877, %v4849
          %v4914 = vadd.f32 %v1878, %v4850
          %v4915 = vadd.f32 %v1879, %v4851
          %v4916 = vadd.f32 %v1880, %v4852
          %v4917 = vld [vmem:[%s10] sm:$0x3]
          %v4919 = vperm.slane %v4917, 0
          %v4920 = vperm.slane %v4917, 1
          %v4923 = vadd.f32 %v4853, %v4919
          %v4924 = vadd.f32 %v4854, %v4920
          %v4925 = vadd.f32 %v4855, %v4919
          %v4926 = vadd.f32 %v4856, %v4920
          %v4927 = vadd.f32 %v4857, %v4919
          %v4928 = vadd.f32 %v4858, %v4920
          %v4929 = vadd.f32 %v4859, %v4919
          %v4930 = vadd.f32 %v4860, %v4920
          %v4931 = vadd.f32 %v4861, %v4919
          %v4932 = vadd.f32 %v4862, %v4920
          %v4933 = vadd.f32 %v4863, %v4919
          %v4934 = vadd.f32 %v4864, %v4920
          %v4935 = vadd.f32 %v4865, %v4919
          %v4936 = vadd.f32 %v4866, %v4920
          %v4937 = vadd.f32 %v4867, %v4919
          %v4938 = vadd.f32 %v4868, %v4920
          %v4939 = vadd.f32 %v4869, %v4919
          %v4940 = vadd.f32 %v4870, %v4920
          %v4941 = vadd.f32 %v4871, %v4919
          %v4942 = vadd.f32 %v4872, %v4920
          %v4943 = vadd.f32 %v4873, %v4919
          %v4944 = vadd.f32 %v4874, %v4920
          %v4945 = vadd.f32 %v4875, %v4919
          %v4946 = vadd.f32 %v4876, %v4920
          %v4947 = vadd.f32 %v4877, %v4919
          %v4948 = vadd.f32 %v4878, %v4920
          %v4949 = vadd.f32 %v4879, %v4919
          %v4950 = vadd.f32 %v4880, %v4920
          %v4951 = vadd.f32 %v4881, %v4919
          %v4952 = vadd.f32 %v4882, %v4920
          %v4953 = vadd.f32 %v4883, %v4919
          %v4954 = vadd.f32 %v4884, %v4920
          %v4955 = vadd.f32 %v4885, %v4919
          %v4956 = vadd.f32 %v4886, %v4920
          %v4957 = vadd.f32 %v4887, %v4919
          %v4958 = vadd.f32 %v4888, %v4920
          %v4959 = vadd.f32 %v4889, %v4919
          %v4960 = vadd.f32 %v4890, %v4920
          %v4961 = vadd.f32 %v4891, %v4919
          %v4962 = vadd.f32 %v4892, %v4920
          %v4963 = vadd.f32 %v4893, %v4919
          %v4964 = vadd.f32 %v4894, %v4920
          %v4965 = vadd.f32 %v4895, %v4919
          %v4966 = vadd.f32 %v4896, %v4920
          %v4967 = vadd.f32 %v4897, %v4919
          %v4968 = vadd.f32 %v4898, %v4920
          %v4969 = vadd.f32 %v4899, %v4919
          %v4970 = vadd.f32 %v4900, %v4920
          %v4971 = vadd.f32 %v4901, %v4919
          %v4972 = vadd.f32 %v4902, %v4920
          %v4973 = vadd.f32 %v4903, %v4919
          %v4974 = vadd.f32 %v4904, %v4920
          %v4975 = vadd.f32 %v4905, %v4919
          %v4976 = vadd.f32 %v4906, %v4920
          %v4977 = vadd.f32 %v4907, %v4919
          %v4978 = vadd.f32 %v4908, %v4920
          %v4979 = vadd.f32 %v4909, %v4919
          %v4980 = vadd.f32 %v4910, %v4920
          %v4981 = vadd.f32 %v4911, %v4919
          %v4982 = vadd.f32 %v4912, %v4920
          %v4983 = vadd.f32 %v4913, %v4919
          %v4984 = vadd.f32 %v4914, %v4920
          %v4985 = vadd.f32 %v4915, %v4919
          %v4986 = vadd.f32 %v4916, %v4920
          %v4987 = vadd.f32 %v4923, %v4924
          %4988 = vadd.xlane.f32.xlu0 %v4987
          %v4989 = vpop.xlane.xlu0 %4988
          %v4990 = vadd.f32 %v4925, %v4926
          %4991 = vadd.xlane.f32.xlu0 %v4990
          %v4992 = vpop.xlane.xlu0 %4991
          %v4993 = vadd.f32 %v4927, %v4928
          %4994 = vadd.xlane.f32.xlu0 %v4993
          %v4995 = vpop.xlane.xlu0 %4994
          %v4996 = vadd.f32 %v4929, %v4930
          %4997 = vadd.xlane.f32.xlu0 %v4996
          %v4998 = vpop.xlane.xlu0 %4997
          %v4999 = vadd.f32 %v4931, %v4932
          %5000 = vadd.xlane.f32.xlu0 %v4999
          %v5001 = vpop.xlane.xlu0 %5000
          %v5002 = vadd.f32 %v4933, %v4934
          %5003 = vadd.xlane.f32.xlu0 %v5002
          %v5004 = vpop.xlane.xlu0 %5003
          %v5005 = vadd.f32 %v4935, %v4936
          %5006 = vadd.xlane.f32.xlu0 %v5005
          %v5007 = vpop.xlane.xlu0 %5006
          %v5008 = vadd.f32 %v4937, %v4938
          %5009 = vadd.xlane.f32.xlu0 %v5008
          %v5010 = vpop.xlane.xlu0 %5009
          %v5011 = vadd.f32 %v4939, %v4940
          %5012 = vadd.xlane.f32.xlu0 %v5011
          %v5013 = vpop.xlane.xlu0 %5012
          %v5014 = vadd.f32 %v4941, %v4942
          %5015 = vadd.xlane.f32.xlu0 %v5014
          %v5016 = vpop.xlane.xlu0 %5015
          %v5017 = vadd.f32 %v4943, %v4944
          %5018 = vadd.xlane.f32.xlu0 %v5017
          %v5019 = vpop.xlane.xlu0 %5018
          %v5020 = vadd.f32 %v4945, %v4946
          %5021 = vadd.xlane.f32.xlu0 %v5020
          %v5022 = vpop.xlane.xlu0 %5021
          %v5023 = vadd.f32 %v4947, %v4948
          %5024 = vadd.xlane.f32.xlu0 %v5023
          %v5025 = vpop.xlane.xlu0 %5024
          %v5026 = vadd.f32 %v4949, %v4950
          %5027 = vadd.xlane.f32.xlu0 %v5026
          %v5028 = vpop.xlane.xlu0 %5027
          %v5029 = vadd.f32 %v4951, %v4952
          %5030 = vadd.xlane.f32.xlu0 %v5029
          %v5031 = vpop.xlane.xlu0 %5030
          %v5032 = vadd.f32 %v4953, %v4954
          %5033 = vadd.xlane.f32.xlu0 %v5032
          %v5034 = vpop.xlane.xlu0 %5033
          %v5035 = vadd.f32 %v4955, %v4956
          %5036 = vadd.xlane.f32.xlu0 %v5035
          %v5037 = vpop.xlane.xlu0 %5036
          %v5038 = vadd.f32 %v4957, %v4958
          %5039 = vadd.xlane.f32.xlu0 %v5038
          %v5040 = vpop.xlane.xlu0 %5039
          %v5041 = vadd.f32 %v4959, %v4960
          %5042 = vadd.xlane.f32.xlu0 %v5041
          %v5043 = vpop.xlane.xlu0 %5042
          %v5044 = vadd.f32 %v4961, %v4962
          %5045 = vadd.xlane.f32.xlu0 %v5044
          %v5046 = vpop.xlane.xlu0 %5045
          %v5047 = vadd.f32 %v4963, %v4964
          %5048 = vadd.xlane.f32.xlu0 %v5047
          %v5049 = vpop.xlane.xlu0 %5048
          %v5050 = vadd.f32 %v4965, %v4966
          %5051 = vadd.xlane.f32.xlu0 %v5050
          %v5052 = vpop.xlane.xlu0 %5051
          %v5053 = vadd.f32 %v4967, %v4968
          %5054 = vadd.xlane.f32.xlu0 %v5053
          %v5055 = vpop.xlane.xlu0 %5054
          %v5056 = vadd.f32 %v4969, %v4970
          %5057 = vadd.xlane.f32.xlu0 %v5056
          %v5058 = vpop.xlane.xlu0 %5057
          %v5059 = vadd.f32 %v4971, %v4972
          %5060 = vadd.xlane.f32.xlu0 %v5059
          %v5061 = vpop.xlane.xlu0 %5060
          %v5062 = vadd.f32 %v4973, %v4974
          %5063 = vadd.xlane.f32.xlu0 %v5062
          %v5064 = vpop.xlane.xlu0 %5063
          %v5065 = vadd.f32 %v4975, %v4976
          %5066 = vadd.xlane.f32.xlu0 %v5065
          %v5067 = vpop.xlane.xlu0 %5066
          %v5068 = vadd.f32 %v4977, %v4978
          %5069 = vadd.xlane.f32.xlu0 %v5068
          %v5070 = vpop.xlane.xlu0 %5069
          %v5071 = vadd.f32 %v4979, %v4980
          %5072 = vadd.xlane.f32.xlu0 %v5071
          %v5073 = vpop.xlane.xlu0 %5072
          %v5074 = vadd.f32 %v4981, %v4982
          %5075 = vadd.xlane.f32.xlu0 %v5074
          %v5076 = vpop.xlane.xlu0 %5075
          %v5077 = vadd.f32 %v4983, %v4984
          %5078 = vadd.xlane.f32.xlu0 %v5077
          %v5079 = vpop.xlane.xlu0 %5078
          %v5080 = vadd.f32 %v4985, %v4986
          %5081 = vadd.xlane.f32.xlu0 %v5080
          %v5082 = vpop.xlane.xlu0 %5081
          %v5083 = vrcp.pop 256.0
          %v5084 = vmul.f32 256.0, %v5083
          %v5085 = vsub.f32 1.0, %v5084
          %v5086 = vmul.f32 %v5083, %v5085
          %v5087 = vadd.f32 %v5083, %v5086
          %vm5088 = vweird.f32 %v5083
          %v5089 = vsel %vm5088, %v5083, %v5087
          %v5090 = vmul.f32 %v4989, %v5089
          %v5091 = vmul.f32 %v4992, %v5089
          %v5092 = vmul.f32 %v4995, %v5089
          %v5093 = vmul.f32 %v4998, %v5089
          %v5094 = vmul.f32 %v5001, %v5089
          %v5095 = vmul.f32 %v5004, %v5089
          %v5096 = vmul.f32 %v5007, %v5089
          %v5097 = vmul.f32 %v5010, %v5089
          %v5098 = vmul.f32 %v5013, %v5089
          %v5099 = vmul.f32 %v5016, %v5089
          %v5100 = vmul.f32 %v5019, %v5089
          %v5101 = vmul.f32 %v5022, %v5089
          %v5102 = vmul.f32 %v5025, %v5089
          %v5103 = vmul.f32 %v5028, %v5089
          %v5104 = vmul.f32 %v5031, %v5089
          %v5105 = vmul.f32 %v5034, %v5089
          %v5106 = vmul.f32 %v5037, %v5089
          %v5107 = vmul.f32 %v5040, %v5089
          %v5108 = vmul.f32 %v5043, %v5089
          %v5109 = vmul.f32 %v5046, %v5089
          %v5110 = vmul.f32 %v5049, %v5089
          %v5111 = vmul.f32 %v5052, %v5089
          %v5112 = vmul.f32 %v5055, %v5089
          %v5113 = vmul.f32 %v5058, %v5089
          %v5114 = vmul.f32 %v5061, %v5089
          %v5115 = vmul.f32 %v5064, %v5089
          %v5116 = vmul.f32 %v5067, %v5089
          %v5117 = vmul.f32 %v5070, %v5089
          %v5118 = vmul.f32 %v5073, %v5089
          %v5119 = vmul.f32 %v5076, %v5089
          %v5120 = vmul.f32 %v5079, %v5089
          %v5121 = vmul.f32 %v5082, %v5089
          %v5122 = vsub.f32 %v4923, %v5090
          %v5123 = vsub.f32 %v4924, %v5090
          %v5124 = vsub.f32 %v4925, %v5091
          %v5125 = vsub.f32 %v4926, %v5091
          %v5126 = vsub.f32 %v4927, %v5092
          %v5127 = vsub.f32 %v4928, %v5092
          %v5128 = vsub.f32 %v4929, %v5093
          %v5129 = vsub.f32 %v4930, %v5093
          %v5130 = vsub.f32 %v4931, %v5094
          %v5131 = vsub.f32 %v4932, %v5094
          %v5132 = vsub.f32 %v4933, %v5095
          %v5133 = vsub.f32 %v4934, %v5095
          %v5134 = vsub.f32 %v4935, %v5096
          %v5135 = vsub.f32 %v4936, %v5096
          %v5136 = vsub.f32 %v4937, %v5097
          %v5137 = vsub.f32 %v4938, %v5097
          %v5138 = vsub.f32 %v4939, %v5098
          %v5139 = vsub.f32 %v4940, %v5098
          %v5140 = vsub.f32 %v4941, %v5099
          %v5141 = vsub.f32 %v4942, %v5099
          %v5142 = vsub.f32 %v4943, %v5100
          %v5143 = vsub.f32 %v4944, %v5100
          %v5144 = vsub.f32 %v4945, %v5101
          %v5145 = vsub.f32 %v4946, %v5101
          %v5146 = vsub.f32 %v4947, %v5102
          %v5147 = vsub.f32 %v4948, %v5102
          %v5148 = vsub.f32 %v4949, %v5103
          %v5149 = vsub.f32 %v4950, %v5103
          %v5150 = vsub.f32 %v4951, %v5104
          %v5151 = vsub.f32 %v4952, %v5104
          %v5152 = vsub.f32 %v4953, %v5105
          %v5153 = vsub.f32 %v4954, %v5105
          %v5154 = vsub.f32 %v4955, %v5106
          %v5155 = vsub.f32 %v4956, %v5106
          %v5156 = vsub.f32 %v4957, %v5107
          %v5157 = vsub.f32 %v4958, %v5107
          %v5158 = vsub.f32 %v4959, %v5108
          %v5159 = vsub.f32 %v4960, %v5108
          %v5160 = vsub.f32 %v4961, %v5109
          %v5161 = vsub.f32 %v4962, %v5109
          %v5162 = vsub.f32 %v4963, %v5110
          %v5163 = vsub.f32 %v4964, %v5110
          %v5164 = vsub.f32 %v4965, %v5111
          %v5165 = vsub.f32 %v4966, %v5111
          %v5166 = vsub.f32 %v4967, %v5112
          %v5167 = vsub.f32 %v4968, %v5112
          %v5168 = vsub.f32 %v4969, %v5113
          %v5169 = vsub.f32 %v4970, %v5113
          %v5170 = vsub.f32 %v4971, %v5114
          %v5171 = vsub.f32 %v4972, %v5114
          %v5172 = vsub.f32 %v4973, %v5115
          %v5173 = vsub.f32 %v4974, %v5115
          %v5174 = vsub.f32 %v4975, %v5116
          %v5175 = vsub.f32 %v4976, %v5116
          %v5176 = vsub.f32 %v4977, %v5117
          %v5177 = vsub.f32 %v4978, %v5117
          %v5178 = vsub.f32 %v4979, %v5118
          %v5179 = vsub.f32 %v4980, %v5118
          %v5180 = vsub.f32 %v4981, %v5119
          %v5181 = vsub.f32 %v4982, %v5119
          %v5182 = vsub.f32 %v4983, %v5120
          %v5183 = vsub.f32 %v4984, %v5120
          %v5184 = vsub.f32 %v4985, %v5121
          %v5185 = vsub.f32 %v4986, %v5121
          %v5186 = vmul.f32 %v5122, %v5122
          %v5187 = vmul.f32 %v5123, %v5123
          %v5188 = vmul.f32 %v5124, %v5124
          %v5189 = vmul.f32 %v5125, %v5125
          %v5190 = vmul.f32 %v5126, %v5126
          %v5191 = vmul.f32 %v5127, %v5127
          %v5192 = vmul.f32 %v5128, %v5128
          %v5193 = vmul.f32 %v5129, %v5129
          %v5194 = vmul.f32 %v5130, %v5130
          %v5195 = vmul.f32 %v5131, %v5131
          %v5196 = vmul.f32 %v5132, %v5132
          %v5197 = vmul.f32 %v5133, %v5133
          %v5198 = vmul.f32 %v5134, %v5134
          %v5199 = vmul.f32 %v5135, %v5135
          %v5200 = vmul.f32 %v5136, %v5136
          %v5201 = vmul.f32 %v5137, %v5137
          %v5202 = vmul.f32 %v5138, %v5138
          %v5203 = vmul.f32 %v5139, %v5139
          %v5204 = vmul.f32 %v5140, %v5140
          %v5205 = vmul.f32 %v5141, %v5141
          %v5206 = vmul.f32 %v5142, %v5142
          %v5207 = vmul.f32 %v5143, %v5143
          %v5208 = vmul.f32 %v5144, %v5144
          %v5209 = vmul.f32 %v5145, %v5145
          %v5210 = vmul.f32 %v5146, %v5146
          %v5211 = vmul.f32 %v5147, %v5147
          %v5212 = vmul.f32 %v5148, %v5148
          %v5213 = vmul.f32 %v5149, %v5149
          %v5214 = vmul.f32 %v5150, %v5150
          %v5215 = vmul.f32 %v5151, %v5151
          %v5216 = vmul.f32 %v5152, %v5152
          %v5217 = vmul.f32 %v5153, %v5153
          %v5218 = vmul.f32 %v5154, %v5154
          %v5219 = vmul.f32 %v5155, %v5155
          %v5220 = vmul.f32 %v5156, %v5156
          %v5221 = vmul.f32 %v5157, %v5157
          %v5222 = vmul.f32 %v5158, %v5158
          %v5223 = vmul.f32 %v5159, %v5159
          %v5224 = vmul.f32 %v5160, %v5160
          %v5225 = vmul.f32 %v5161, %v5161
          %v5226 = vmul.f32 %v5162, %v5162
          %v5227 = vmul.f32 %v5163, %v5163
          %v5228 = vmul.f32 %v5164, %v5164
          %v5229 = vmul.f32 %v5165, %v5165
          %v5230 = vmul.f32 %v5166, %v5166
          %v5231 = vmul.f32 %v5167, %v5167
          %v5232 = vmul.f32 %v5168, %v5168
          %v5233 = vmul.f32 %v5169, %v5169
          %v5234 = vmul.f32 %v5170, %v5170
          %v5235 = vmul.f32 %v5171, %v5171
          %v5236 = vmul.f32 %v5172, %v5172
          %v5237 = vmul.f32 %v5173, %v5173
          %v5238 = vmul.f32 %v5174, %v5174
          %v5239 = vmul.f32 %v5175, %v5175
          %v5240 = vmul.f32 %v5176, %v5176
          %v5241 = vmul.f32 %v5177, %v5177
          %v5242 = vmul.f32 %v5178, %v5178
          %v5243 = vmul.f32 %v5179, %v5179
          %v5244 = vmul.f32 %v5180, %v5180
          %v5245 = vmul.f32 %v5181, %v5181
          %v5246 = vmul.f32 %v5182, %v5182
          %v5247 = vmul.f32 %v5183, %v5183
          %v5248 = vmul.f32 %v5184, %v5184
          %v5249 = vmul.f32 %v5185, %v5185
          %v5250 = vadd.f32 %v5186, %v5187
          %5251 = vadd.xlane.f32.xlu0 %v5250
          %v5252 = vpop.xlane.xlu0 %5251
          %v5253 = vadd.f32 %v5188, %v5189
          %5254 = vadd.xlane.f32.xlu0 %v5253
          %v5255 = vpop.xlane.xlu0 %5254
          %v5256 = vadd.f32 %v5190, %v5191
          %5257 = vadd.xlane.f32.xlu0 %v5256
          %v5258 = vpop.xlane.xlu0 %5257
          %v5259 = vadd.f32 %v5192, %v5193
          %5260 = vadd.xlane.f32.xlu0 %v5259
          %v5261 = vpop.xlane.xlu0 %5260
          %v5262 = vadd.f32 %v5194, %v5195
          %5263 = vadd.xlane.f32.xlu0 %v5262
          %v5264 = vpop.xlane.xlu0 %5263
          %v5265 = vadd.f32 %v5196, %v5197
          %5266 = vadd.xlane.f32.xlu0 %v5265
          %v5267 = vpop.xlane.xlu0 %5266
          %v5268 = vadd.f32 %v5198, %v5199
          %5269 = vadd.xlane.f32.xlu0 %v5268
          %v5270 = vpop.xlane.xlu0 %5269
          %v5271 = vadd.f32 %v5200, %v5201
          %5272 = vadd.xlane.f32.xlu0 %v5271
          %v5273 = vpop.xlane.xlu0 %5272
          %v5274 = vadd.f32 %v5202, %v5203
          %5275 = vadd.xlane.f32.xlu0 %v5274
          %v5276 = vpop.xlane.xlu0 %5275
          %v5277 = vadd.f32 %v5204, %v5205
          %5278 = vadd.xlane.f32.xlu0 %v5277
          %v5279 = vpop.xlane.xlu0 %5278
          %v5280 = vadd.f32 %v5206, %v5207
          %5281 = vadd.xlane.f32.xlu0 %v5280
          %v5282 = vpop.xlane.xlu0 %5281
          %v5283 = vadd.f32 %v5208, %v5209
          %5284 = vadd.xlane.f32.xlu0 %v5283
          %v5285 = vpop.xlane.xlu0 %5284
          %v5286 = vadd.f32 %v5210, %v5211
          %5287 = vadd.xlane.f32.xlu0 %v5286
          %v5288 = vpop.xlane.xlu0 %5287
          %v5289 = vadd.f32 %v5212, %v5213
          %5290 = vadd.xlane.f32.xlu0 %v5289
          %v5291 = vpop.xlane.xlu0 %5290
          %v5292 = vadd.f32 %v5214, %v5215
          %5293 = vadd.xlane.f32.xlu0 %v5292
          %v5294 = vpop.xlane.xlu0 %5293
          %v5295 = vadd.f32 %v5216, %v5217
          %5296 = vadd.xlane.f32.xlu0 %v5295
          %v5297 = vpop.xlane.xlu0 %5296
          %v5298 = vadd.f32 %v5218, %v5219
          %5299 = vadd.xlane.f32.xlu0 %v5298
          %v5300 = vpop.xlane.xlu0 %5299
          %v5301 = vadd.f32 %v5220, %v5221
          %5302 = vadd.xlane.f32.xlu0 %v5301
          %v5303 = vpop.xlane.xlu0 %5302
          %v5304 = vadd.f32 %v5222, %v5223
          %5305 = vadd.xlane.f32.xlu0 %v5304
          %v5306 = vpop.xlane.xlu0 %5305
          %v5307 = vadd.f32 %v5224, %v5225
          %5308 = vadd.xlane.f32.xlu0 %v5307
          %v5309 = vpop.xlane.xlu0 %5308
          %v5310 = vadd.f32 %v5226, %v5227
          %5311 = vadd.xlane.f32.xlu0 %v5310
          %v5312 = vpop.xlane.xlu0 %5311
          %v5313 = vadd.f32 %v5228, %v5229
          %5314 = vadd.xlane.f32.xlu0 %v5313
          %v5315 = vpop.xlane.xlu0 %5314
          %v5316 = vadd.f32 %v5230, %v5231
          %5317 = vadd.xlane.f32.xlu0 %v5316
          %v5318 = vpop.xlane.xlu0 %5317
          %v5319 = vadd.f32 %v5232, %v5233
          %5320 = vadd.xlane.f32.xlu0 %v5319
          %v5321 = vpop.xlane.xlu0 %5320
          %v5322 = vadd.f32 %v5234, %v5235
          %5323 = vadd.xlane.f32.xlu0 %v5322
          %v5324 = vpop.xlane.xlu0 %5323
          %v5325 = vadd.f32 %v5236, %v5237
          %5326 = vadd.xlane.f32.xlu0 %v5325
          %v5327 = vpop.xlane.xlu0 %5326
          %v5328 = vadd.f32 %v5238, %v5239
          %5329 = vadd.xlane.f32.xlu0 %v5328
          %v5330 = vpop.xlane.xlu0 %5329
          %v5331 = vadd.f32 %v5240, %v5241
          %5332 = vadd.xlane.f32.xlu0 %v5331
          %v5333 = vpop.xlane.xlu0 %5332
          %v5334 = vadd.f32 %v5242, %v5243
          %5335 = vadd.xlane.f32.xlu0 %v5334
          %v5336 = vpop.xlane.xlu0 %5335
          %v5337 = vadd.f32 %v5244, %v5245
          %5338 = vadd.xlane.f32.xlu0 %v5337
          %v5339 = vpop.xlane.xlu0 %5338
          %v5340 = vadd.f32 %v5246, %v5247
          %5341 = vadd.xlane.f32.xlu0 %v5340
          %v5342 = vpop.xlane.xlu0 %5341
          %v5343 = vadd.f32 %v5248, %v5249
          %5344 = vadd.xlane.f32.xlu0 %v5343
          %v5345 = vpop.xlane.xlu0 %5344
          %v5346 = vmul.f32 %v5252, %v5089
          %v5347 = vmul.f32 %v5255, %v5089
          %v5348 = vmul.f32 %v5258, %v5089
          %v5349 = vmul.f32 %v5261, %v5089
          %v5350 = vmul.f32 %v5264, %v5089
          %v5351 = vmul.f32 %v5267, %v5089
          %v5352 = vmul.f32 %v5270, %v5089
          %v5353 = vmul.f32 %v5273, %v5089
          %v5354 = vmul.f32 %v5276, %v5089
          %v5355 = vmul.f32 %v5279, %v5089
          %v5356 = vmul.f32 %v5282, %v5089
          %v5357 = vmul.f32 %v5285, %v5089
          %v5358 = vmul.f32 %v5288, %v5089
          %v5359 = vmul.f32 %v5291, %v5089
          %v5360 = vmul.f32 %v5294, %v5089
          %v5361 = vmul.f32 %v5297, %v5089
          %v5362 = vmul.f32 %v5300, %v5089
          %v5363 = vmul.f32 %v5303, %v5089
          %v5364 = vmul.f32 %v5306, %v5089
          %v5365 = vmul.f32 %v5309, %v5089
          %v5366 = vmul.f32 %v5312, %v5089
          %v5367 = vmul.f32 %v5315, %v5089
          %v5368 = vmul.f32 %v5318, %v5089
          %v5369 = vmul.f32 %v5321, %v5089
          %v5370 = vmul.f32 %v5324, %v5089
          %v5371 = vmul.f32 %v5327, %v5089
          %v5372 = vmul.f32 %v5330, %v5089
          %v5373 = vmul.f32 %v5333, %v5089
          %v5374 = vmul.f32 %v5336, %v5089
          %v5375 = vmul.f32 %v5339, %v5089
          %v5376 = vmul.f32 %v5342, %v5089
          %v5377 = vmul.f32 %v5345, %v5089
          %v5378 = vadd.f32 %v5346, 1e-05
          %v5379 = vadd.f32 %v5347, 1e-05
          %v5380 = vadd.f32 %v5348, 1e-05
          %v5381 = vadd.f32 %v5349, 1e-05
          %v5382 = vadd.f32 %v5350, 1e-05
          %v5383 = vadd.f32 %v5351, 1e-05
          %v5384 = vadd.f32 %v5352, 1e-05
          %v5385 = vadd.f32 %v5353, 1e-05
          %v5386 = vadd.f32 %v5354, 1e-05
          %v5387 = vadd.f32 %v5355, 1e-05
          %v5388 = vadd.f32 %v5356, 1e-05
          %v5389 = vadd.f32 %v5357, 1e-05
          %v5390 = vadd.f32 %v5358, 1e-05
          %v5391 = vadd.f32 %v5359, 1e-05
          %v5392 = vadd.f32 %v5360, 1e-05
          %v5393 = vadd.f32 %v5361, 1e-05
          %v5394 = vadd.f32 %v5362, 1e-05
          %v5395 = vadd.f32 %v5363, 1e-05
          %v5396 = vadd.f32 %v5364, 1e-05
          %v5397 = vadd.f32 %v5365, 1e-05
          %v5398 = vadd.f32 %v5366, 1e-05
          %v5399 = vadd.f32 %v5367, 1e-05
          %v5400 = vadd.f32 %v5368, 1e-05
          %v5401 = vadd.f32 %v5369, 1e-05
          %v5402 = vadd.f32 %v5370, 1e-05
          %v5403 = vadd.f32 %v5371, 1e-05
          %v5404 = vadd.f32 %v5372, 1e-05
          %v5405 = vadd.f32 %v5373, 1e-05
          %v5406 = vadd.f32 %v5374, 1e-05
          %v5407 = vadd.f32 %v5375, 1e-05
          %v5408 = vadd.f32 %v5376, 1e-05
          %v5409 = vadd.f32 %v5377, 1e-05
          %v5410 = vrsqrt.pop %v5378
          %v5411 = vmul.f32 %v5410, %v5378
          %v5412 = vmul.f32 %v5411, %v5410
          %v5413 = vmul.f32 0.5, %v5412
          %v5414 = vsub.f32 1.5, %v5413
          %v5415 = vmul.f32 %v5410, %v5414
          %vm5416 = vweird.f32 %v5378
          %vm5417 = vweird.f32 %v5410
          %vm5418 = vmor %vm5416, %vm5417
          %v5419 = vsel %vm5418, %v5410, %v5415
          %v5420 = vrsqrt.pop %v5379
          %v5421 = vmul.f32 %v5420, %v5379
          %v5422 = vmul.f32 %v5421, %v5420
          %v5423 = vmul.f32 0.5, %v5422
          %v5424 = vsub.f32 1.5, %v5423
          %v5425 = vmul.f32 %v5420, %v5424
          %vm5426 = vweird.f32 %v5379
          %vm5427 = vweird.f32 %v5420
          %vm5428 = vmor %vm5426, %vm5427
          %v5429 = vsel %vm5428, %v5420, %v5425
          %v5430 = vrsqrt.pop %v5380
          %v5431 = vmul.f32 %v5430, %v5380
          %v5432 = vmul.f32 %v5431, %v5430
          %v5433 = vmul.f32 0.5, %v5432
          %v5434 = vsub.f32 1.5, %v5433
          %v5435 = vmul.f32 %v5430, %v5434
          %vm5436 = vweird.f32 %v5380
          %vm5437 = vweird.f32 %v5430
          %vm5438 = vmor %vm5436, %vm5437
          %v5439 = vsel %vm5438, %v5430, %v5435
          %v5440 = vrsqrt.pop %v5381
          %v5441 = vmul.f32 %v5440, %v5381
          %v5442 = vmul.f32 %v5441, %v5440
          %v5443 = vmul.f32 0.5, %v5442
          %v5444 = vsub.f32 1.5, %v5443
          %v5445 = vmul.f32 %v5440, %v5444
          %vm5446 = vweird.f32 %v5381
          %vm5447 = vweird.f32 %v5440
          %vm5448 = vmor %vm5446, %vm5447
          %v5449 = vsel %vm5448, %v5440, %v5445
          %v5450 = vrsqrt.pop %v5382
          %v5451 = vmul.f32 %v5450, %v5382
          %v5452 = vmul.f32 %v5451, %v5450
          %v5453 = vmul.f32 0.5, %v5452
          %v5454 = vsub.f32 1.5, %v5453
          %v5455 = vmul.f32 %v5450, %v5454
          %vm5456 = vweird.f32 %v5382
          %vm5457 = vweird.f32 %v5450
          %vm5458 = vmor %vm5456, %vm5457
          %v5459 = vsel %vm5458, %v5450, %v5455
          %v5460 = vrsqrt.pop %v5383
          %v5461 = vmul.f32 %v5460, %v5383
          %v5462 = vmul.f32 %v5461, %v5460
          %v5463 = vmul.f32 0.5, %v5462
          %v5464 = vsub.f32 1.5, %v5463
          %v5465 = vmul.f32 %v5460, %v5464
          %vm5466 = vweird.f32 %v5383
          %vm5467 = vweird.f32 %v5460
          %vm5468 = vmor %vm5466, %vm5467
          %v5469 = vsel %vm5468, %v5460, %v5465
          %v5470 = vrsqrt.pop %v5384
          %v5471 = vmul.f32 %v5470, %v5384
          %v5472 = vmul.f32 %v5471, %v5470
          %v5473 = vmul.f32 0.5, %v5472
          %v5474 = vsub.f32 1.5, %v5473
          %v5475 = vmul.f32 %v5470, %v5474
          %vm5476 = vweird.f32 %v5384
          %vm5477 = vweird.f32 %v5470
          %vm5478 = vmor %vm5476, %vm5477
          %v5479 = vsel %vm5478, %v5470, %v5475
          %v5480 = vrsqrt.pop %v5385
          %v5481 = vmul.f32 %v5480, %v5385
          %v5482 = vmul.f32 %v5481, %v5480
          %v5483 = vmul.f32 0.5, %v5482
          %v5484 = vsub.f32 1.5, %v5483
          %v5485 = vmul.f32 %v5480, %v5484
          %vm5486 = vweird.f32 %v5385
          %vm5487 = vweird.f32 %v5480
          %vm5488 = vmor %vm5486, %vm5487
          %v5489 = vsel %vm5488, %v5480, %v5485
          %v5490 = vrsqrt.pop %v5386
          %v5491 = vmul.f32 %v5490, %v5386
          %v5492 = vmul.f32 %v5491, %v5490
          %v5493 = vmul.f32 0.5, %v5492
          %v5494 = vsub.f32 1.5, %v5493
          %v5495 = vmul.f32 %v5490, %v5494
          %vm5496 = vweird.f32 %v5386
          %vm5497 = vweird.f32 %v5490
          %vm5498 = vmor %vm5496, %vm5497
          %v5499 = vsel %vm5498, %v5490, %v5495
          %v5500 = vrsqrt.pop %v5387
          %v5501 = vmul.f32 %v5500, %v5387
          %v5502 = vmul.f32 %v5501, %v5500
          %v5503 = vmul.f32 0.5, %v5502
          %v5504 = vsub.f32 1.5, %v5503
          %v5505 = vmul.f32 %v5500, %v5504
          %vm5506 = vweird.f32 %v5387
          %vm5507 = vweird.f32 %v5500
          %vm5508 = vmor %vm5506, %vm5507
          %v5509 = vsel %vm5508, %v5500, %v5505
          %v5510 = vrsqrt.pop %v5388
          %v5511 = vmul.f32 %v5510, %v5388
          %v5512 = vmul.f32 %v5511, %v5510
          %v5513 = vmul.f32 0.5, %v5512
          %v5514 = vsub.f32 1.5, %v5513
          %v5515 = vmul.f32 %v5510, %v5514
          %vm5516 = vweird.f32 %v5388
          %vm5517 = vweird.f32 %v5510
          %vm5518 = vmor %vm5516, %vm5517
          %v5519 = vsel %vm5518, %v5510, %v5515
          %v5520 = vrsqrt.pop %v5389
          %v5521 = vmul.f32 %v5520, %v5389
          %v5522 = vmul.f32 %v5521, %v5520
          %v5523 = vmul.f32 0.5, %v5522
          %v5524 = vsub.f32 1.5, %v5523
          %v5525 = vmul.f32 %v5520, %v5524
          %vm5526 = vweird.f32 %v5389
          %vm5527 = vweird.f32 %v5520
          %vm5528 = vmor %vm5526, %vm5527
          %v5529 = vsel %vm5528, %v5520, %v5525
          %v5530 = vrsqrt.pop %v5390
          %v5531 = vmul.f32 %v5530, %v5390
          %v5532 = vmul.f32 %v5531, %v5530
          %v5533 = vmul.f32 0.5, %v5532
          %v5534 = vsub.f32 1.5, %v5533
          %v5535 = vmul.f32 %v5530, %v5534
          %vm5536 = vweird.f32 %v5390
          %vm5537 = vweird.f32 %v5530
          %vm5538 = vmor %vm5536, %vm5537
          %v5539 = vsel %vm5538, %v5530, %v5535
          %v5540 = vrsqrt.pop %v5391
          %v5541 = vmul.f32 %v5540, %v5391
          %v5542 = vmul.f32 %v5541, %v5540
          %v5543 = vmul.f32 0.5, %v5542
          %v5544 = vsub.f32 1.5, %v5543
          %v5545 = vmul.f32 %v5540, %v5544
          %vm5546 = vweird.f32 %v5391
          %vm5547 = vweird.f32 %v5540
          %vm5548 = vmor %vm5546, %vm5547
          %v5549 = vsel %vm5548, %v5540, %v5545
          %v5550 = vrsqrt.pop %v5392
          %v5551 = vmul.f32 %v5550, %v5392
          %v5552 = vmul.f32 %v5551, %v5550
          %v5553 = vmul.f32 0.5, %v5552
          %v5554 = vsub.f32 1.5, %v5553
          %v5555 = vmul.f32 %v5550, %v5554
          %vm5556 = vweird.f32 %v5392
          %vm5557 = vweird.f32 %v5550
          %vm5558 = vmor %vm5556, %vm5557
          %v5559 = vsel %vm5558, %v5550, %v5555
          %v5560 = vrsqrt.pop %v5393
          %v5561 = vmul.f32 %v5560, %v5393
          %v5562 = vmul.f32 %v5561, %v5560
          %v5563 = vmul.f32 0.5, %v5562
          %v5564 = vsub.f32 1.5, %v5563
          %v5565 = vmul.f32 %v5560, %v5564
          %vm5566 = vweird.f32 %v5393
          %vm5567 = vweird.f32 %v5560
          %vm5568 = vmor %vm5566, %vm5567
          %v5569 = vsel %vm5568, %v5560, %v5565
          %v5570 = vrsqrt.pop %v5394
          %v5571 = vmul.f32 %v5570, %v5394
          %v5572 = vmul.f32 %v5571, %v5570
          %v5573 = vmul.f32 0.5, %v5572
          %v5574 = vsub.f32 1.5, %v5573
          %v5575 = vmul.f32 %v5570, %v5574
          %vm5576 = vweird.f32 %v5394
          %vm5577 = vweird.f32 %v5570
          %vm5578 = vmor %vm5576, %vm5577
          %v5579 = vsel %vm5578, %v5570, %v5575
          %v5580 = vrsqrt.pop %v5395
          %v5581 = vmul.f32 %v5580, %v5395
          %v5582 = vmul.f32 %v5581, %v5580
          %v5583 = vmul.f32 0.5, %v5582
          %v5584 = vsub.f32 1.5, %v5583
          %v5585 = vmul.f32 %v5580, %v5584
          %vm5586 = vweird.f32 %v5395
          %vm5587 = vweird.f32 %v5580
          %vm5588 = vmor %vm5586, %vm5587
          %v5589 = vsel %vm5588, %v5580, %v5585
          %v5590 = vrsqrt.pop %v5396
          %v5591 = vmul.f32 %v5590, %v5396
          %v5592 = vmul.f32 %v5591, %v5590
          %v5593 = vmul.f32 0.5, %v5592
          %v5594 = vsub.f32 1.5, %v5593
          %v5595 = vmul.f32 %v5590, %v5594
          %vm5596 = vweird.f32 %v5396
          %vm5597 = vweird.f32 %v5590
          %vm5598 = vmor %vm5596, %vm5597
          %v5599 = vsel %vm5598, %v5590, %v5595
          %v5600 = vrsqrt.pop %v5397
          %v5601 = vmul.f32 %v5600, %v5397
          %v5602 = vmul.f32 %v5601, %v5600
          %v5603 = vmul.f32 0.5, %v5602
          %v5604 = vsub.f32 1.5, %v5603
          %v5605 = vmul.f32 %v5600, %v5604
          %vm5606 = vweird.f32 %v5397
          %vm5607 = vweird.f32 %v5600
          %vm5608 = vmor %vm5606, %vm5607
          %v5609 = vsel %vm5608, %v5600, %v5605
          %v5610 = vrsqrt.pop %v5398
          %v5611 = vmul.f32 %v5610, %v5398
          %v5612 = vmul.f32 %v5611, %v5610
          %v5613 = vmul.f32 0.5, %v5612
          %v5614 = vsub.f32 1.5, %v5613
          %v5615 = vmul.f32 %v5610, %v5614
          %vm5616 = vweird.f32 %v5398
          %vm5617 = vweird.f32 %v5610
          %vm5618 = vmor %vm5616, %vm5617
          %v5619 = vsel %vm5618, %v5610, %v5615
          %v5620 = vrsqrt.pop %v5399
          %v5621 = vmul.f32 %v5620, %v5399
          %v5622 = vmul.f32 %v5621, %v5620
          %v5623 = vmul.f32 0.5, %v5622
          %v5624 = vsub.f32 1.5, %v5623
          %v5625 = vmul.f32 %v5620, %v5624
          %vm5626 = vweird.f32 %v5399
          %vm5627 = vweird.f32 %v5620
          %vm5628 = vmor %vm5626, %vm5627
          %v5629 = vsel %vm5628, %v5620, %v5625
          %v5630 = vrsqrt.pop %v5400
          %v5631 = vmul.f32 %v5630, %v5400
          %v5632 = vmul.f32 %v5631, %v5630
          %v5633 = vmul.f32 0.5, %v5632
          %v5634 = vsub.f32 1.5, %v5633
          %v5635 = vmul.f32 %v5630, %v5634
          %vm5636 = vweird.f32 %v5400
          %vm5637 = vweird.f32 %v5630
          %vm5638 = vmor %vm5636, %vm5637
          %v5639 = vsel %vm5638, %v5630, %v5635
          %v5640 = vrsqrt.pop %v5401
          %v5641 = vmul.f32 %v5640, %v5401
          %v5642 = vmul.f32 %v5641, %v5640
          %v5643 = vmul.f32 0.5, %v5642
          %v5644 = vsub.f32 1.5, %v5643
          %v5645 = vmul.f32 %v5640, %v5644
          %vm5646 = vweird.f32 %v5401
          %vm5647 = vweird.f32 %v5640
          %vm5648 = vmor %vm5646, %vm5647
          %v5649 = vsel %vm5648, %v5640, %v5645
          %v5650 = vrsqrt.pop %v5402
          %v5651 = vmul.f32 %v5650, %v5402
          %v5652 = vmul.f32 %v5651, %v5650
          %v5653 = vmul.f32 0.5, %v5652
          %v5654 = vsub.f32 1.5, %v5653
          %v5655 = vmul.f32 %v5650, %v5654
          %vm5656 = vweird.f32 %v5402
          %vm5657 = vweird.f32 %v5650
          %vm5658 = vmor %vm5656, %vm5657
          %v5659 = vsel %vm5658, %v5650, %v5655
          %v5660 = vrsqrt.pop %v5403
          %v5661 = vmul.f32 %v5660, %v5403
          %v5662 = vmul.f32 %v5661, %v5660
          %v5663 = vmul.f32 0.5, %v5662
          %v5664 = vsub.f32 1.5, %v5663
          %v5665 = vmul.f32 %v5660, %v5664
          %vm5666 = vweird.f32 %v5403
          %vm5667 = vweird.f32 %v5660
          %vm5668 = vmor %vm5666, %vm5667
          %v5669 = vsel %vm5668, %v5660, %v5665
          %v5670 = vrsqrt.pop %v5404
          %v5671 = vmul.f32 %v5670, %v5404
          %v5672 = vmul.f32 %v5671, %v5670
          %v5673 = vmul.f32 0.5, %v5672
          %v5674 = vsub.f32 1.5, %v5673
          %v5675 = vmul.f32 %v5670, %v5674
          %vm5676 = vweird.f32 %v5404
          %vm5677 = vweird.f32 %v5670
          %vm5678 = vmor %vm5676, %vm5677
          %v5679 = vsel %vm5678, %v5670, %v5675
          %v5680 = vrsqrt.pop %v5405
          %v5681 = vmul.f32 %v5680, %v5405
          %v5682 = vmul.f32 %v5681, %v5680
          %v5683 = vmul.f32 0.5, %v5682
          %v5684 = vsub.f32 1.5, %v5683
          %v5685 = vmul.f32 %v5680, %v5684
          %vm5686 = vweird.f32 %v5405
          %vm5687 = vweird.f32 %v5680
          %vm5688 = vmor %vm5686, %vm5687
          %v5689 = vsel %vm5688, %v5680, %v5685
          %v5690 = vrsqrt.pop %v5406
          %v5691 = vmul.f32 %v5690, %v5406
          %v5692 = vmul.f32 %v5691, %v5690
          %v5693 = vmul.f32 0.5, %v5692
          %v5694 = vsub.f32 1.5, %v5693
          %v5695 = vmul.f32 %v5690, %v5694
          %vm5696 = vweird.f32 %v5406
          %vm5697 = vweird.f32 %v5690
          %vm5698 = vmor %vm5696, %vm5697
          %v5699 = vsel %vm5698, %v5690, %v5695
          %v5700 = vrsqrt.pop %v5407
          %v5701 = vmul.f32 %v5700, %v5407
          %v5702 = vmul.f32 %v5701, %v5700
          %v5703 = vmul.f32 0.5, %v5702
          %v5704 = vsub.f32 1.5, %v5703
          %v5705 = vmul.f32 %v5700, %v5704
          %vm5706 = vweird.f32 %v5407
          %vm5707 = vweird.f32 %v5700
          %vm5708 = vmor %vm5706, %vm5707
          %v5709 = vsel %vm5708, %v5700, %v5705
          %v5710 = vrsqrt.pop %v5408
          %v5711 = vmul.f32 %v5710, %v5408
          %v5712 = vmul.f32 %v5711, %v5710
          %v5713 = vmul.f32 0.5, %v5712
          %v5714 = vsub.f32 1.5, %v5713
          %v5715 = vmul.f32 %v5710, %v5714
          %vm5716 = vweird.f32 %v5408
          %vm5717 = vweird.f32 %v5710
          %vm5718 = vmor %vm5716, %vm5717
          %v5719 = vsel %vm5718, %v5710, %v5715
          %v5720 = vrsqrt.pop %v5409
          %v5721 = vmul.f32 %v5720, %v5409
          %v5722 = vmul.f32 %v5721, %v5720
          %v5723 = vmul.f32 0.5, %v5722
          %v5724 = vsub.f32 1.5, %v5723
          %v5725 = vmul.f32 %v5720, %v5724
          %vm5726 = vweird.f32 %v5409
          %vm5727 = vweird.f32 %v5720
          %vm5728 = vmor %vm5726, %vm5727
          %v5729 = vsel %vm5728, %v5720, %v5725
          %v5730 = vmul.f32 %v5122, %v5419
          %v5731 = vmul.f32 %v5123, %v5419
          %v5732 = vmul.f32 %v5124, %v5429
          %v5733 = vmul.f32 %v5125, %v5429
          %v5734 = vmul.f32 %v5126, %v5439
          %v5735 = vmul.f32 %v5127, %v5439
          %v5736 = vmul.f32 %v5128, %v5449
          %v5737 = vmul.f32 %v5129, %v5449
          %v5738 = vmul.f32 %v5130, %v5459
          %v5739 = vmul.f32 %v5131, %v5459
          %v5740 = vmul.f32 %v5132, %v5469
          %v5741 = vmul.f32 %v5133, %v5469
          %v5742 = vmul.f32 %v5134, %v5479
          %v5743 = vmul.f32 %v5135, %v5479
          %v5744 = vmul.f32 %v5136, %v5489
          %v5745 = vmul.f32 %v5137, %v5489
          %v5746 = vmul.f32 %v5138, %v5499
          %v5747 = vmul.f32 %v5139, %v5499
          %v5748 = vmul.f32 %v5140, %v5509
          %v5749 = vmul.f32 %v5141, %v5509
          %v5750 = vmul.f32 %v5142, %v5519
          %v5751 = vmul.f32 %v5143, %v5519
          %v5752 = vmul.f32 %v5144, %v5529
          %v5753 = vmul.f32 %v5145, %v5529
          %v5754 = vmul.f32 %v5146, %v5539
          %v5755 = vmul.f32 %v5147, %v5539
          %v5756 = vmul.f32 %v5148, %v5549
          %v5757 = vmul.f32 %v5149, %v5549
          %v5758 = vmul.f32 %v5150, %v5559
          %v5759 = vmul.f32 %v5151, %v5559
          %v5760 = vmul.f32 %v5152, %v5569
          %v5761 = vmul.f32 %v5153, %v5569
          %v5762 = vmul.f32 %v5154, %v5579
          %v5763 = vmul.f32 %v5155, %v5579
          %v5764 = vmul.f32 %v5156, %v5589
          %v5765 = vmul.f32 %v5157, %v5589
          %v5766 = vmul.f32 %v5158, %v5599
          %v5767 = vmul.f32 %v5159, %v5599
          %v5768 = vmul.f32 %v5160, %v5609
          %v5769 = vmul.f32 %v5161, %v5609
          %v5770 = vmul.f32 %v5162, %v5619
          %v5771 = vmul.f32 %v5163, %v5619
          %v5772 = vmul.f32 %v5164, %v5629
          %v5773 = vmul.f32 %v5165, %v5629
          %v5774 = vmul.f32 %v5166, %v5639
          %v5775 = vmul.f32 %v5167, %v5639
          %v5776 = vmul.f32 %v5168, %v5649
          %v5777 = vmul.f32 %v5169, %v5649
          %v5778 = vmul.f32 %v5170, %v5659
          %v5779 = vmul.f32 %v5171, %v5659
          %v5780 = vmul.f32 %v5172, %v5669
          %v5781 = vmul.f32 %v5173, %v5669
          %v5782 = vmul.f32 %v5174, %v5679
          %v5783 = vmul.f32 %v5175, %v5679
          %v5784 = vmul.f32 %v5176, %v5689
          %v5785 = vmul.f32 %v5177, %v5689
          %v5786 = vmul.f32 %v5178, %v5699
          %v5787 = vmul.f32 %v5179, %v5699
          %v5788 = vmul.f32 %v5180, %v5709
          %v5789 = vmul.f32 %v5181, %v5709
          %v5790 = vmul.f32 %v5182, %v5719
          %v5791 = vmul.f32 %v5183, %v5719
          %v5792 = vmul.f32 %v5184, %v5729
          %v5793 = vmul.f32 %v5185, %v5729
          %v5794 = vld [vmem:[%s11] sm:$0x3]
          %v5796 = vperm.slane %v5794, 0
          %v5797 = vperm.slane %v5794, 1
          %v5800 = vmul.f32 %v5730, %v5796
          %v5801 = vmul.f32 %v5731, %v5797
          %v5802 = vmul.f32 %v5732, %v5796
          %v5803 = vmul.f32 %v5733, %v5797
          %v5804 = vmul.f32 %v5734, %v5796
          %v5805 = vmul.f32 %v5735, %v5797
          %v5806 = vmul.f32 %v5736, %v5796
          %v5807 = vmul.f32 %v5737, %v5797
          %v5808 = vmul.f32 %v5738, %v5796
          %v5809 = vmul.f32 %v5739, %v5797
          %v5810 = vmul.f32 %v5740, %v5796
          %v5811 = vmul.f32 %v5741, %v5797
          %v5812 = vmul.f32 %v5742, %v5796
          %v5813 = vmul.f32 %v5743, %v5797
          %v5814 = vmul.f32 %v5744, %v5796
          %v5815 = vmul.f32 %v5745, %v5797
          %v5816 = vmul.f32 %v5746, %v5796
          %v5817 = vmul.f32 %v5747, %v5797
          %v5818 = vmul.f32 %v5748, %v5796
          %v5819 = vmul.f32 %v5749, %v5797
          %v5820 = vmul.f32 %v5750, %v5796
          %v5821 = vmul.f32 %v5751, %v5797
          %v5822 = vmul.f32 %v5752, %v5796
          %v5823 = vmul.f32 %v5753, %v5797
          %v5824 = vmul.f32 %v5754, %v5796
          %v5825 = vmul.f32 %v5755, %v5797
          %v5826 = vmul.f32 %v5756, %v5796
          %v5827 = vmul.f32 %v5757, %v5797
          %v5828 = vmul.f32 %v5758, %v5796
          %v5829 = vmul.f32 %v5759, %v5797
          %v5830 = vmul.f32 %v5760, %v5796
          %v5831 = vmul.f32 %v5761, %v5797
          %v5832 = vmul.f32 %v5762, %v5796
          %v5833 = vmul.f32 %v5763, %v5797
          %v5834 = vmul.f32 %v5764, %v5796
          %v5835 = vmul.f32 %v5765, %v5797
          %v5836 = vmul.f32 %v5766, %v5796
          %v5837 = vmul.f32 %v5767, %v5797
          %v5838 = vmul.f32 %v5768, %v5796
          %v5839 = vmul.f32 %v5769, %v5797
          %v5840 = vmul.f32 %v5770, %v5796
          %v5841 = vmul.f32 %v5771, %v5797
          %v5842 = vmul.f32 %v5772, %v5796
          %v5843 = vmul.f32 %v5773, %v5797
          %v5844 = vmul.f32 %v5774, %v5796
          %v5845 = vmul.f32 %v5775, %v5797
          %v5846 = vmul.f32 %v5776, %v5796
          %v5847 = vmul.f32 %v5777, %v5797
          %v5848 = vmul.f32 %v5778, %v5796
          %v5849 = vmul.f32 %v5779, %v5797
          %v5850 = vmul.f32 %v5780, %v5796
          %v5851 = vmul.f32 %v5781, %v5797
          %v5852 = vmul.f32 %v5782, %v5796
          %v5853 = vmul.f32 %v5783, %v5797
          %v5854 = vmul.f32 %v5784, %v5796
          %v5855 = vmul.f32 %v5785, %v5797
          %v5856 = vmul.f32 %v5786, %v5796
          %v5857 = vmul.f32 %v5787, %v5797
          %v5858 = vmul.f32 %v5788, %v5796
          %v5859 = vmul.f32 %v5789, %v5797
          %v5860 = vmul.f32 %v5790, %v5796
          %v5861 = vmul.f32 %v5791, %v5797
          %v5862 = vmul.f32 %v5792, %v5796
          %v5863 = vmul.f32 %v5793, %v5797
          %v5864 = vld [vmem:[#allocation17] sm:$0x3]
          %v5866 = vperm.slane %v5864, 0
          %v5867 = vperm.slane %v5864, 1
          %v5870 = vadd.f32 %v5800, %v5866
          %v5871 = vadd.f32 %v5801, %v5867
          %v5872 = vadd.f32 %v5802, %v5866
          %v5873 = vadd.f32 %v5803, %v5867
          %v5874 = vadd.f32 %v5804, %v5866
          %v5875 = vadd.f32 %v5805, %v5867
          %v5876 = vadd.f32 %v5806, %v5866
          %v5877 = vadd.f32 %v5807, %v5867
          %v5878 = vadd.f32 %v5808, %v5866
          %v5879 = vadd.f32 %v5809, %v5867
          %v5880 = vadd.f32 %v5810, %v5866
          %v5881 = vadd.f32 %v5811, %v5867
          %v5882 = vadd.f32 %v5812, %v5866
          %v5883 = vadd.f32 %v5813, %v5867
          %v5884 = vadd.f32 %v5814, %v5866
          %v5885 = vadd.f32 %v5815, %v5867
          %v5886 = vadd.f32 %v5816, %v5866
          %v5887 = vadd.f32 %v5817, %v5867
          %v5888 = vadd.f32 %v5818, %v5866
          %v5889 = vadd.f32 %v5819, %v5867
          %v5890 = vadd.f32 %v5820, %v5866
          %v5891 = vadd.f32 %v5821, %v5867
          %v5892 = vadd.f32 %v5822, %v5866
          %v5893 = vadd.f32 %v5823, %v5867
          %v5894 = vadd.f32 %v5824, %v5866
          %v5895 = vadd.f32 %v5825, %v5867
          %v5896 = vadd.f32 %v5826, %v5866
          %v5897 = vadd.f32 %v5827, %v5867
          %v5898 = vadd.f32 %v5828, %v5866
          %v5899 = vadd.f32 %v5829, %v5867
          %v5900 = vadd.f32 %v5830, %v5866
          %v5901 = vadd.f32 %v5831, %v5867
          %v5902 = vadd.f32 %v5832, %v5866
          %v5903 = vadd.f32 %v5833, %v5867
          %v5904 = vadd.f32 %v5834, %v5866
          %v5905 = vadd.f32 %v5835, %v5867
          %v5906 = vadd.f32 %v5836, %v5866
          %v5907 = vadd.f32 %v5837, %v5867
          %v5908 = vadd.f32 %v5838, %v5866
          %v5909 = vadd.f32 %v5839, %v5867
          %v5910 = vadd.f32 %v5840, %v5866
          %v5911 = vadd.f32 %v5841, %v5867
          %v5912 = vadd.f32 %v5842, %v5866
          %v5913 = vadd.f32 %v5843, %v5867
          %v5914 = vadd.f32 %v5844, %v5866
          %v5915 = vadd.f32 %v5845, %v5867
          %v5916 = vadd.f32 %v5846, %v5866
          %v5917 = vadd.f32 %v5847, %v5867
          %v5918 = vadd.f32 %v5848, %v5866
          %v5919 = vadd.f32 %v5849, %v5867
          %v5920 = vadd.f32 %v5850, %v5866
          %v5921 = vadd.f32 %v5851, %v5867
          %v5922 = vadd.f32 %v5852, %v5866
          %v5923 = vadd.f32 %v5853, %v5867
          %v5924 = vadd.f32 %v5854, %v5866
          %v5925 = vadd.f32 %v5855, %v5867
          %v5926 = vadd.f32 %v5856, %v5866
          %v5927 = vadd.f32 %v5857, %v5867
          %v5928 = vadd.f32 %v5858, %v5866
          %v5929 = vadd.f32 %v5859, %v5867
          %v5930 = vadd.f32 %v5860, %v5866
          %v5931 = vadd.f32 %v5861, %v5867
          %v5932 = vadd.f32 %v5862, %v5866
          %v5933 = vadd.f32 %v5863, %v5867
          %5934 = vst [vmem:[%s648] sm:$0xff] %v5870
          %5935 = vst [vmem:[%s648 + $0x8] sm:$0xff] %v5871
          %5936 = vst [vmem:[%s648 + $0x10] sm:$0xff] %v5872
          %5937 = vst [vmem:[%s648 + $0x18] sm:$0xff] %v5873
          %5938 = vst [vmem:[%s648 + $0x20] sm:$0xff] %v5874
          %5939 = vst [vmem:[%s648 + $0x28] sm:$0xff] %v5875
          %5940 = vst [vmem:[%s648 + $0x30] sm:$0xff] %v5876
          %5941 = vst [vmem:[%s648 + $0x38] sm:$0xff] %v5877
          %5942 = vst [vmem:[%s648 + $0x40] sm:$0xff] %v5878
          %5943 = vst [vmem:[%s648 + $0x48] sm:$0xff] %v5879
          %5944 = vst [vmem:[%s648 + $0x50] sm:$0xff] %v5880
          %5945 = vst [vmem:[%s648 + $0x58] sm:$0xff] %v5881
          %5946 = vst [vmem:[%s648 + $0x60] sm:$0xff] %v5882
          %5947 = vst [vmem:[%s648 + $0x68] sm:$0xff] %v5883
          %5948 = vst [vmem:[%s648 + $0x70] sm:$0xff] %v5884
          %5949 = vst [vmem:[%s648 + $0x78] sm:$0xff] %v5885
          %5950 = vst [vmem:[%s648 + $0x80] sm:$0xff] %v5886
          %5951 = vst [vmem:[%s648 + $0x88] sm:$0xff] %v5887
          %5952 = vst [vmem:[%s648 + $0x90] sm:$0xff] %v5888
          %5953 = vst [vmem:[%s648 + $0x98] sm:$0xff] %v5889
          %5954 = vst [vmem:[%s648 + $0xa0] sm:$0xff] %v5890
          %5955 = vst [vmem:[%s648 + $0xa8] sm:$0xff] %v5891
          %5956 = vst [vmem:[%s648 + $0xb0] sm:$0xff] %v5892
          %5957 = vst [vmem:[%s648 + $0xb8] sm:$0xff] %v5893
          %5958 = vst [vmem:[%s648 + $0xc0] sm:$0xff] %v5894
          %5959 = vst [vmem:[%s648 + $0xc8] sm:$0xff] %v5895
          %5960 = vst [vmem:[%s648 + $0xd0] sm:$0xff] %v5896
          %5961 = vst [vmem:[%s648 + $0xd8] sm:$0xff] %v5897
          %5962 = vst [vmem:[%s648 + $0xe0] sm:$0xff] %v5898
          %5963 = vst [vmem:[%s648 + $0xe8] sm:$0xff] %v5899
          %5964 = vst [vmem:[%s648 + $0xf0] sm:$0xff] %v5900
          %5965 = vst [vmem:[%s648 + $0xf8] sm:$0xff] %v5901
          %5966 = vst [vmem:[%s648 + $0x100] sm:$0xff] %v5902
          %5967 = vst [vmem:[%s648 + $0x108] sm:$0xff] %v5903
          %5968 = vst [vmem:[%s648 + $0x110] sm:$0xff] %v5904
          %5969 = vst [vmem:[%s648 + $0x118] sm:$0xff] %v5905
          %5970 = vst [vmem:[%s648 + $0x120] sm:$0xff] %v5906
          %5971 = vst [vmem:[%s648 + $0x128] sm:$0xff] %v5907
          %5972 = vst [vmem:[%s648 + $0x130] sm:$0xff] %v5908
          %5973 = vst [vmem:[%s648 + $0x138] sm:$0xff] %v5909
          %5974 = vst [vmem:[%s648 + $0x140] sm:$0xff] %v5910
          %5975 = vst [vmem:[%s648 + $0x148] sm:$0xff] %v5911
          %5976 = vst [vmem:[%s648 + $0x150] sm:$0xff] %v5912
          %5977 = vst [vmem:[%s648 + $0x158] sm:$0xff] %v5913
          %5978 = vst [vmem:[%s648 + $0x160] sm:$0xff] %v5914
          %5979 = vst [vmem:[%s648 + $0x168] sm:$0xff] %v5915
          %5980 = vst [vmem:[%s648 + $0x170] sm:$0xff] %v5916
          %5981 = vst [vmem:[%s648 + $0x178] sm:$0xff] %v5917
          %5982 = vst [vmem:[%s648 + $0x180] sm:$0xff] %v5918
          %5983 = vst [vmem:[%s648 + $0x188] sm:$0xff] %v5919
          %5984 = vst [vmem:[%s648 + $0x190] sm:$0xff] %v5920
          %5985 = vst [vmem:[%s648 + $0x198] sm:$0xff] %v5921
          %5986 = vst [vmem:[%s648 + $0x1a0] sm:$0xff] %v5922
          %5987 = vst [vmem:[%s648 + $0x1a8] sm:$0xff] %v5923
          %5988 = vst [vmem:[%s648 + $0x1b0] sm:$0xff] %v5924
          %5989 = vst [vmem:[%s648 + $0x1b8] sm:$0xff] %v5925
          %5990 = vst [vmem:[%s648 + $0x1c0] sm:$0xff] %v5926
          %5991 = vst [vmem:[%s648 + $0x1c8] sm:$0xff] %v5927
          %5992 = vst [vmem:[%s648 + $0x1d0] sm:$0xff] %v5928
          %5993 = vst [vmem:[%s648 + $0x1d8] sm:$0xff] %v5929
          %5994 = vst [vmem:[%s648 + $0x1e0] sm:$0xff] %v5930
          %5995 = vst [vmem:[%s648 + $0x1e8] sm:$0xff] %v5931
          %5996 = vst [vmem:[%s648 + $0x1f0] sm:$0xff] %v5932
          %5997 = vst [vmem:[%s648 + $0x1f8] sm:$0xff] %v5933
        $region116: #{tpu_custom_call.1} parent=71 // pred_fallthru
          _
        %s5998 = sand.u32 %s355, 1
        %s5999 = scalar_lea.sflag [#allocation7], %s5998
        %s6000 = sand.u32 %s355, 1
        %s6001 = smul.addr %s6000, 512
        %s6002 = scalar_lea.vmem [#allocation19], %s6001
        // Predicated region
        $region117: #{tpu_custom_call.1} parent=71 // pred_check
          %p6003 = pneg %p365
        $region118: #{tpu_custom_call.1} parent=71 // pred_check_branch
          %6005 = sbr.rel (%p6003) target = $region120
        $region119: #{tpu_custom_call.1} parent=71 // pred_region
          %s6006 = smul.u32 32, %s42
          %6008 = vsyncadd %s5999, 0
          %s6009 = smul.addr %s6006, 2
          %s6010 = smul.addr %s41, 64
          %s6011 = sadd.s32 %s6009, %s6010
          %s6012 = smul.addr %s6011, 8
          %s6013 = scalar_lea.hbm %s13, %s6012
          %s6014 = sshll.u32 %s6002, 4
          %s6015 = int_to_ptr.vmem [resolvable:$true] %s6014
          %s6016 = sshll.u32 %s6013, 4
          %s6017 = int_to_ptr.hbm [resolvable:$true] %s6016
          %6022 = dma.vmem_to_hbm [thread:$0]  %s6015, 8192, %s6017, %s5999, 256, 256, 16
        $region120: #{tpu_custom_call.1} parent=71 // pred_fallthru
          _
      $region72: #{tpu_custom_call.1} parent=5 // pred_fallthru
        _
      %p6023 = scmp.le.s32.totalorder 2, %s31
      // Predicated region
      $region121: #{tpu_custom_call.1} parent=5 // pred_check
        %p6024 = pneg %p6023
      $region122: #{tpu_custom_call.1} parent=5 // pred_check_branch
        %6026 = sbr.rel (%p6024) target = $region124
      $region123: #{tpu_custom_call.1} parent=5 // pred_region
        %s6027 = ssub.s32 %s31, 2
        // Predicated region
        $region125: #{tpu_custom_call.1} parent=123 // pred_check
          %p6028 = pneg %p371
        $region126: #{tpu_custom_call.1} parent=123 // pred_check_branch
          %6030 = sbr.rel (%p6028) target = $region128
        $region127: #{tpu_custom_call.1} parent=123 // pred_region
          %s6031 = sand.u32 %s356, 1
          %s6032 = scalar_lea.sflag [#allocation7], %s6031
          %s6033 = sand.u32 %s356, 1
          %s6034 = smul.addr %s6033, 512
          %s6035 = scalar_lea.vmem [#allocation19], %s6034
          %6037 = dma.done %s6032, 8192
        $region128: #{tpu_custom_call.1} parent=123 // pred_fallthru
          _
      $region124: #{tpu_custom_call.1} parent=5 // pred_fallthru
        _
    $region6: #{tpu_custom_call.1} parent=1 // loop_footer
      %s35 = sadd.s32 1, %s31
    $region7: #{tpu_custom_call.1} parent=1 // loop_footer_branch
      %30 = sbr.rel target = $region3
    $region8: #{tpu_custom_call.1} parent=1 // loop_exit
      _
    %6038 = vsyncpa [#allocation6], 1
    %s6039 = scalar_lea.sflag [#allocation6], 1
    %6040 = vsyncpa %s6039, 1
    %6041 = vsyncpa [#allocation9], 1
    %s6042 = scalar_lea.sflag [#allocation9], 1
    %6043 = vsyncpa %s6042, 1
    %6044 = vsyncpa [#allocation12], 1
    %6045 = vsyncpa [#allocation15], 1
    %6046 = vsyncpa [#allocation18], 1
    %6047 = vsyncpa [#allocation7], 1
    %s6048 = scalar_lea.sflag [#allocation7], 1
    %6049 = vsyncpa %s6048, 1

</llo_original>
